<compile_context>
chip_gen: v7x
topology: tpu7x:2x2x1
jax: 0.10.0
libtpu: 0.0.40
codegen_flags: <defaults>
</compile_context>

<pallas_src>
import functools
import math

import jax
import jax.numpy as jnp
from jax.experimental import pallas as pl
from jax.experimental.pallas import tpu as pltpu

# ----------------------------- model dimensions -----------------------------
VOCAB = 16        # synthetic onomatopoeia character vocabulary
D_MODEL = 32
N_HEAD = 2
D_HEAD = D_MODEL // N_HEAD
D_FF = 64
N_MELS = 8        # cfg.feature.n_mels
POSTNET_CH = 16
POSTNET_K = 5
N_FREQ = 16       # "n_fft//2+1" of the mel2linear output (small synthetic)
SAMPLE_RATE = 16000


# ------------------------------ fused Pallas kernel --------------------------
def _synth_kernel(*refs, names, n_frame, tt):
    """One kernel = encode + autoregressive decode loop + postnet + mel2linear."""
    n_in = len(names)
    assert len(refs) == n_in + 3  # inputs, output, 2 scratch buffers
    r = dict(zip(names, refs[:n_in]))
    out_ref = refs[n_in]          # (n_frame, N_FREQ)
    tgt_pad = refs[n_in + 1]      # (tt + 3, N_MELS)   padded decoder target
    h_pad = refs[n_in + 2]        # (n_frame + 4, POSTNET_CH) padded conv1 out

    f32 = jnp.float32
    bf16 = jnp.bfloat16
    inv_sqrt_dh = 1.0 / math.sqrt(D_HEAD)
    sqrt_d = math.sqrt(D_MODEL)

    # bf16 MXU operands, f32 accumulation; element-wise math stays f32.
    def mm(a, b):
        return jnp.dot(a.astype(bf16), b.astype(bf16),
                       preferred_element_type=f32)

    def mm_nt(a, b):  # a @ b.T (contract last dims)
        return jax.lax.dot_general(a.astype(bf16), b.astype(bf16),
                                   (((1,), (1,)), ((), ())),
                                   preferred_element_type=f32)

    def layer_norm(x, g, b):
        mu = jnp.mean(x, axis=-1, keepdims=True)
        var = jnp.mean((x - mu) ** 2, axis=-1, keepdims=True)
        return (x - mu) * jax.lax.rsqrt(var + 1e-5) * g + b

    def softmax(s):
        s = s - jnp.max(s, axis=-1, keepdims=True)
        p = jnp.exp(s)
        return p * pl.reciprocal(jnp.sum(p, axis=-1, keepdims=True), approx=True)

    def mha(q, k, v, wo, bo, mask):
        # Both heads in-body via static lane slices; output proj folded in.
        out = None
        for h in range(N_HEAD):
            lo = h * D_HEAD
            hi = lo + D_HEAD
            s = mm_nt(q[:, lo:hi], k[:, lo:hi]) * inv_sqrt_dh
            if mask is not None:               # skip the add for zero masks
                s = s + mask
            ctx = mm(softmax(s), v[:, lo:hi])
            part = mm(ctx, wo[lo:hi, :])
            out = part if out is None else out + part
        return out + bo

    # --------------------------- encoder (runs once) --------------------------
    x = mm(r["onehot"][...], r["embed_w"][...]) * sqrt_d + r["pe_enc"][...]
    qkv = mm(x, r["enc_wqkv"][...]) + r["enc_bqkv"][...]        # fused QKV
    a = mha(qkv[:, 0:D_MODEL], qkv[:, D_MODEL:2 * D_MODEL],
            qkv[:, 2 * D_MODEL:3 * D_MODEL],
            r["enc_wo"][...], r["enc_bo"][...], mask=None)
    x = layer_norm(x + a, r["enc_ln1_g"][...], r["enc_ln1_b"][...])
    h = jnp.maximum(mm(x, r["enc_ff1_w"][...]) + r["enc_ff1_b"][...], 0.0)
    h = mm(h, r["enc_ff2_w"][...]) + r["enc_ff2_b"][...]
    memory = layer_norm(x + h, r["enc_ln2_g"][...], r["enc_ln2_b"][...])

    # Cross-attention K/V cache: computed once, reused for every frame.
    mem_kv = mm(memory, r["dec_ca_wkv"][...]) + r["dec_ca_bkv"][...]
    mem_k = mem_kv[:, 0:D_MODEL]
    mem_v = mem_kv[:, D_MODEL:2 * D_MODEL]

    # ------------------- decoder weights hoisted out of the loop --------------
    pe_dec = r["pe_dec"][...]
    in_w, in_b = r["dec_in_w"][...], r["dec_in_b"][...]
    sa_wqkv, sa_bqkv = r["dec_sa_wqkv"][...], r["dec_sa_bqkv"][...]
    sa_wo, sa_bo = r["dec_sa_wo"][...], r["dec_sa_bo"][...]
    ln1_g, ln1_b = r["dec_ln1_g"][...], r["dec_ln1_b"][...]
    ca_wq, ca_bq = r["dec_ca_wq"][...], r["dec_ca_bq"][...]
    ca_wo, ca_bo = r["dec_ca_wo"][...], r["dec_ca_bo"][...]
    ln2_g, ln2_b = r["dec_ln2_g"][...], r["dec_ln2_b"][...]
    ff1_w, ff1_b = r["dec_ff1_w"][...], r["dec_ff1_b"][...]
    ff2_w, ff2_b = r["dec_ff2_w"][...], r["dec_ff2_b"][...]
    ln3_g, ln3_b = r["dec_ln3_g"][...], r["dec_ln3_b"][...]
    proj_w, proj_b = r["postnet_proj_w"][...], r["postnet_proj_b"][...]

    ri = jax.lax.broadcasted_iota(jnp.int32, (tt, tt), 0)
    ci = jax.lax.broadcasted_iota(jnp.int32, (tt, tt), 1)
    causal = jnp.where(ci <= ri, 0.0, -1e9).astype(f32)
    row_ids = jax.lax.broadcasted_iota(jnp.int32, (tt, 1), 0)

    # ------------------ autoregressive frame loop (inside kernel) -------------
    # Causal mask => row t-1 of the full-length decode only depends on
    # target[0 .. t-1], so the fixed-length re-decode per step is equivalent
    # to the reference's growing-concat loop.
    def dec_step(t, tgt):
        x = mm(tgt, in_w) + in_b
        x = x * sqrt_d + pe_dec
        qkv = mm(x, sa_wqkv) + sa_bqkv
        a = mha(qkv[:, 0:D_MODEL], qkv[:, D_MODEL:2 * D_MODEL],
                qkv[:, 2 * D_MODEL:3 * D_MODEL], sa_wo, sa_bo, mask=causal)
        x = layer_norm(x + a, ln1_g, ln1_b)
        qc = mm(x, ca_wq) + ca_bq
        a = mha(qc, mem_k, mem_v, ca_wo, ca_bo, mask=None)
        x = layer_norm(x + a, ln2_g, ln2_b)
        hh = jnp.maximum(mm(x, ff1_w) + ff1_b, 0.0)
        hh = mm(hh, ff2_w) + ff2_b
        x = layer_norm(x + hh, ln3_g, ln3_b)
        logmel = mm(x, proj_w) + proj_b                         # (tt, N_MELS)
        # target[t] = logmel[t-1]
        new_row = jnp.sum(jnp.where(row_ids == t - 1, logmel, 0.0),
                          axis=0, keepdims=True)                # (1, N_MELS)
        return jnp.where(row_ids == t, new_row, tgt)

    tgt = jax.lax.fori_loop(1, n_frame + 1, dec_step,
                            jnp.zeros((tt, N_MELS), f32))

    # ------------- postnet residual convs + mel2linear + scaler/10^x ----------
    # tgt_pad rows: [0]=pad, [1..tt]=target (row 1 is the zero start frame),
    # [tt+1, tt+2]=pad  ->  rows [0 .. tt+2] are exactly the SAME-padded
    # log-mel input of the K=5 convolution.
    tgt_pad[...] = jnp.zeros((tt + 3, N_MELS), f32)
    tgt_pad[pl.ds(1, tt), :] = tgt

    acc = jnp.zeros((n_frame, POSTNET_CH), f32)
    for kk in range(POSTNET_K):
        acc = acc + mm(tgt_pad[pl.ds(kk, n_frame), :], r["post_conv1_w"][kk])
    hcv = jnp.tanh(acc + r["post_conv1_b"][...])

    h_pad[...] = jnp.zeros((n_frame + 4, POSTNET_CH), f32)
    h_pad[pl.ds(2, n_frame), :] = hcv

    acc = jnp.zeros((n_frame, N_MELS), f32)
    for kk in range(POSTNET_K):
        acc = acc + mm(h_pad[pl.ds(kk, n_frame), :], r["post_conv2_w"][kk])
    res = acc + r["post_conv2_b"][...]

    logmel = tgt_pad[pl.ds(2, n_frame), :]                      # (n_frame, N_MELS)
    refined = logmel + res

    loglinear = mm(refined, r["mel2linear_w"][...]) + r["mel2linear_b"][...]
    y = loglinear * r["scaler_scale"][...] + r["scaler_mean"][...]
    out_ref[...] = jnp.exp(y * math.log(10.0))                  # 10 ** y


# ------------------------------ plain-JAX glue --------------------------------
def positional_encoding(length, d):
    pos = jnp.arange(length, dtype=jnp.float32)[:, None]
    i = jnp.arange(d // 2, dtype=jnp.float32)[None, :]
    angle = pos / jnp.power(10000.0, 2.0 * i / d)
    pe = jnp.zeros((length, d), jnp.float32)
    pe = pe.at[:, 0::2].set(jnp.sin(angle))
    pe = pe.at[:, 1::2].set(jnp.cos(angle))
    return pe


def generate_spectrogram(src_ids, params, n_frame):
    """Mirror of Synthesizer._generate_audio up to the Griffin-Lim input."""
    s = src_ids.shape[0]
    tt = n_frame + 1
    inputs = {
        "onehot": jax.nn.one_hot(src_ids, VOCAB, dtype=jnp.float32),
        "pe_enc": positional_encoding(s, D_MODEL),
        "pe_dec": positional_encoding(tt, D_MODEL),
    }
    inputs.update(params)
    names = tuple(inputs.keys())
    arrays = [inputs[n] for n in names]

    vmem = pl.BlockSpec(memory_space=pltpu.MemorySpace.VMEM)
    kernel = functools.partial(_synth_kernel, names=names,
                               n_frame=n_frame, tt=tt)
    spec = pl.pallas_call(
        kernel,
        out_shape=jax.ShapeDtypeStruct((n_frame, N_FREQ), jnp.float32),
        in_specs=[vmem] * len(arrays),
        out_specs=vmem,
        scratch_shapes=[
            pltpu.VMEM((tt + 3, N_MELS), jnp.float32),
            pltpu.VMEM((n_frame + 4, POSTNET_CH), jnp.float32),
        ],
    )(*arrays)
    return spec.T                                              # (n_freq, n_frame)


# --------------------------- deterministic parameters -------------------------
def init_params(key):
    ks = iter(jax.random.split(key, 64))

    def dense(fi, fo):
        w = jax.random.normal(next(ks), (fi, fo), jnp.float32) / math.sqrt(fi)
        return w, jnp.zeros((1, fo), jnp.float32)

    def ones(n):
        return jnp.ones((1, n), jnp.float32)

    def zeros(n):
        return jnp.zeros((1, n), jnp.float32)

    p = {"embed_w": jax.random.normal(next(ks), (VOCAB, D_MODEL),
                                      jnp.float32) / math.sqrt(VOCAB)}

    # encoder layer (fused QKV)
    p["enc_wqkv"], p["enc_bqkv"] = dense(D_MODEL, 3 * D_MODEL)
    p["enc_wo"], p["enc_bo"] = dense(D_MODEL, D_MODEL)
    p["enc_ln1_g"], p["enc_ln1_b"] = ones(D_MODEL), zeros(D_MODEL)
    p["enc_ff1_w"], p["enc_ff1_b"] = dense(D_MODEL, D_FF)
    p["enc_ff2_w"], p["enc_ff2_b"] = dense(D_FF, D_MODEL)
    p["enc_ln2_g"], p["enc_ln2_b"] = ones(D_MODEL), zeros(D_MODEL)

    # decoder layer (fused self-attn QKV, fused cross-attn KV)
    p["dec_in_w"], p["dec_in_b"] = dense(N_MELS, D_MODEL)
    p["dec_sa_wqkv"], p["dec_sa_bqkv"] = dense(D_MODEL, 3 * D_MODEL)
    p["dec_sa_wo"], p["dec_sa_bo"] = dense(D_MODEL, D_MODEL)
    p["dec_ln1_g"], p["dec_ln1_b"] = ones(D_MODEL), zeros(D_MODEL)
    p["dec_ca_wq"], p["dec_ca_bq"] = dense(D_MODEL, D_MODEL)
    p["dec_ca_wkv"], p["dec_ca_bkv"] = dense(D_MODEL, 2 * D_MODEL)
    p["dec_ca_wo"], p["dec_ca_bo"] = dense(D_MODEL, D_MODEL)
    p["dec_ln2_g"], p["dec_ln2_b"] = ones(D_MODEL), zeros(D_MODEL)
    p["dec_ff1_w"], p["dec_ff1_b"] = dense(D_MODEL, D_FF)
    p["dec_ff2_w"], p["dec_ff2_b"] = dense(D_FF, D_MODEL)
    p["dec_ln3_g"], p["dec_ln3_b"] = ones(D_MODEL), zeros(D_MODEL)

    # postnet + mel2linear + scaler
    p["postnet_proj_w"], p["postnet_proj_b"] = dense(D_MODEL, N_MELS)
    p["post_conv1_w"] = 0.1 * jax.random.normal(
        next(ks), (POSTNET_K, N_MELS, POSTNET_CH), jnp.float32)
    p["post_conv1_b"] = zeros(POSTNET_CH)
    p["post_conv2_w"] = 0.1 * jax.random.normal(
        next(ks), (POSTNET_K, POSTNET_CH, N_MELS), jnp.float32)
    p["post_conv2_b"] = zeros(N_MELS)
    p["mel2linear_w"], p["mel2linear_b"] = dense(N_MELS, N_FREQ)
    # synthetic StandardScaler stats (inverse_transform: x * scale + mean)
    p["scaler_scale"] = jnp.full((1, N_FREQ), 0.05, jnp.float32)
    p["scaler_mean"] = jnp.zeros((1, N_FREQ), jnp.float32)
    return p


# ------------------------------- Synthesizer ----------------------------------
class Synthesizer:
    """Pallas re-implementation of the PyTorch Synthesizer forward pass."""

    def __init__(self, key, n_frame=8):
        self.params = init_params(key)
        alphabet = list("abcdefghijklmnop")            # synthetic MappingDict
        self.char2id = {c: i for i, c in enumerate(alphabet)}
        self.n_frame = n_frame
        self._synth = jax.jit(
            lambda ids: generate_spectrogram(ids, self.params, self.n_frame))

    def forward(self, onomatopoeia):
        chars = onomatopoeia.split()
        ids = jnp.asarray([self.char2id[c] for c in chars], jnp.int32)
        spec = self._synth(ids)
        # TODO(synk): griffinlim(spec) + normalize would produce the waveform.
        return spec, SAMPLE_RATE


if __name__ == "__main__":
    key = jax.random.PRNGKey(0)
    synth = Synthesizer(key, n_frame=8)
    onomatopoeia = "p i k o p i k o"                   # 8 source tokens
    spec, sr = synth.forward(onomatopoeia)
    spec = jax.block_until_ready(spec)
    assert spec.shape == (N_FREQ, 8), spec.shape
    assert bool(jnp.all(jnp.isfinite(spec)))
    assert sr == SAMPLE_RATE
    print("KERNEL_OK")
</pallas_src>

<mosaic_0001>
module attributes {stable_mosaic.version = 11 : i64} {
  func.func @_synth_kernel(%arg0: memref<8x16xf32, #tpu.memory_space<vmem>>, %arg1: memref<8x32xf32, #tpu.memory_space<vmem>>, %arg2: memref<9x32xf32, #tpu.memory_space<vmem>>, %arg3: memref<16x32xf32, #tpu.memory_space<vmem>>, %arg4: memref<32x96xf32, #tpu.memory_space<vmem>>, %arg5: memref<1x96xf32, #tpu.memory_space<vmem>>, %arg6: memref<32x32xf32, #tpu.memory_space<vmem>>, %arg7: memref<1x32xf32, #tpu.memory_space<vmem>>, %arg8: memref<1x32xf32, #tpu.memory_space<vmem>>, %arg9: memref<1x32xf32, #tpu.memory_space<vmem>>, %arg10: memref<32x64xf32, #tpu.memory_space<vmem>>, %arg11: memref<1x64xf32, #tpu.memory_space<vmem>>, %arg12: memref<64x32xf32, #tpu.memory_space<vmem>>, %arg13: memref<1x32xf32, #tpu.memory_space<vmem>>, %arg14: memref<1x32xf32, #tpu.memory_space<vmem>>, %arg15: memref<1x32xf32, #tpu.memory_space<vmem>>, %arg16: memref<8x32xf32, #tpu.memory_space<vmem>>, %arg17: memref<1x32xf32, #tpu.memory_space<vmem>>, %arg18: memref<32x96xf32, #tpu.memory_space<vmem>>, %arg19: memref<1x96xf32, #tpu.memory_space<vmem>>, %arg20: memref<32x32xf32, #tpu.memory_space<vmem>>, %arg21: memref<1x32xf32, #tpu.memory_space<vmem>>, %arg22: memref<1x32xf32, #tpu.memory_space<vmem>>, %arg23: memref<1x32xf32, #tpu.memory_space<vmem>>, %arg24: memref<32x32xf32, #tpu.memory_space<vmem>>, %arg25: memref<1x32xf32, #tpu.memory_space<vmem>>, %arg26: memref<32x64xf32, #tpu.memory_space<vmem>>, %arg27: memref<1x64xf32, #tpu.memory_space<vmem>>, %arg28: memref<32x32xf32, #tpu.memory_space<vmem>>, %arg29: memref<1x32xf32, #tpu.memory_space<vmem>>, %arg30: memref<1x32xf32, #tpu.memory_space<vmem>>, %arg31: memref<1x32xf32, #tpu.memory_space<vmem>>, %arg32: memref<32x64xf32, #tpu.memory_space<vmem>>, %arg33: memref<1x64xf32, #tpu.memory_space<vmem>>, %arg34: memref<64x32xf32, #tpu.memory_space<vmem>>, %arg35: memref<1x32xf32, #tpu.memory_space<vmem>>, %arg36: memref<1x32xf32, #tpu.memory_space<vmem>>, %arg37: memref<1x32xf32, #tpu.memory_space<vmem>>, %arg38: memref<32x8xf32, #tpu.memory_space<vmem>>, %arg39: memref<1x8xf32, #tpu.memory_space<vmem>>, %arg40: memref<5x8x16xf32, #tpu.memory_space<vmem>>, %arg41: memref<1x16xf32, #tpu.memory_space<vmem>>, %arg42: memref<5x16x8xf32, #tpu.memory_space<vmem>>, %arg43: memref<1x8xf32, #tpu.memory_space<vmem>>, %arg44: memref<8x16xf32, #tpu.memory_space<vmem>>, %arg45: memref<1x16xf32, #tpu.memory_space<vmem>>, %arg46: memref<1x16xf32, #tpu.memory_space<vmem>>, %arg47: memref<1x16xf32, #tpu.memory_space<vmem>>, %arg48: memref<8x16xf32, #tpu.memory_space<vmem>>, %arg49: memref<12x8xf32, #tpu.memory_space<vmem>>, %arg50: memref<12x16xf32, #tpu.memory_space<vmem>>) attributes {dimension_semantics = [], scalar_prefetch = 0 : i64, scratch_operands = 2 : i64, tpu.core_type = #tpu.core_type<tc>} {
    %c0 = arith.constant 0 : index
    %c0_0 = arith.constant 0 : index
    %0 = vector.load %arg0[%c0, %c0_0] : memref<8x16xf32, #tpu.memory_space<vmem>>, vector<8x16xf32>
    %c0_1 = arith.constant 0 : index
    %c0_2 = arith.constant 0 : index
    %1 = vector.load %arg3[%c0_1, %c0_2] : memref<16x32xf32, #tpu.memory_space<vmem>>, vector<16x32xf32>
    %2 = arith.truncf %0 : vector<8x16xf32> to vector<8x16xbf16>
    %3 = arith.truncf %1 : vector<16x32xf32> to vector<16x32xbf16>
    %cst = arith.constant dense<0.000000e+00> : vector<8x32xf32>
    %4 = tpu.matmul %2, %3, %cst {dimension_numbers = #tpu.dot_dimension_numbers<[1], [0], [0], [1], [0, 0, 1, 1], [], []>} : vector<8x16xbf16>, vector<16x32xbf16>, vector<8x32xf32> -> vector<8x32xf32>
    %cst_3 = arith.constant 5.65685415 : f32
    %5 = vector.broadcast %cst_3 : f32 to vector<8x32xf32>
    %6 = arith.mulf %4, %5 : vector<8x32xf32>
    %c0_4 = arith.constant 0 : index
    %c0_5 = arith.constant 0 : index
    %7 = vector.load %arg1[%c0_4, %c0_5] : memref<8x32xf32, #tpu.memory_space<vmem>>, vector<8x32xf32>
    %8 = arith.addf %6, %7 : vector<8x32xf32>
    %c0_6 = arith.constant 0 : index
    %c0_7 = arith.constant 0 : index
    %9 = vector.load %arg4[%c0_6, %c0_7] : memref<32x96xf32, #tpu.memory_space<vmem>>, vector<32x96xf32>
    %10 = arith.truncf %8 : vector<8x32xf32> to vector<8x32xbf16>
    %11 = arith.truncf %9 : vector<32x96xf32> to vector<32x96xbf16>
    %cst_8 = arith.constant dense<0.000000e+00> : vector<8x96xf32>
    %12 = tpu.matmul %10, %11, %cst_8 {dimension_numbers = #tpu.dot_dimension_numbers<[1], [0], [0], [1], [0, 0, 1, 1], [], []>} : vector<8x32xbf16>, vector<32x96xbf16>, vector<8x96xf32> -> vector<8x96xf32>
    %c0_9 = arith.constant 0 : index
    %c0_10 = arith.constant 0 : index
    %13 = vector.load %arg5[%c0_9, %c0_10] : memref<1x96xf32, #tpu.memory_space<vmem>>, vector<1x96xf32>
    %14 = vector.broadcast %13 : vector<1x96xf32> to vector<8x96xf32>
    %15 = arith.addf %12, %14 : vector<8x96xf32>
    %16 = vector.extract_strided_slice %15 {offsets = [0, 0], sizes = [8, 32], strides = [1, 1]} : vector<8x96xf32> to vector<8x32xf32>
    %17 = vector.extract_strided_slice %15 {offsets = [0, 32], sizes = [8, 32], strides = [1, 1]} : vector<8x96xf32> to vector<8x32xf32>
    %18 = vector.extract_strided_slice %15 {offsets = [0, 64], sizes = [8, 32], strides = [1, 1]} : vector<8x96xf32> to vector<8x32xf32>
    %c0_11 = arith.constant 0 : index
    %c0_12 = arith.constant 0 : index
    %19 = vector.load %arg6[%c0_11, %c0_12] : memref<32x32xf32, #tpu.memory_space<vmem>>, vector<32x32xf32>
    %c0_13 = arith.constant 0 : index
    %c0_14 = arith.constant 0 : index
    %20 = vector.load %arg7[%c0_13, %c0_14] : memref<1x32xf32, #tpu.memory_space<vmem>>, vector<1x32xf32>
    %21 = vector.extract_strided_slice %16 {offsets = [0, 0], sizes = [8, 16], strides = [1, 1]} : vector<8x32xf32> to vector<8x16xf32>
    %22 = vector.extract_strided_slice %17 {offsets = [0, 0], sizes = [8, 16], strides = [1, 1]} : vector<8x32xf32> to vector<8x16xf32>
    %23 = arith.truncf %21 : vector<8x16xf32> to vector<8x16xbf16>
    %24 = arith.truncf %22 : vector<8x16xf32> to vector<8x16xbf16>
    %cst_15 = arith.constant dense<0.000000e+00> : vector<8x8xf32>
    %25 = tpu.matmul %23, %24, %cst_15 {dimension_numbers = #tpu.dot_dimension_numbers<[1], [1], [0], [0], [0, 0, 1, 0], [], []>} : vector<8x16xbf16>, vector<8x16xbf16>, vector<8x8xf32> -> vector<8x8xf32>
    %cst_16 = arith.constant 2.500000e-01 : f32
    %26 = vector.broadcast %cst_16 : f32 to vector<8x8xf32>
    %27 = arith.mulf %25, %26 : vector<8x8xf32>
    %cst_17 = arith.constant dense<0xFF800000> : vector<8xf32>
    %28 = vector.multi_reduction <maximumf>, %27, %cst_17 [1] : vector<8x8xf32> to vector<8xf32>
    %29 = vector.shape_cast %28 : vector<8xf32> to vector<8x1xf32>
    %30 = vector.broadcast %29 : vector<8x1xf32> to vector<8x8xf32>
    %31 = arith.subf %27, %30 : vector<8x8xf32>
    %32 = math.exp %31 : vector<8x8xf32>
    %cst_18 = arith.constant dense<0.000000e+00> : vector<8xf32>
    %33 = vector.multi_reduction <add>, %32, %cst_18 [1] : vector<8x8xf32> to vector<8xf32>
    %34 = vector.shape_cast %33 : vector<8xf32> to vector<8x1xf32>
    %35 = tpu.reciprocal %34 {approx = true} : vector<8x1xf32> -> vector<8x1xf32>
    %36 = vector.broadcast %35 : vector<8x1xf32> to vector<8x8xf32>
    %37 = arith.mulf %32, %36 : vector<8x8xf32>
    %38 = vector.extract_strided_slice %18 {offsets = [0, 0], sizes = [8, 16], strides = [1, 1]} : vector<8x32xf32> to vector<8x16xf32>
    %39 = arith.truncf %37 : vector<8x8xf32> to vector<8x8xbf16>
    %40 = arith.truncf %38 : vector<8x16xf32> to vector<8x16xbf16>
    %cst_19 = arith.constant dense<0.000000e+00> : vector<8x16xf32>
    %41 = tpu.matmul %39, %40, %cst_19 {dimension_numbers = #tpu.dot_dimension_numbers<[1], [0], [0], [1], [0, 0, 1, 1], [], []>} : vector<8x8xbf16>, vector<8x16xbf16>, vector<8x16xf32> -> vector<8x16xf32>
    %42 = vector.extract_strided_slice %19 {offsets = [0, 0], sizes = [16, 32], strides = [1, 1]} : vector<32x32xf32> to vector<16x32xf32>
    %43 = arith.truncf %41 : vector<8x16xf32> to vector<8x16xbf16>
    %44 = arith.truncf %42 : vector<16x32xf32> to vector<16x32xbf16>
    %cst_20 = arith.constant dense<0.000000e+00> : vector<8x32xf32>
    %45 = tpu.matmul %43, %44, %cst_20 {dimension_numbers = #tpu.dot_dimension_numbers<[1], [0], [0], [1], [0, 0, 1, 1], [], []>} : vector<8x16xbf16>, vector<16x32xbf16>, vector<8x32xf32> -> vector<8x32xf32>
    %46 = vector.extract_strided_slice %16 {offsets = [0, 16], sizes = [8, 16], strides = [1, 1]} : vector<8x32xf32> to vector<8x16xf32>
    %47 = vector.extract_strided_slice %17 {offsets = [0, 16], sizes = [8, 16], strides = [1, 1]} : vector<8x32xf32> to vector<8x16xf32>
    %48 = arith.truncf %46 : vector<8x16xf32> to vector<8x16xbf16>
    %49 = arith.truncf %47 : vector<8x16xf32> to vector<8x16xbf16>
    %cst_21 = arith.constant dense<0.000000e+00> : vector<8x8xf32>
    %50 = tpu.matmul %48, %49, %cst_21 {dimension_numbers = #tpu.dot_dimension_numbers<[1], [1], [0], [0], [0, 0, 1, 0], [], []>} : vector<8x16xbf16>, vector<8x16xbf16>, vector<8x8xf32> -> vector<8x8xf32>
    %cst_22 = arith.constant 2.500000e-01 : f32
    %51 = vector.broadcast %cst_22 : f32 to vector<8x8xf32>
    %52 = arith.mulf %50, %51 : vector<8x8xf32>
    %cst_23 = arith.constant dense<0xFF800000> : vector<8xf32>
    %53 = vector.multi_reduction <maximumf>, %52, %cst_23 [1] : vector<8x8xf32> to vector<8xf32>
    %54 = vector.shape_cast %53 : vector<8xf32> to vector<8x1xf32>
    %55 = vector.broadcast %54 : vector<8x1xf32> to vector<8x8xf32>
    %56 = arith.subf %52, %55 : vector<8x8xf32>
    %57 = math.exp %56 : vector<8x8xf32>
    %cst_24 = arith.constant dense<0.000000e+00> : vector<8xf32>
    %58 = vector.multi_reduction <add>, %57, %cst_24 [1] : vector<8x8xf32> to vector<8xf32>
    %59 = vector.shape_cast %58 : vector<8xf32> to vector<8x1xf32>
    %60 = tpu.reciprocal %59 {approx = true} : vector<8x1xf32> -> vector<8x1xf32>
    %61 = vector.broadcast %60 : vector<8x1xf32> to vector<8x8xf32>
    %62 = arith.mulf %57, %61 : vector<8x8xf32>
    %63 = vector.extract_strided_slice %18 {offsets = [0, 16], sizes = [8, 16], strides = [1, 1]} : vector<8x32xf32> to vector<8x16xf32>
    %64 = arith.truncf %62 : vector<8x8xf32> to vector<8x8xbf16>
    %65 = arith.truncf %63 : vector<8x16xf32> to vector<8x16xbf16>
    %cst_25 = arith.constant dense<0.000000e+00> : vector<8x16xf32>
    %66 = tpu.matmul %64, %65, %cst_25 {dimension_numbers = #tpu.dot_dimension_numbers<[1], [0], [0], [1], [0, 0, 1, 1], [], []>} : vector<8x8xbf16>, vector<8x16xbf16>, vector<8x16xf32> -> vector<8x16xf32>
    %67 = vector.extract_strided_slice %19 {offsets = [16, 0], sizes = [16, 32], strides = [1, 1]} : vector<32x32xf32> to vector<16x32xf32>
    %68 = arith.truncf %66 : vector<8x16xf32> to vector<8x16xbf16>
    %69 = arith.truncf %67 : vector<16x32xf32> to vector<16x32xbf16>
    %cst_26 = arith.constant dense<0.000000e+00> : vector<8x32xf32>
    %70 = tpu.matmul %68, %69, %cst_26 {dimension_numbers = #tpu.dot_dimension_numbers<[1], [0], [0], [1], [0, 0, 1, 1], [], []>} : vector<8x16xbf16>, vector<16x32xbf16>, vector<8x32xf32> -> vector<8x32xf32>
    %71 = arith.addf %45, %70 : vector<8x32xf32>
    %72 = vector.broadcast %20 : vector<1x32xf32> to vector<8x32xf32>
    %73 = arith.addf %71, %72 : vector<8x32xf32>
    %74 = arith.addf %8, %73 : vector<8x32xf32>
    %c0_27 = arith.constant 0 : index
    %c0_28 = arith.constant 0 : index
    %75 = vector.load %arg8[%c0_27, %c0_28] : memref<1x32xf32, #tpu.memory_space<vmem>>, vector<1x32xf32>
    %c0_29 = arith.constant 0 : index
    %c0_30 = arith.constant 0 : index
    %76 = vector.load %arg9[%c0_29, %c0_30] : memref<1x32xf32, #tpu.memory_space<vmem>>, vector<1x32xf32>
    %cst_31 = arith.constant dense<0.000000e+00> : vector<8xf32>
    %77 = vector.multi_reduction <add>, %74, %cst_31 [1] : vector<8x32xf32> to vector<8xf32>
    %78 = vector.shape_cast %77 : vector<8xf32> to vector<8x1xf32>
    %cst_32 = arith.constant 3.200000e+01 : f32
    %79 = vector.broadcast %cst_32 : f32 to vector<8x1xf32>
    %80 = arith.divf %78, %79 : vector<8x1xf32>
    %81 = vector.broadcast %80 : vector<8x1xf32> to vector<8x32xf32>
    %82 = arith.subf %74, %81 : vector<8x32xf32>
    %83 = arith.mulf %82, %82 : vector<8x32xf32>
    %cst_33 = arith.constant dense<0.000000e+00> : vector<8xf32>
    %84 = vector.multi_reduction <add>, %83, %cst_33 [1] : vector<8x32xf32> to vector<8xf32>
    %85 = vector.shape_cast %84 : vector<8xf32> to vector<8x1xf32>
    %cst_34 = arith.constant 3.200000e+01 : f32
    %86 = vector.broadcast %cst_34 : f32 to vector<8x1xf32>
    %87 = arith.divf %85, %86 : vector<8x1xf32>
    %88 = vector.broadcast %80 : vector<8x1xf32> to vector<8x32xf32>
    %89 = arith.subf %74, %88 : vector<8x32xf32>
    %cst_35 = arith.constant 9.99999974E-6 : f32
    %90 = vector.broadcast %cst_35 : f32 to vector<8x1xf32>
    %91 = arith.addf %87, %90 : vector<8x1xf32>
    %92 = math.rsqrt %91 : vector<8x1xf32>
    %93 = vector.broadcast %92 : vector<8x1xf32> to vector<8x32xf32>
    %94 = arith.mulf %89, %93 : vector<8x32xf32>
    %95 = vector.broadcast %75 : vector<1x32xf32> to vector<8x32xf32>
    %96 = arith.mulf %94, %95 : vector<8x32xf32>
    %97 = vector.broadcast %76 : vector<1x32xf32> to vector<8x32xf32>
    %98 = arith.addf %96, %97 : vector<8x32xf32>
    %c0_36 = arith.constant 0 : index
    %c0_37 = arith.constant 0 : index
    %99 = vector.load %arg10[%c0_36, %c0_37] : memref<32x64xf32, #tpu.memory_space<vmem>>, vector<32x64xf32>
    %100 = arith.truncf %98 : vector<8x32xf32> to vector<8x32xbf16>
    %101 = arith.truncf %99 : vector<32x64xf32> to vector<32x64xbf16>
    %cst_38 = arith.constant dense<0.000000e+00> : vector<8x64xf32>
    %102 = tpu.matmul %100, %101, %cst_38 {dimension_numbers = #tpu.dot_dimension_numbers<[1], [0], [0], [1], [0, 0, 1, 1], [], []>} : vector<8x32xbf16>, vector<32x64xbf16>, vector<8x64xf32> -> vector<8x64xf32>
    %c0_39 = arith.constant 0 : index
    %c0_40 = arith.constant 0 : index
    %103 = vector.load %arg11[%c0_39, %c0_40] : memref<1x64xf32, #tpu.memory_space<vmem>>, vector<1x64xf32>
    %104 = vector.broadcast %103 : vector<1x64xf32> to vector<8x64xf32>
    %105 = arith.addf %102, %104 : vector<8x64xf32>
    %cst_41 = arith.constant 0.000000e+00 : f32
    %106 = vector.broadcast %cst_41 : f32 to vector<8x64xf32>
    %107 = arith.maximumf %105, %106 : vector<8x64xf32>
    %c0_42 = arith.constant 0 : index
    %c0_43 = arith.constant 0 : index
    %108 = vector.load %arg12[%c0_42, %c0_43] : memref<64x32xf32, #tpu.memory_space<vmem>>, vector<64x32xf32>
    %109 = arith.truncf %107 : vector<8x64xf32> to vector<8x64xbf16>
    %110 = arith.truncf %108 : vector<64x32xf32> to vector<64x32xbf16>
    %cst_44 = arith.constant dense<0.000000e+00> : vector<8x32xf32>
    %111 = tpu.matmul %109, %110, %cst_44 {dimension_numbers = #tpu.dot_dimension_numbers<[1], [0], [0], [1], [0, 0, 1, 1], [], []>} : vector<8x64xbf16>, vector<64x32xbf16>, vector<8x32xf32> -> vector<8x32xf32>
    %c0_45 = arith.constant 0 : index
    %c0_46 = arith.constant 0 : index
    %112 = vector.load %arg13[%c0_45, %c0_46] : memref<1x32xf32, #tpu.memory_space<vmem>>, vector<1x32xf32>
    %113 = vector.broadcast %112 : vector<1x32xf32> to vector<8x32xf32>
    %114 = arith.addf %111, %113 : vector<8x32xf32>
    %115 = arith.addf %98, %114 : vector<8x32xf32>
    %c0_47 = arith.constant 0 : index
    %c0_48 = arith.constant 0 : index
    %116 = vector.load %arg14[%c0_47, %c0_48] : memref<1x32xf32, #tpu.memory_space<vmem>>, vector<1x32xf32>
    %c0_49 = arith.constant 0 : index
    %c0_50 = arith.constant 0 : index
    %117 = vector.load %arg15[%c0_49, %c0_50] : memref<1x32xf32, #tpu.memory_space<vmem>>, vector<1x32xf32>
    %cst_51 = arith.constant dense<0.000000e+00> : vector<8xf32>
    %118 = vector.multi_reduction <add>, %115, %cst_51 [1] : vector<8x32xf32> to vector<8xf32>
    %119 = vector.shape_cast %118 : vector<8xf32> to vector<8x1xf32>
    %cst_52 = arith.constant 3.200000e+01 : f32
    %120 = vector.broadcast %cst_52 : f32 to vector<8x1xf32>
    %121 = arith.divf %119, %120 : vector<8x1xf32>
    %122 = vector.broadcast %121 : vector<8x1xf32> to vector<8x32xf32>
    %123 = arith.subf %115, %122 : vector<8x32xf32>
    %124 = arith.mulf %123, %123 : vector<8x32xf32>
    %cst_53 = arith.constant dense<0.000000e+00> : vector<8xf32>
    %125 = vector.multi_reduction <add>, %124, %cst_53 [1] : vector<8x32xf32> to vector<8xf32>
    %126 = vector.shape_cast %125 : vector<8xf32> to vector<8x1xf32>
    %cst_54 = arith.constant 3.200000e+01 : f32
    %127 = vector.broadcast %cst_54 : f32 to vector<8x1xf32>
    %128 = arith.divf %126, %127 : vector<8x1xf32>
    %129 = vector.broadcast %121 : vector<8x1xf32> to vector<8x32xf32>
    %130 = arith.subf %115, %129 : vector<8x32xf32>
    %cst_55 = arith.constant 9.99999974E-6 : f32
    %131 = vector.broadcast %cst_55 : f32 to vector<8x1xf32>
    %132 = arith.addf %128, %131 : vector<8x1xf32>
    %133 = math.rsqrt %132 : vector<8x1xf32>
    %134 = vector.broadcast %133 : vector<8x1xf32> to vector<8x32xf32>
    %135 = arith.mulf %130, %134 : vector<8x32xf32>
    %136 = vector.broadcast %116 : vector<1x32xf32> to vector<8x32xf32>
    %137 = arith.mulf %135, %136 : vector<8x32xf32>
    %138 = vector.broadcast %117 : vector<1x32xf32> to vector<8x32xf32>
    %139 = arith.addf %137, %138 : vector<8x32xf32>
    %c0_56 = arith.constant 0 : index
    %c0_57 = arith.constant 0 : index
    %140 = vector.load %arg26[%c0_56, %c0_57] : memref<32x64xf32, #tpu.memory_space<vmem>>, vector<32x64xf32>
    %141 = arith.truncf %139 : vector<8x32xf32> to vector<8x32xbf16>
    %142 = arith.truncf %140 : vector<32x64xf32> to vector<32x64xbf16>
    %cst_58 = arith.constant dense<0.000000e+00> : vector<8x64xf32>
    %143 = tpu.matmul %141, %142, %cst_58 {dimension_numbers = #tpu.dot_dimension_numbers<[1], [0], [0], [1], [0, 0, 1, 1], [], []>} : vector<8x32xbf16>, vector<32x64xbf16>, vector<8x64xf32> -> vector<8x64xf32>
    %c0_59 = arith.constant 0 : index
    %c0_60 = arith.constant 0 : index
    %144 = vector.load %arg27[%c0_59, %c0_60] : memref<1x64xf32, #tpu.memory_space<vmem>>, vector<1x64xf32>
    %145 = vector.broadcast %144 : vector<1x64xf32> to vector<8x64xf32>
    %146 = arith.addf %143, %145 : vector<8x64xf32>
    %147 = vector.extract_strided_slice %146 {offsets = [0, 0], sizes = [8, 32], strides = [1, 1]} : vector<8x64xf32> to vector<8x32xf32>
    %148 = vector.extract_strided_slice %146 {offsets = [0, 32], sizes = [8, 32], strides = [1, 1]} : vector<8x64xf32> to vector<8x32xf32>
    %c0_61 = arith.constant 0 : index
    %c0_62 = arith.constant 0 : index
    %149 = vector.load %arg2[%c0_61, %c0_62] : memref<9x32xf32, #tpu.memory_space<vmem>>, vector<9x32xf32>
    %c0_63 = arith.constant 0 : index
    %c0_64 = arith.constant 0 : index
    %150 = vector.load %arg16[%c0_63, %c0_64] : memref<8x32xf32, #tpu.memory_space<vmem>>, vector<8x32xf32>
    %c0_65 = arith.constant 0 : index
    %c0_66 = arith.constant 0 : index
    %151 = vector.load %arg17[%c0_65, %c0_66] : memref<1x32xf32, #tpu.memory_space<vmem>>, vector<1x32xf32>
    %c0_67 = arith.constant 0 : index
    %c0_68 = arith.constant 0 : index
    %152 = vector.load %arg18[%c0_67, %c0_68] : memref<32x96xf32, #tpu.memory_space<vmem>>, vector<32x96xf32>
    %c0_69 = arith.constant 0 : index
    %c0_70 = arith.constant 0 : index
    %153 = vector.load %arg19[%c0_69, %c0_70] : memref<1x96xf32, #tpu.memory_space<vmem>>, vector<1x96xf32>
    %c0_71 = arith.constant 0 : index
    %c0_72 = arith.constant 0 : index
    %154 = vector.load %arg20[%c0_71, %c0_72] : memref<32x32xf32, #tpu.memory_space<vmem>>, vector<32x32xf32>
    %c0_73 = arith.constant 0 : index
    %c0_74 = arith.constant 0 : index
    %155 = vector.load %arg21[%c0_73, %c0_74] : memref<1x32xf32, #tpu.memory_space<vmem>>, vector<1x32xf32>
    %c0_75 = arith.constant 0 : index
    %c0_76 = arith.constant 0 : index
    %156 = vector.load %arg22[%c0_75, %c0_76] : memref<1x32xf32, #tpu.memory_space<vmem>>, vector<1x32xf32>
    %c0_77 = arith.constant 0 : index
    %c0_78 = arith.constant 0 : index
    %157 = vector.load %arg23[%c0_77, %c0_78] : memref<1x32xf32, #tpu.memory_space<vmem>>, vector<1x32xf32>
    %c0_79 = arith.constant 0 : index
    %c0_80 = arith.constant 0 : index
    %158 = vector.load %arg24[%c0_79, %c0_80] : memref<32x32xf32, #tpu.memory_space<vmem>>, vector<32x32xf32>
    %c0_81 = arith.constant 0 : index
    %c0_82 = arith.constant 0 : index
    %159 = vector.load %arg25[%c0_81, %c0_82] : memref<1x32xf32, #tpu.memory_space<vmem>>, vector<1x32xf32>
    %c0_83 = arith.constant 0 : index
    %c0_84 = arith.constant 0 : index
    %160 = vector.load %arg28[%c0_83, %c0_84] : memref<32x32xf32, #tpu.memory_space<vmem>>, vector<32x32xf32>
    %c0_85 = arith.constant 0 : index
    %c0_86 = arith.constant 0 : index
    %161 = vector.load %arg29[%c0_85, %c0_86] : memref<1x32xf32, #tpu.memory_space<vmem>>, vector<1x32xf32>
    %c0_87 = arith.constant 0 : index
    %c0_88 = arith.constant 0 : index
    %162 = vector.load %arg30[%c0_87, %c0_88] : memref<1x32xf32, #tpu.memory_space<vmem>>, vector<1x32xf32>
    %c0_89 = arith.constant 0 : index
    %c0_90 = arith.constant 0 : index
    %163 = vector.load %arg31[%c0_89, %c0_90] : memref<1x32xf32, #tpu.memory_space<vmem>>, vector<1x32xf32>
    %c0_91 = arith.constant 0 : index
    %c0_92 = arith.constant 0 : index
    %164 = vector.load %arg32[%c0_91, %c0_92] : memref<32x64xf32, #tpu.memory_space<vmem>>, vector<32x64xf32>
    %c0_93 = arith.constant 0 : index
    %c0_94 = arith.constant 0 : index
    %165 = vector.load %arg33[%c0_93, %c0_94] : memref<1x64xf32, #tpu.memory_space<vmem>>, vector<1x64xf32>
    %c0_95 = arith.constant 0 : index
    %c0_96 = arith.constant 0 : index
    %166 = vector.load %arg34[%c0_95, %c0_96] : memref<64x32xf32, #tpu.memory_space<vmem>>, vector<64x32xf32>
    %c0_97 = arith.constant 0 : index
    %c0_98 = arith.constant 0 : index
    %167 = vector.load %arg35[%c0_97, %c0_98] : memref<1x32xf32, #tpu.memory_space<vmem>>, vector<1x32xf32>
    %c0_99 = arith.constant 0 : index
    %c0_100 = arith.constant 0 : index
    %168 = vector.load %arg36[%c0_99, %c0_100] : memref<1x32xf32, #tpu.memory_space<vmem>>, vector<1x32xf32>
    %c0_101 = arith.constant 0 : index
    %c0_102 = arith.constant 0 : index
    %169 = vector.load %arg37[%c0_101, %c0_102] : memref<1x32xf32, #tpu.memory_space<vmem>>, vector<1x32xf32>
    %c0_103 = arith.constant 0 : index
    %c0_104 = arith.constant 0 : index
    %170 = vector.load %arg38[%c0_103, %c0_104] : memref<32x8xf32, #tpu.memory_space<vmem>>, vector<32x8xf32>
    %c0_105 = arith.constant 0 : index
    %c0_106 = arith.constant 0 : index
    %171 = vector.load %arg39[%c0_105, %c0_106] : memref<1x8xf32, #tpu.memory_space<vmem>>, vector<1x8xf32>
    %172 = tpu.iota {dimensions = array<i32: 0>} : vector<9x9xi32>
    %173 = tpu.iota {dimensions = array<i32: 1>} : vector<9x9xi32>
    %174 = arith.cmpi sle, %173, %172 : vector<9x9xi32>
    %cst_107 = arith.constant 0.000000e+00 : f32
    %cst_108 = arith.constant -1.000000e+09 : f32
    %175 = vector.broadcast %cst_107 : f32 to vector<9x9xf32>
    %176 = vector.broadcast %cst_108 : f32 to vector<9x9xf32>
    %177 = arith.select %174, %175, %176 : vector<9x9xi1>, vector<9x9xf32>
    %178 = tpu.iota {dimensions = array<i32: 0>} : vector<9x1xi32>
    %cst_109 = arith.constant 0.000000e+00 : f32
    %179 = vector.broadcast %cst_109 : f32 to vector<9x8xf32>
    %c1_i32 = arith.constant 1 : i32
    %c8_i32 = arith.constant 8 : i32
    %180 = arith.addi %c1_i32, %c8_i32 : i32
    %c1_i32_110 = arith.constant 1 : i32
    %181 = scf.for %arg51 = %c1_i32 to %180 step %c1_i32_110 iter_args(%arg52 = %179) -> (vector<9x8xf32>)  : i32 {
      %286 = arith.truncf %arg52 : vector<9x8xf32> to vector<9x8xbf16>
      %287 = arith.truncf %150 : vector<8x32xf32> to vector<8x32xbf16>
      %cst_198 = arith.constant dense<0.000000e+00> : vector<9x32xf32>
      %288 = tpu.matmul %286, %287, %cst_198 {dimension_numbers = #tpu.dot_dimension_numbers<[1], [0], [0], [1], [0, 0, 1, 1], [], []>} : vector<9x8xbf16>, vector<8x32xbf16>, vector<9x32xf32> -> vector<9x32xf32>
      %289 = vector.broadcast %151 : vector<1x32xf32> to vector<9x32xf32>
      %290 = arith.addf %288, %289 : vector<9x32xf32>
      %cst_199 = arith.constant 5.65685415 : f32
      %291 = vector.broadcast %cst_199 : f32 to vector<9x32xf32>
      %292 = arith.mulf %290, %291 : vector<9x32xf32>
      %293 = arith.addf %292, %149 : vector<9x32xf32>
      %294 = arith.truncf %293 : vector<9x32xf32> to vector<9x32xbf16>
      %295 = arith.truncf %152 : vector<32x96xf32> to vector<32x96xbf16>
      %cst_200 = arith.constant dense<0.000000e+00> : vector<9x96xf32>
      %296 = tpu.matmul %294, %295, %cst_200 {dimension_numbers = #tpu.dot_dimension_numbers<[1], [0], [0], [1], [0, 0, 1, 1], [], []>} : vector<9x32xbf16>, vector<32x96xbf16>, vector<9x96xf32> -> vector<9x96xf32>
      %297 = vector.broadcast %153 : vector<1x96xf32> to vector<9x96xf32>
      %298 = arith.addf %296, %297 : vector<9x96xf32>
      %299 = vector.extract_strided_slice %298 {offsets = [0, 0], sizes = [9, 32], strides = [1, 1]} : vector<9x96xf32> to vector<9x32xf32>
      %300 = vector.extract_strided_slice %298 {offsets = [0, 32], sizes = [9, 32], strides = [1, 1]} : vector<9x96xf32> to vector<9x32xf32>
      %301 = vector.extract_strided_slice %298 {offsets = [0, 64], sizes = [9, 32], strides = [1, 1]} : vector<9x96xf32> to vector<9x32xf32>
      %302 = vector.extract_strided_slice %299 {offsets = [0, 0], sizes = [9, 16], strides = [1, 1]} : vector<9x32xf32> to vector<9x16xf32>
      %303 = vector.extract_strided_slice %300 {offsets = [0, 0], sizes = [9, 16], strides = [1, 1]} : vector<9x32xf32> to vector<9x16xf32>
      %304 = arith.truncf %302 : vector<9x16xf32> to vector<9x16xbf16>
      %305 = arith.truncf %303 : vector<9x16xf32> to vector<9x16xbf16>
      %cst_201 = arith.constant dense<0.000000e+00> : vector<9x9xf32>
      %306 = tpu.matmul %304, %305, %cst_201 {dimension_numbers = #tpu.dot_dimension_numbers<[1], [1], [0], [0], [0, 0, 1, 0], [], []>} : vector<9x16xbf16>, vector<9x16xbf16>, vector<9x9xf32> -> vector<9x9xf32>
      %cst_202 = arith.constant 2.500000e-01 : f32
      %307 = vector.broadcast %cst_202 : f32 to vector<9x9xf32>
      %308 = arith.mulf %306, %307 : vector<9x9xf32>
      %309 = arith.addf %308, %177 : vector<9x9xf32>
      %cst_203 = arith.constant dense<0xFF800000> : vector<9xf32>
      %310 = vector.multi_reduction <maximumf>, %309, %cst_203 [1] : vector<9x9xf32> to vector<9xf32>
      %311 = vector.shape_cast %310 : vector<9xf32> to vector<9x1xf32>
      %312 = vector.broadcast %311 : vector<9x1xf32> to vector<9x9xf32>
      %313 = arith.subf %309, %312 : vector<9x9xf32>
      %314 = math.exp %313 : vector<9x9xf32>
      %cst_204 = arith.constant dense<0.000000e+00> : vector<9xf32>
      %315 = vector.multi_reduction <add>, %314, %cst_204 [1] : vector<9x9xf32> to vector<9xf32>
      %316 = vector.shape_cast %315 : vector<9xf32> to vector<9x1xf32>
      %317 = tpu.reciprocal %316 {approx = true} : vector<9x1xf32> -> vector<9x1xf32>
      %318 = vector.broadcast %317 : vector<9x1xf32> to vector<9x9xf32>
      %319 = arith.mulf %314, %318 : vector<9x9xf32>
      %320 = vector.extract_strided_slice %301 {offsets = [0, 0], sizes = [9, 16], strides = [1, 1]} : vector<9x32xf32> to vector<9x16xf32>
      %321 = arith.truncf %319 : vector<9x9xf32> to vector<9x9xbf16>
      %322 = arith.truncf %320 : vector<9x16xf32> to vector<9x16xbf16>
      %cst_205 = arith.constant dense<0.000000e+00> : vector<9x16xf32>
      %323 = tpu.matmul %321, %322, %cst_205 {dimension_numbers = #tpu.dot_dimension_numbers<[1], [0], [0], [1], [0, 0, 1, 1], [], []>} : vector<9x9xbf16>, vector<9x16xbf16>, vector<9x16xf32> -> vector<9x16xf32>
      %324 = vector.extract_strided_slice %154 {offsets = [0, 0], sizes = [16, 32], strides = [1, 1]} : vector<32x32xf32> to vector<16x32xf32>
      %325 = arith.truncf %323 : vector<9x16xf32> to vector<9x16xbf16>
      %326 = arith.truncf %324 : vector<16x32xf32> to vector<16x32xbf16>
      %cst_206 = arith.constant dense<0.000000e+00> : vector<9x32xf32>
      %327 = tpu.matmul %325, %326, %cst_206 {dimension_numbers = #tpu.dot_dimension_numbers<[1], [0], [0], [1], [0, 0, 1, 1], [], []>} : vector<9x16xbf16>, vector<16x32xbf16>, vector<9x32xf32> -> vector<9x32xf32>
      %328 = vector.extract_strided_slice %299 {offsets = [0, 16], sizes = [9, 16], strides = [1, 1]} : vector<9x32xf32> to vector<9x16xf32>
      %329 = vector.extract_strided_slice %300 {offsets = [0, 16], sizes = [9, 16], strides = [1, 1]} : vector<9x32xf32> to vector<9x16xf32>
      %330 = arith.truncf %328 : vector<9x16xf32> to vector<9x16xbf16>
      %331 = arith.truncf %329 : vector<9x16xf32> to vector<9x16xbf16>
      %cst_207 = arith.constant dense<0.000000e+00> : vector<9x9xf32>
      %332 = tpu.matmul %330, %331, %cst_207 {dimension_numbers = #tpu.dot_dimension_numbers<[1], [1], [0], [0], [0, 0, 1, 0], [], []>} : vector<9x16xbf16>, vector<9x16xbf16>, vector<9x9xf32> -> vector<9x9xf32>
      %cst_208 = arith.constant 2.500000e-01 : f32
      %333 = vector.broadcast %cst_208 : f32 to vector<9x9xf32>
      %334 = arith.mulf %332, %333 : vector<9x9xf32>
      %335 = arith.addf %334, %177 : vector<9x9xf32>
      %cst_209 = arith.constant dense<0xFF800000> : vector<9xf32>
      %336 = vector.multi_reduction <maximumf>, %335, %cst_209 [1] : vector<9x9xf32> to vector<9xf32>
      %337 = vector.shape_cast %336 : vector<9xf32> to vector<9x1xf32>
      %338 = vector.broadcast %337 : vector<9x1xf32> to vector<9x9xf32>
      %339 = arith.subf %335, %338 : vector<9x9xf32>
      %340 = math.exp %339 : vector<9x9xf32>
      %cst_210 = arith.constant dense<0.000000e+00> : vector<9xf32>
      %341 = vector.multi_reduction <add>, %340, %cst_210 [1] : vector<9x9xf32> to vector<9xf32>
      %342 = vector.shape_cast %341 : vector<9xf32> to vector<9x1xf32>
      %343 = tpu.reciprocal %342 {approx = true} : vector<9x1xf32> -> vector<9x1xf32>
      %344 = vector.broadcast %343 : vector<9x1xf32> to vector<9x9xf32>
      %345 = arith.mulf %340, %344 : vector<9x9xf32>
      %346 = vector.extract_strided_slice %301 {offsets = [0, 16], sizes = [9, 16], strides = [1, 1]} : vector<9x32xf32> to vector<9x16xf32>
      %347 = arith.truncf %345 : vector<9x9xf32> to vector<9x9xbf16>
      %348 = arith.truncf %346 : vector<9x16xf32> to vector<9x16xbf16>
      %cst_211 = arith.constant dense<0.000000e+00> : vector<9x16xf32>
      %349 = tpu.matmul %347, %348, %cst_211 {dimension_numbers = #tpu.dot_dimension_numbers<[1], [0], [0], [1], [0, 0, 1, 1], [], []>} : vector<9x9xbf16>, vector<9x16xbf16>, vector<9x16xf32> -> vector<9x16xf32>
      %350 = vector.extract_strided_slice %154 {offsets = [16, 0], sizes = [16, 32], strides = [1, 1]} : vector<32x32xf32> to vector<16x32xf32>
      %351 = arith.truncf %349 : vector<9x16xf32> to vector<9x16xbf16>
      %352 = arith.truncf %350 : vector<16x32xf32> to vector<16x32xbf16>
      %cst_212 = arith.constant dense<0.000000e+00> : vector<9x32xf32>
      %353 = tpu.matmul %351, %352, %cst_212 {dimension_numbers = #tpu.dot_dimension_numbers<[1], [0], [0], [1], [0, 0, 1, 1], [], []>} : vector<9x16xbf16>, vector<16x32xbf16>, vector<9x32xf32> -> vector<9x32xf32>
      %354 = arith.addf %327, %353 : vector<9x32xf32>
      %355 = vector.broadcast %155 : vector<1x32xf32> to vector<9x32xf32>
      %356 = arith.addf %354, %355 : vector<9x32xf32>
      %357 = arith.addf %293, %356 : vector<9x32xf32>
      %cst_213 = arith.constant dense<0.000000e+00> : vector<9xf32>
      %358 = vector.multi_reduction <add>, %357, %cst_213 [1] : vector<9x32xf32> to vector<9xf32>
      %359 = vector.shape_cast %358 : vector<9xf32> to vector<9x1xf32>
      %cst_214 = arith.constant 3.200000e+01 : f32
      %360 = vector.broadcast %cst_214 : f32 to vector<9x1xf32>
      %361 = arith.divf %359, %360 : vector<9x1xf32>
      %362 = vector.broadcast %361 : vector<9x1xf32> to vector<9x32xf32>
      %363 = arith.subf %357, %362 : vector<9x32xf32>
      %364 = arith.mulf %363, %363 : vector<9x32xf32>
      %cst_215 = arith.constant dense<0.000000e+00> : vector<9xf32>
      %365 = vector.multi_reduction <add>, %364, %cst_215 [1] : vector<9x32xf32> to vector<9xf32>
      %366 = vector.shape_cast %365 : vector<9xf32> to vector<9x1xf32>
      %cst_216 = arith.constant 3.200000e+01 : f32
      %367 = vector.broadcast %cst_216 : f32 to vector<9x1xf32>
      %368 = arith.divf %366, %367 : vector<9x1xf32>
      %369 = vector.broadcast %361 : vector<9x1xf32> to vector<9x32xf32>
      %370 = arith.subf %357, %369 : vector<9x32xf32>
      %cst_217 = arith.constant 9.99999974E-6 : f32
      %371 = vector.broadcast %cst_217 : f32 to vector<9x1xf32>
      %372 = arith.addf %368, %371 : vector<9x1xf32>
      %373 = math.rsqrt %372 : vector<9x1xf32>
      %374 = vector.broadcast %373 : vector<9x1xf32> to vector<9x32xf32>
      %375 = arith.mulf %370, %374 : vector<9x32xf32>
      %376 = vector.broadcast %156 : vector<1x32xf32> to vector<9x32xf32>
      %377 = arith.mulf %375, %376 : vector<9x32xf32>
      %378 = vector.broadcast %157 : vector<1x32xf32> to vector<9x32xf32>
      %379 = arith.addf %377, %378 : vector<9x32xf32>
      %380 = arith.truncf %379 : vector<9x32xf32> to vector<9x32xbf16>
      %381 = arith.truncf %158 : vector<32x32xf32> to vector<32x32xbf16>
      %cst_218 = arith.constant dense<0.000000e+00> : vector<9x32xf32>
      %382 = tpu.matmul %380, %381, %cst_218 {dimension_numbers = #tpu.dot_dimension_numbers<[1], [0], [0], [1], [0, 0, 1, 1], [], []>} : vector<9x32xbf16>, vector<32x32xbf16>, vector<9x32xf32> -> vector<9x32xf32>
      %383 = vector.broadcast %159 : vector<1x32xf32> to vector<9x32xf32>
      %384 = arith.addf %382, %383 : vector<9x32xf32>
      %385 = vector.extract_strided_slice %384 {offsets = [0, 0], sizes = [9, 16], strides = [1, 1]} : vector<9x32xf32> to vector<9x16xf32>
      %386 = vector.extract_strided_slice %147 {offsets = [0, 0], sizes = [8, 16], strides = [1, 1]} : vector<8x32xf32> to vector<8x16xf32>
      %387 = arith.truncf %385 : vector<9x16xf32> to vector<9x16xbf16>
      %388 = arith.truncf %386 : vector<8x16xf32> to vector<8x16xbf16>
      %cst_219 = arith.constant dense<0.000000e+00> : vector<9x8xf32>
      %389 = tpu.matmul %387, %388, %cst_219 {dimension_numbers = #tpu.dot_dimension_numbers<[1], [1], [0], [0], [0, 0, 1, 0], [], []>} : vector<9x16xbf16>, vector<8x16xbf16>, vector<9x8xf32> -> vector<9x8xf32>
      %cst_220 = arith.constant 2.500000e-01 : f32
      %390 = vector.broadcast %cst_220 : f32 to vector<9x8xf32>
      %391 = arith.mulf %389, %390 : vector<9x8xf32>
      %cst_221 = arith.constant dense<0xFF800000> : vector<9xf32>
      %392 = vector.multi_reduction <maximumf>, %391, %cst_221 [1] : vector<9x8xf32> to vector<9xf32>
      %393 = vector.shape_cast %392 : vector<9xf32> to vector<9x1xf32>
      %394 = vector.broadcast %393 : vector<9x1xf32> to vector<9x8xf32>
      %395 = arith.subf %391, %394 : vector<9x8xf32>
      %396 = math.exp %395 : vector<9x8xf32>
      %cst_222 = arith.constant dense<0.000000e+00> : vector<9xf32>
      %397 = vector.multi_reduction <add>, %396, %cst_222 [1] : vector<9x8xf32> to vector<9xf32>
      %398 = vector.shape_cast %397 : vector<9xf32> to vector<9x1xf32>
      %399 = tpu.reciprocal %398 {approx = true} : vector<9x1xf32> -> vector<9x1xf32>
      %400 = vector.broadcast %399 : vector<9x1xf32> to vector<9x8xf32>
      %401 = arith.mulf %396, %400 : vector<9x8xf32>
      %402 = vector.extract_strided_slice %148 {offsets = [0, 0], sizes = [8, 16], strides = [1, 1]} : vector<8x32xf32> to vector<8x16xf32>
      %403 = arith.truncf %401 : vector<9x8xf32> to vector<9x8xbf16>
      %404 = arith.truncf %402 : vector<8x16xf32> to vector<8x16xbf16>
      %cst_223 = arith.constant dense<0.000000e+00> : vector<9x16xf32>
      %405 = tpu.matmul %403, %404, %cst_223 {dimension_numbers = #tpu.dot_dimension_numbers<[1], [0], [0], [1], [0, 0, 1, 1], [], []>} : vector<9x8xbf16>, vector<8x16xbf16>, vector<9x16xf32> -> vector<9x16xf32>
      %406 = vector.extract_strided_slice %160 {offsets = [0, 0], sizes = [16, 32], strides = [1, 1]} : vector<32x32xf32> to vector<16x32xf32>
      %407 = arith.truncf %405 : vector<9x16xf32> to vector<9x16xbf16>
      %408 = arith.truncf %406 : vector<16x32xf32> to vector<16x32xbf16>
      %cst_224 = arith.constant dense<0.000000e+00> : vector<9x32xf32>
      %409 = tpu.matmul %407, %408, %cst_224 {dimension_numbers = #tpu.dot_dimension_numbers<[1], [0], [0], [1], [0, 0, 1, 1], [], []>} : vector<9x16xbf16>, vector<16x32xbf16>, vector<9x32xf32> -> vector<9x32xf32>
      %410 = vector.extract_strided_slice %384 {offsets = [0, 16], sizes = [9, 16], strides = [1, 1]} : vector<9x32xf32> to vector<9x16xf32>
      %411 = vector.extract_strided_slice %147 {offsets = [0, 16], sizes = [8, 16], strides = [1, 1]} : vector<8x32xf32> to vector<8x16xf32>
      %412 = arith.truncf %410 : vector<9x16xf32> to vector<9x16xbf16>
      %413 = arith.truncf %411 : vector<8x16xf32> to vector<8x16xbf16>
      %cst_225 = arith.constant dense<0.000000e+00> : vector<9x8xf32>
      %414 = tpu.matmul %412, %413, %cst_225 {dimension_numbers = #tpu.dot_dimension_numbers<[1], [1], [0], [0], [0, 0, 1, 0], [], []>} : vector<9x16xbf16>, vector<8x16xbf16>, vector<9x8xf32> -> vector<9x8xf32>
      %cst_226 = arith.constant 2.500000e-01 : f32
      %415 = vector.broadcast %cst_226 : f32 to vector<9x8xf32>
      %416 = arith.mulf %414, %415 : vector<9x8xf32>
      %cst_227 = arith.constant dense<0xFF800000> : vector<9xf32>
      %417 = vector.multi_reduction <maximumf>, %416, %cst_227 [1] : vector<9x8xf32> to vector<9xf32>
      %418 = vector.shape_cast %417 : vector<9xf32> to vector<9x1xf32>
      %419 = vector.broadcast %418 : vector<9x1xf32> to vector<9x8xf32>
      %420 = arith.subf %416, %419 : vector<9x8xf32>
      %421 = math.exp %420 : vector<9x8xf32>
      %cst_228 = arith.constant dense<0.000000e+00> : vector<9xf32>
      %422 = vector.multi_reduction <add>, %421, %cst_228 [1] : vector<9x8xf32> to vector<9xf32>
      %423 = vector.shape_cast %422 : vector<9xf32> to vector<9x1xf32>
      %424 = tpu.reciprocal %423 {approx = true} : vector<9x1xf32> -> vector<9x1xf32>
      %425 = vector.broadcast %424 : vector<9x1xf32> to vector<9x8xf32>
      %426 = arith.mulf %421, %425 : vector<9x8xf32>
      %427 = vector.extract_strided_slice %148 {offsets = [0, 16], sizes = [8, 16], strides = [1, 1]} : vector<8x32xf32> to vector<8x16xf32>
      %428 = arith.truncf %426 : vector<9x8xf32> to vector<9x8xbf16>
      %429 = arith.truncf %427 : vector<8x16xf32> to vector<8x16xbf16>
      %cst_229 = arith.constant dense<0.000000e+00> : vector<9x16xf32>
      %430 = tpu.matmul %428, %429, %cst_229 {dimension_numbers = #tpu.dot_dimension_numbers<[1], [0], [0], [1], [0, 0, 1, 1], [], []>} : vector<9x8xbf16>, vector<8x16xbf16>, vector<9x16xf32> -> vector<9x16xf32>
      %431 = vector.extract_strided_slice %160 {offsets = [16, 0], sizes = [16, 32], strides = [1, 1]} : vector<32x32xf32> to vector<16x32xf32>
      %432 = arith.truncf %430 : vector<9x16xf32> to vector<9x16xbf16>
      %433 = arith.truncf %431 : vector<16x32xf32> to vector<16x32xbf16>
      %cst_230 = arith.constant dense<0.000000e+00> : vector<9x32xf32>
      %434 = tpu.matmul %432, %433, %cst_230 {dimension_numbers = #tpu.dot_dimension_numbers<[1], [0], [0], [1], [0, 0, 1, 1], [], []>} : vector<9x16xbf16>, vector<16x32xbf16>, vector<9x32xf32> -> vector<9x32xf32>
      %435 = arith.addf %409, %434 : vector<9x32xf32>
      %436 = vector.broadcast %161 : vector<1x32xf32> to vector<9x32xf32>
      %437 = arith.addf %435, %436 : vector<9x32xf32>
      %438 = arith.addf %379, %437 : vector<9x32xf32>
      %cst_231 = arith.constant dense<0.000000e+00> : vector<9xf32>
      %439 = vector.multi_reduction <add>, %438, %cst_231 [1] : vector<9x32xf32> to vector<9xf32>
      %440 = vector.shape_cast %439 : vector<9xf32> to vector<9x1xf32>
      %cst_232 = arith.constant 3.200000e+01 : f32
      %441 = vector.broadcast %cst_232 : f32 to vector<9x1xf32>
      %442 = arith.divf %440, %441 : vector<9x1xf32>
      %443 = vector.broadcast %442 : vector<9x1xf32> to vector<9x32xf32>
      %444 = arith.subf %438, %443 : vector<9x32xf32>
      %445 = arith.mulf %444, %444 : vector<9x32xf32>
      %cst_233 = arith.constant dense<0.000000e+00> : vector<9xf32>
      %446 = vector.multi_reduction <add>, %445, %cst_233 [1] : vector<9x32xf32> to vector<9xf32>
      %447 = vector.shape_cast %446 : vector<9xf32> to vector<9x1xf32>
      %cst_234 = arith.constant 3.200000e+01 : f32
      %448 = vector.broadcast %cst_234 : f32 to vector<9x1xf32>
      %449 = arith.divf %447, %448 : vector<9x1xf32>
      %450 = vector.broadcast %442 : vector<9x1xf32> to vector<9x32xf32>
      %451 = arith.subf %438, %450 : vector<9x32xf32>
      %cst_235 = arith.constant 9.99999974E-6 : f32
      %452 = vector.broadcast %cst_235 : f32 to vector<9x1xf32>
      %453 = arith.addf %449, %452 : vector<9x1xf32>
      %454 = math.rsqrt %453 : vector<9x1xf32>
      %455 = vector.broadcast %454 : vector<9x1xf32> to vector<9x32xf32>
      %456 = arith.mulf %451, %455 : vector<9x32xf32>
      %457 = vector.broadcast %162 : vector<1x32xf32> to vector<9x32xf32>
      %458 = arith.mulf %456, %457 : vector<9x32xf32>
      %459 = vector.broadcast %163 : vector<1x32xf32> to vector<9x32xf32>
      %460 = arith.addf %458, %459 : vector<9x32xf32>
      %461 = arith.truncf %460 : vector<9x32xf32> to vector<9x32xbf16>
      %462 = arith.truncf %164 : vector<32x64xf32> to vector<32x64xbf16>
      %cst_236 = arith.constant dense<0.000000e+00> : vector<9x64xf32>
      %463 = tpu.matmul %461, %462, %cst_236 {dimension_numbers = #tpu.dot_dimension_numbers<[1], [0], [0], [1], [0, 0, 1, 1], [], []>} : vector<9x32xbf16>, vector<32x64xbf16>, vector<9x64xf32> -> vector<9x64xf32>
      %464 = vector.broadcast %165 : vector<1x64xf32> to vector<9x64xf32>
      %465 = arith.addf %463, %464 : vector<9x64xf32>
      %cst_237 = arith.constant 0.000000e+00 : f32
      %466 = vector.broadcast %cst_237 : f32 to vector<9x64xf32>
      %467 = arith.maximumf %465, %466 : vector<9x64xf32>
      %468 = arith.truncf %467 : vector<9x64xf32> to vector<9x64xbf16>
      %469 = arith.truncf %166 : vector<64x32xf32> to vector<64x32xbf16>
      %cst_238 = arith.constant dense<0.000000e+00> : vector<9x32xf32>
      %470 = tpu.matmul %468, %469, %cst_238 {dimension_numbers = #tpu.dot_dimension_numbers<[1], [0], [0], [1], [0, 0, 1, 1], [], []>} : vector<9x64xbf16>, vector<64x32xbf16>, vector<9x32xf32> -> vector<9x32xf32>
      %471 = vector.broadcast %167 : vector<1x32xf32> to vector<9x32xf32>
      %472 = arith.addf %470, %471 : vector<9x32xf32>
      %473 = arith.addf %460, %472 : vector<9x32xf32>
      %cst_239 = arith.constant dense<0.000000e+00> : vector<9xf32>
      %474 = vector.multi_reduction <add>, %473, %cst_239 [1] : vector<9x32xf32> to vector<9xf32>
      %475 = vector.shape_cast %474 : vector<9xf32> to vector<9x1xf32>
      %cst_240 = arith.constant 3.200000e+01 : f32
      %476 = vector.broadcast %cst_240 : f32 to vector<9x1xf32>
      %477 = arith.divf %475, %476 : vector<9x1xf32>
      %478 = vector.broadcast %477 : vector<9x1xf32> to vector<9x32xf32>
      %479 = arith.subf %473, %478 : vector<9x32xf32>
      %480 = arith.mulf %479, %479 : vector<9x32xf32>
      %cst_241 = arith.constant dense<0.000000e+00> : vector<9xf32>
      %481 = vector.multi_reduction <add>, %480, %cst_241 [1] : vector<9x32xf32> to vector<9xf32>
      %482 = vector.shape_cast %481 : vector<9xf32> to vector<9x1xf32>
      %cst_242 = arith.constant 3.200000e+01 : f32
      %483 = vector.broadcast %cst_242 : f32 to vector<9x1xf32>
      %484 = arith.divf %482, %483 : vector<9x1xf32>
      %485 = vector.broadcast %477 : vector<9x1xf32> to vector<9x32xf32>
      %486 = arith.subf %473, %485 : vector<9x32xf32>
      %cst_243 = arith.constant 9.99999974E-6 : f32
      %487 = vector.broadcast %cst_243 : f32 to vector<9x1xf32>
      %488 = arith.addf %484, %487 : vector<9x1xf32>
      %489 = math.rsqrt %488 : vector<9x1xf32>
      %490 = vector.broadcast %489 : vector<9x1xf32> to vector<9x32xf32>
      %491 = arith.mulf %486, %490 : vector<9x32xf32>
      %492 = vector.broadcast %168 : vector<1x32xf32> to vector<9x32xf32>
      %493 = arith.mulf %491, %492 : vector<9x32xf32>
      %494 = vector.broadcast %169 : vector<1x32xf32> to vector<9x32xf32>
      %495 = arith.addf %493, %494 : vector<9x32xf32>
      %496 = arith.truncf %495 : vector<9x32xf32> to vector<9x32xbf16>
      %497 = arith.truncf %170 : vector<32x8xf32> to vector<32x8xbf16>
      %cst_244 = arith.constant dense<0.000000e+00> : vector<9x8xf32>
      %498 = tpu.matmul %496, %497, %cst_244 {dimension_numbers = #tpu.dot_dimension_numbers<[1], [0], [0], [1], [0, 0, 1, 1], [], []>} : vector<9x32xbf16>, vector<32x8xbf16>, vector<9x8xf32> -> vector<9x8xf32>
      %499 = vector.broadcast %171 : vector<1x8xf32> to vector<9x8xf32>
      %500 = arith.addf %498, %499 : vector<9x8xf32>
      %c1_i32_245 = arith.constant 1 : i32
      %501 = arith.subi %arg51, %c1_i32_245 : i32
      %502 = vector.broadcast %501 : i32 to vector<9x1xi32>
      %503 = arith.cmpi eq, %178, %502 : vector<9x1xi32>
      %cst_246 = arith.constant 0.000000e+00 : f32
      %504 = vector.shape_cast %503 : vector<9x1xi1> to vector<9x1xi1>
      %505 = vector.broadcast %504 : vector<9x1xi1> to vector<9x8xi1>
      %506 = vector.broadcast %cst_246 : f32 to vector<9x8xf32>
      %507 = arith.select %505, %500, %506 : vector<9x8xi1>, vector<9x8xf32>
      %cst_247 = arith.constant dense<0.000000e+00> : vector<8xf32>
      %508 = vector.multi_reduction <add>, %507, %cst_247 [0] : vector<9x8xf32> to vector<8xf32>
      %509 = vector.shape_cast %508 : vector<8xf32> to vector<1x8xf32>
      %510 = vector.broadcast %arg51 : i32 to vector<9x1xi32>
      %511 = arith.cmpi eq, %178, %510 : vector<9x1xi32>
      %512 = vector.shape_cast %511 : vector<9x1xi1> to vector<9x1xi1>
      %513 = vector.broadcast %512 : vector<9x1xi1> to vector<9x8xi1>
      %514 = vector.shape_cast %509 : vector<1x8xf32> to vector<1x8xf32>
      %515 = vector.broadcast %514 : vector<1x8xf32> to vector<9x8xf32>
      %516 = arith.select %513, %515, %arg52 : vector<9x8xi1>, vector<9x8xf32>
      scf.yield %516 : vector<9x8xf32>
    }
    %c8_i32_111 = arith.constant 8 : i32
    %cst_112 = arith.constant 0.000000e+00 : f32
    %182 = vector.broadcast %cst_112 : f32 to vector<12x8xf32>
    %c0_113 = arith.constant 0 : index
    %c0_114 = arith.constant 0 : index
    %183 = vector.load %arg49[%c0_113, %c0_114] : memref<12x8xf32, #tpu.memory_space<vmem>>, vector<12x8xf32>
    tpu.vector_store %arg49[%c0_113, %c0_114], %182 {strides = array<i32>} : memref<12x8xf32, #tpu.memory_space<vmem>>, vector<12x8xf32>,
    %c1 = arith.constant 1 : index
    %c0_115 = arith.constant 0 : index
    %184 = vector.load %arg49[%c1, %c0_115] : memref<12x8xf32, #tpu.memory_space<vmem>>, vector<9x8xf32>
    tpu.vector_store %arg49[%c1, %c0_115], %181 {strides = array<i32>} : memref<12x8xf32, #tpu.memory_space<vmem>>, vector<9x8xf32>,
    %cst_116 = arith.constant 0.000000e+00 : f32
    %185 = vector.broadcast %cst_116 : f32 to vector<8x16xf32>
    %c0_117 = arith.constant 0 : index
    %c0_118 = arith.constant 0 : index
    %186 = vector.load %arg49[%c0_117, %c0_118] : memref<12x8xf32, #tpu.memory_space<vmem>>, vector<8x8xf32>
    %c0_119 = arith.constant 0 : index
    %c0_120 = arith.constant 0 : index
    %c0_121 = arith.constant 0 : index
    %187 = vector.load %arg40[%c0_119, %c0_120, %c0_121] : memref<5x8x16xf32, #tpu.memory_space<vmem>>, vector<1x8x16xf32>
    %188 = vector.shape_cast %187 : vector<1x8x16xf32> to vector<8x16xf32>
    %189 = arith.truncf %186 : vector<8x8xf32> to vector<8x8xbf16>
    %190 = arith.truncf %188 : vector<8x16xf32> to vector<8x16xbf16>
    %cst_122 = arith.constant dense<0.000000e+00> : vector<8x16xf32>
    %191 = tpu.matmul %189, %190, %cst_122 {dimension_numbers = #tpu.dot_dimension_numbers<[1], [0], [0], [1], [0, 0, 1, 1], [], []>} : vector<8x8xbf16>, vector<8x16xbf16>, vector<8x16xf32> -> vector<8x16xf32>
    %192 = arith.addf %185, %191 : vector<8x16xf32>
    %c1_123 = arith.constant 1 : index
    %c0_124 = arith.constant 0 : index
    %193 = vector.load %arg49[%c1_123, %c0_124] : memref<12x8xf32, #tpu.memory_space<vmem>>, vector<8x8xf32>
    %c1_125 = arith.constant 1 : index
    %c0_126 = arith.constant 0 : index
    %c0_127 = arith.constant 0 : index
    %194 = vector.load %arg40[%c1_125, %c0_126, %c0_127] : memref<5x8x16xf32, #tpu.memory_space<vmem>>, vector<1x8x16xf32>
    %195 = vector.shape_cast %194 : vector<1x8x16xf32> to vector<8x16xf32>
    %196 = arith.truncf %193 : vector<8x8xf32> to vector<8x8xbf16>
    %197 = arith.truncf %195 : vector<8x16xf32> to vector<8x16xbf16>
    %cst_128 = arith.constant dense<0.000000e+00> : vector<8x16xf32>
    %198 = tpu.matmul %196, %197, %cst_128 {dimension_numbers = #tpu.dot_dimension_numbers<[1], [0], [0], [1], [0, 0, 1, 1], [], []>} : vector<8x8xbf16>, vector<8x16xbf16>, vector<8x16xf32> -> vector<8x16xf32>
    %199 = arith.addf %192, %198 : vector<8x16xf32>
    %c2 = arith.constant 2 : index
    %c0_129 = arith.constant 0 : index
    %200 = vector.load %arg49[%c2, %c0_129] : memref<12x8xf32, #tpu.memory_space<vmem>>, vector<8x8xf32>
    %c2_130 = arith.constant 2 : index
    %c0_131 = arith.constant 0 : index
    %c0_132 = arith.constant 0 : index
    %201 = vector.load %arg40[%c2_130, %c0_131, %c0_132] : memref<5x8x16xf32, #tpu.memory_space<vmem>>, vector<1x8x16xf32>
    %202 = vector.shape_cast %201 : vector<1x8x16xf32> to vector<8x16xf32>
    %203 = arith.truncf %200 : vector<8x8xf32> to vector<8x8xbf16>
    %204 = arith.truncf %202 : vector<8x16xf32> to vector<8x16xbf16>
    %cst_133 = arith.constant dense<0.000000e+00> : vector<8x16xf32>
    %205 = tpu.matmul %203, %204, %cst_133 {dimension_numbers = #tpu.dot_dimension_numbers<[1], [0], [0], [1], [0, 0, 1, 1], [], []>} : vector<8x8xbf16>, vector<8x16xbf16>, vector<8x16xf32> -> vector<8x16xf32>
    %206 = arith.addf %199, %205 : vector<8x16xf32>
    %c3 = arith.constant 3 : index
    %c0_134 = arith.constant 0 : index
    %207 = vector.load %arg49[%c3, %c0_134] : memref<12x8xf32, #tpu.memory_space<vmem>>, vector<8x8xf32>
    %c3_135 = arith.constant 3 : index
    %c0_136 = arith.constant 0 : index
    %c0_137 = arith.constant 0 : index
    %208 = vector.load %arg40[%c3_135, %c0_136, %c0_137] : memref<5x8x16xf32, #tpu.memory_space<vmem>>, vector<1x8x16xf32>
    %209 = vector.shape_cast %208 : vector<1x8x16xf32> to vector<8x16xf32>
    %210 = arith.truncf %207 : vector<8x8xf32> to vector<8x8xbf16>
    %211 = arith.truncf %209 : vector<8x16xf32> to vector<8x16xbf16>
    %cst_138 = arith.constant dense<0.000000e+00> : vector<8x16xf32>
    %212 = tpu.matmul %210, %211, %cst_138 {dimension_numbers = #tpu.dot_dimension_numbers<[1], [0], [0], [1], [0, 0, 1, 1], [], []>} : vector<8x8xbf16>, vector<8x16xbf16>, vector<8x16xf32> -> vector<8x16xf32>
    %213 = arith.addf %206, %212 : vector<8x16xf32>
    %c4 = arith.constant 4 : index
    %c0_139 = arith.constant 0 : index
    %214 = vector.load %arg49[%c4, %c0_139] : memref<12x8xf32, #tpu.memory_space<vmem>>, vector<8x8xf32>
    %c4_140 = arith.constant 4 : index
    %c0_141 = arith.constant 0 : index
    %c0_142 = arith.constant 0 : index
    %215 = vector.load %arg40[%c4_140, %c0_141, %c0_142] : memref<5x8x16xf32, #tpu.memory_space<vmem>>, vector<1x8x16xf32>
    %216 = vector.shape_cast %215 : vector<1x8x16xf32> to vector<8x16xf32>
    %217 = arith.truncf %214 : vector<8x8xf32> to vector<8x8xbf16>
    %218 = arith.truncf %216 : vector<8x16xf32> to vector<8x16xbf16>
    %cst_143 = arith.constant dense<0.000000e+00> : vector<8x16xf32>
    %219 = tpu.matmul %217, %218, %cst_143 {dimension_numbers = #tpu.dot_dimension_numbers<[1], [0], [0], [1], [0, 0, 1, 1], [], []>} : vector<8x8xbf16>, vector<8x16xbf16>, vector<8x16xf32> -> vector<8x16xf32>
    %220 = arith.addf %213, %219 : vector<8x16xf32>
    %c0_144 = arith.constant 0 : index
    %c0_145 = arith.constant 0 : index
    %221 = vector.load %arg41[%c0_144, %c0_145] : memref<1x16xf32, #tpu.memory_space<vmem>>, vector<1x16xf32>
    %222 = vector.broadcast %221 : vector<1x16xf32> to vector<8x16xf32>
    %223 = arith.addf %220, %222 : vector<8x16xf32>
    %224 = math.tanh %223 : vector<8x16xf32>
    %cst_146 = arith.constant 0.000000e+00 : f32
    %225 = vector.broadcast %cst_146 : f32 to vector<12x16xf32>
    %c0_147 = arith.constant 0 : index
    %c0_148 = arith.constant 0 : index
    %226 = vector.load %arg50[%c0_147, %c0_148] : memref<12x16xf32, #tpu.memory_space<vmem>>, vector<12x16xf32>
    tpu.vector_store %arg50[%c0_147, %c0_148], %225 {strides = array<i32>} : memref<12x16xf32, #tpu.memory_space<vmem>>, vector<12x16xf32>,
    %c2_149 = arith.constant 2 : index
    %c0_150 = arith.constant 0 : index
    %227 = vector.load %arg50[%c2_149, %c0_150] : memref<12x16xf32, #tpu.memory_space<vmem>>, vector<8x16xf32>
    tpu.vector_store %arg50[%c2_149, %c0_150], %224 {strides = array<i32>} : memref<12x16xf32, #tpu.memory_space<vmem>>, vector<8x16xf32>,
    %cst_151 = arith.constant 0.000000e+00 : f32
    %228 = vector.broadcast %cst_151 : f32 to vector<8x8xf32>
    %c0_152 = arith.constant 0 : index
    %c0_153 = arith.constant 0 : index
    %229 = vector.load %arg50[%c0_152, %c0_153] : memref<12x16xf32, #tpu.memory_space<vmem>>, vector<8x16xf32>
    %c0_154 = arith.constant 0 : index
    %c0_155 = arith.constant 0 : index
    %c0_156 = arith.constant 0 : index
    %230 = vector.load %arg42[%c0_154, %c0_155, %c0_156] : memref<5x16x8xf32, #tpu.memory_space<vmem>>, vector<1x16x8xf32>
    %231 = vector.shape_cast %230 : vector<1x16x8xf32> to vector<16x8xf32>
    %232 = arith.truncf %229 : vector<8x16xf32> to vector<8x16xbf16>
    %233 = arith.truncf %231 : vector<16x8xf32> to vector<16x8xbf16>
    %cst_157 = arith.constant dense<0.000000e+00> : vector<8x8xf32>
    %234 = tpu.matmul %232, %233, %cst_157 {dimension_numbers = #tpu.dot_dimension_numbers<[1], [0], [0], [1], [0, 0, 1, 1], [], []>} : vector<8x16xbf16>, vector<16x8xbf16>, vector<8x8xf32> -> vector<8x8xf32>
    %235 = arith.addf %228, %234 : vector<8x8xf32>
    %c1_158 = arith.constant 1 : index
    %c0_159 = arith.constant 0 : index
    %236 = vector.load %arg50[%c1_158, %c0_159] : memref<12x16xf32, #tpu.memory_space<vmem>>, vector<8x16xf32>
    %c1_160 = arith.constant 1 : index
    %c0_161 = arith.constant 0 : index
    %c0_162 = arith.constant 0 : index
    %237 = vector.load %arg42[%c1_160, %c0_161, %c0_162] : memref<5x16x8xf32, #tpu.memory_space<vmem>>, vector<1x16x8xf32>
    %238 = vector.shape_cast %237 : vector<1x16x8xf32> to vector<16x8xf32>
    %239 = arith.truncf %236 : vector<8x16xf32> to vector<8x16xbf16>
    %240 = arith.truncf %238 : vector<16x8xf32> to vector<16x8xbf16>
    %cst_163 = arith.constant dense<0.000000e+00> : vector<8x8xf32>
    %241 = tpu.matmul %239, %240, %cst_163 {dimension_numbers = #tpu.dot_dimension_numbers<[1], [0], [0], [1], [0, 0, 1, 1], [], []>} : vector<8x16xbf16>, vector<16x8xbf16>, vector<8x8xf32> -> vector<8x8xf32>
    %242 = arith.addf %235, %241 : vector<8x8xf32>
    %c2_164 = arith.constant 2 : index
    %c0_165 = arith.constant 0 : index
    %243 = vector.load %arg50[%c2_164, %c0_165] : memref<12x16xf32, #tpu.memory_space<vmem>>, vector<8x16xf32>
    %c2_166 = arith.constant 2 : index
    %c0_167 = arith.constant 0 : index
    %c0_168 = arith.constant 0 : index
    %244 = vector.load %arg42[%c2_166, %c0_167, %c0_168] : memref<5x16x8xf32, #tpu.memory_space<vmem>>, vector<1x16x8xf32>
    %245 = vector.shape_cast %244 : vector<1x16x8xf32> to vector<16x8xf32>
    %246 = arith.truncf %243 : vector<8x16xf32> to vector<8x16xbf16>
    %247 = arith.truncf %245 : vector<16x8xf32> to vector<16x8xbf16>
    %cst_169 = arith.constant dense<0.000000e+00> : vector<8x8xf32>
    %248 = tpu.matmul %246, %247, %cst_169 {dimension_numbers = #tpu.dot_dimension_numbers<[1], [0], [0], [1], [0, 0, 1, 1], [], []>} : vector<8x16xbf16>, vector<16x8xbf16>, vector<8x8xf32> -> vector<8x8xf32>
    %249 = arith.addf %242, %248 : vector<8x8xf32>
    %c3_170 = arith.constant 3 : index
    %c0_171 = arith.constant 0 : index
    %250 = vector.load %arg50[%c3_170, %c0_171] : memref<12x16xf32, #tpu.memory_space<vmem>>, vector<8x16xf32>
    %c3_172 = arith.constant 3 : index
    %c0_173 = arith.constant 0 : index
    %c0_174 = arith.constant 0 : index
    %251 = vector.load %arg42[%c3_172, %c0_173, %c0_174] : memref<5x16x8xf32, #tpu.memory_space<vmem>>, vector<1x16x8xf32>
    %252 = vector.shape_cast %251 : vector<1x16x8xf32> to vector<16x8xf32>
    %253 = arith.truncf %250 : vector<8x16xf32> to vector<8x16xbf16>
    %254 = arith.truncf %252 : vector<16x8xf32> to vector<16x8xbf16>
    %cst_175 = arith.constant dense<0.000000e+00> : vector<8x8xf32>
    %255 = tpu.matmul %253, %254, %cst_175 {dimension_numbers = #tpu.dot_dimension_numbers<[1], [0], [0], [1], [0, 0, 1, 1], [], []>} : vector<8x16xbf16>, vector<16x8xbf16>, vector<8x8xf32> -> vector<8x8xf32>
    %256 = arith.addf %249, %255 : vector<8x8xf32>
    %c4_176 = arith.constant 4 : index
    %c0_177 = arith.constant 0 : index
    %257 = vector.load %arg50[%c4_176, %c0_177] : memref<12x16xf32, #tpu.memory_space<vmem>>, vector<8x16xf32>
    %c4_178 = arith.constant 4 : index
    %c0_179 = arith.constant 0 : index
    %c0_180 = arith.constant 0 : index
    %258 = vector.load %arg42[%c4_178, %c0_179, %c0_180] : memref<5x16x8xf32, #tpu.memory_space<vmem>>, vector<1x16x8xf32>
    %259 = vector.shape_cast %258 : vector<1x16x8xf32> to vector<16x8xf32>
    %260 = arith.truncf %257 : vector<8x16xf32> to vector<8x16xbf16>
    %261 = arith.truncf %259 : vector<16x8xf32> to vector<16x8xbf16>
    %cst_181 = arith.constant dense<0.000000e+00> : vector<8x8xf32>
    %262 = tpu.matmul %260, %261, %cst_181 {dimension_numbers = #tpu.dot_dimension_numbers<[1], [0], [0], [1], [0, 0, 1, 1], [], []>} : vector<8x16xbf16>, vector<16x8xbf16>, vector<8x8xf32> -> vector<8x8xf32>
    %263 = arith.addf %256, %262 : vector<8x8xf32>
    %c0_182 = arith.constant 0 : index
    %c0_183 = arith.constant 0 : index
    %264 = vector.load %arg43[%c0_182, %c0_183] : memref<1x8xf32, #tpu.memory_space<vmem>>, vector<1x8xf32>
    %265 = vector.broadcast %264 : vector<1x8xf32> to vector<8x8xf32>
    %266 = arith.addf %263, %265 : vector<8x8xf32>
    %c2_184 = arith.constant 2 : index
    %c0_185 = arith.constant 0 : index
    %267 = vector.load %arg49[%c2_184, %c0_185] : memref<12x8xf32, #tpu.memory_space<vmem>>, vector<8x8xf32>
    %268 = arith.addf %267, %266 : vector<8x8xf32>
    %c0_186 = arith.constant 0 : index
    %c0_187 = arith.constant 0 : index
    %269 = vector.load %arg44[%c0_186, %c0_187] : memref<8x16xf32, #tpu.memory_space<vmem>>, vector<8x16xf32>
    %270 = arith.truncf %268 : vector<8x8xf32> to vector<8x8xbf16>
    %271 = arith.truncf %269 : vector<8x16xf32> to vector<8x16xbf16>
    %cst_188 = arith.constant dense<0.000000e+00> : vector<8x16xf32>
    %272 = tpu.matmul %270, %271, %cst_188 {dimension_numbers = #tpu.dot_dimension_numbers<[1], [0], [0], [1], [0, 0, 1, 1], [], []>} : vector<8x8xbf16>, vector<8x16xbf16>, vector<8x16xf32> -> vector<8x16xf32>
    %c0_189 = arith.constant 0 : index
    %c0_190 = arith.constant 0 : index
    %273 = vector.load %arg45[%c0_189, %c0_190] : memref<1x16xf32, #tpu.memory_space<vmem>>, vector<1x16xf32>
    %274 = vector.broadcast %273 : vector<1x16xf32> to vector<8x16xf32>
    %275 = arith.addf %272, %274 : vector<8x16xf32>
    %c0_191 = arith.constant 0 : index
    %c0_192 = arith.constant 0 : index
    %276 = vector.load %arg46[%c0_191, %c0_192] : memref<1x16xf32, #tpu.memory_space<vmem>>, vector<1x16xf32>
    %277 = vector.broadcast %276 : vector<1x16xf32> to vector<8x16xf32>
    %278 = arith.mulf %275, %277 : vector<8x16xf32>
    %c0_193 = arith.constant 0 : index
    %c0_194 = arith.constant 0 : index
    %279 = vector.load %arg47[%c0_193, %c0_194] : memref<1x16xf32, #tpu.memory_space<vmem>>, vector<1x16xf32>
    %280 = vector.broadcast %279 : vector<1x16xf32> to vector<8x16xf32>
    %281 = arith.addf %278, %280 : vector<8x16xf32>
    %cst_195 = arith.constant 2.30258512 : f32
    %282 = vector.broadcast %cst_195 : f32 to vector<8x16xf32>
    %283 = arith.mulf %281, %282 : vector<8x16xf32>
    %284 = math.exp %283 : vector<8x16xf32>
    %c0_196 = arith.constant 0 : index
    %c0_197 = arith.constant 0 : index
    %285 = vector.load %arg48[%c0_196, %c0_197] : memref<8x16xf32, #tpu.memory_space<vmem>>, vector<8x16xf32>
    tpu.vector_store %arg48[%c0_196, %c0_197], %284 {strides = array<i32>} : memref<8x16xf32, #tpu.memory_space<vmem>>, vector<8x16xf32>,
    return
  }
}

</mosaic_0001>

<llo_original>
// kernel: _lambda_.1
$region0: #{_lambda_.1}
  #allocation0 [shape = 'u32[]', space=smem, size = 0x4, offset = 0x4, fixed_abs, tag = 'smem constant byte address 0x4 - core index']
  #allocation1 [shape = 'u32[144,128]{1,0:T(1,128)}', space=vmem, size = 0x12000, scoped, tag = 'internal scratch']
  #allocation2 [shape = 'f32[12,8]{1,0:T(8,128)}', space=vmem, size = 0x2000, scoped, tag = 'scratch operand']
  #allocation3 [shape = 'f32[12,16]{1,0:T(8,128)}', space=vmem, size = 0x2000, scoped, tag = 'scratch operand']
  %s0 = inlined_call_operand.smem [shape: u32[49], index: -1, kind: input, shape index: {}]
  %s1 = sld [smem:[%s0]]
  %s2 = scalar_lea.smem %s0, 1
  %s3 = sld [smem:[%s2]]
  %s4 = scalar_lea.smem %s0, 2
  %s5 = sld [smem:[%s4]]
  %s6 = scalar_lea.smem %s0, 3
  %s7 = sld [smem:[%s6]]
  %s8 = scalar_lea.smem %s0, 4
  %s9 = sld [smem:[%s8]]
  %s10 = scalar_lea.smem %s0, 5
  %s11 = sld [smem:[%s10]]
  %s12 = scalar_lea.smem %s0, 6
  %s13 = sld [smem:[%s12]]
  %s14 = scalar_lea.smem %s0, 7
  %s15 = sld [smem:[%s14]]
  %s16 = scalar_lea.smem %s0, 8
  %s17 = sld [smem:[%s16]]
  %s18 = scalar_lea.smem %s0, 9
  %s19 = sld [smem:[%s18]]
  %s20 = scalar_lea.smem %s0, 10
  %s21 = sld [smem:[%s20]]
  %s22 = scalar_lea.smem %s0, 11
  %s23 = sld [smem:[%s22]]
  %s24 = scalar_lea.smem %s0, 12
  %s25 = sld [smem:[%s24]]
  %s26 = scalar_lea.smem %s0, 13
  %s27 = sld [smem:[%s26]]
  %s28 = scalar_lea.smem %s0, 14
  %s29 = sld [smem:[%s28]]
  %s30 = scalar_lea.smem %s0, 15
  %s31 = sld [smem:[%s30]]
  %s32 = scalar_lea.smem %s0, 16
  %s33 = sld [smem:[%s32]]
  %s34 = scalar_lea.smem %s0, 17
  %s35 = sld [smem:[%s34]]
  %s36 = scalar_lea.smem %s0, 18
  %s37 = sld [smem:[%s36]]
  %s38 = scalar_lea.smem %s0, 19
  %s39 = sld [smem:[%s38]]
  %s40 = scalar_lea.smem %s0, 20
  %s41 = sld [smem:[%s40]]
  %s42 = scalar_lea.smem %s0, 21
  %s43 = sld [smem:[%s42]]
  %s44 = scalar_lea.smem %s0, 22
  %s45 = sld [smem:[%s44]]
  %s46 = scalar_lea.smem %s0, 23
  %s47 = sld [smem:[%s46]]
  %s48 = scalar_lea.smem %s0, 24
  %s49 = sld [smem:[%s48]]
  %s50 = scalar_lea.smem %s0, 25
  %s51 = sld [smem:[%s50]]
  %s52 = scalar_lea.smem %s0, 26
  %s53 = sld [smem:[%s52]]
  %s54 = scalar_lea.smem %s0, 27
  %s55 = sld [smem:[%s54]]
  %s56 = scalar_lea.smem %s0, 28
  %s57 = sld [smem:[%s56]]
  %s58 = scalar_lea.smem %s0, 29
  %s59 = sld [smem:[%s58]]
  %s60 = scalar_lea.smem %s0, 30
  %s61 = sld [smem:[%s60]]
  %s62 = scalar_lea.smem %s0, 31
  %s63 = sld [smem:[%s62]]
  %s64 = scalar_lea.smem %s0, 32
  %s65 = sld [smem:[%s64]]
  %s66 = scalar_lea.smem %s0, 33
  %s67 = sld [smem:[%s66]]
  %s68 = scalar_lea.smem %s0, 34
  %s69 = sld [smem:[%s68]]
  %s70 = scalar_lea.smem %s0, 35
  %s71 = sld [smem:[%s70]]
  %s72 = scalar_lea.smem %s0, 36
  %s73 = sld [smem:[%s72]]
  %s74 = scalar_lea.smem %s0, 37
  %s75 = sld [smem:[%s74]]
  %s76 = scalar_lea.smem %s0, 38
  %s77 = sld [smem:[%s76]]
  %s78 = scalar_lea.smem %s0, 39
  %s79 = sld [smem:[%s78]]
  %s80 = scalar_lea.smem %s0, 40
  %s81 = sld [smem:[%s80]]
  %s82 = scalar_lea.smem %s0, 41
  %s83 = sld [smem:[%s82]]
  %s84 = scalar_lea.smem %s0, 42
  %s85 = sld [smem:[%s84]]
  %s86 = scalar_lea.smem %s0, 43
  %s87 = sld [smem:[%s86]]
  %s88 = scalar_lea.smem %s0, 44
  %s89 = sld [smem:[%s88]]
  %s90 = scalar_lea.smem %s0, 45
  %s91 = sld [smem:[%s90]]
  %s92 = scalar_lea.smem %s0, 46
  %s93 = sld [smem:[%s92]]
  %s94 = scalar_lea.smem %s0, 47
  %s95 = sld [smem:[%s94]]
  %s96 = scalar_lea.smem %s0, 48
  %s97 = sld [smem:[%s96]]
  %s98 = sld [smem:[#allocation0]]
  $region249: #{_lambda_.1} parent=0
    _
  %s100 = ssub.s32 1, %s98
  %s101 = scalar_select 0, %s100, %s98
  $region1: #{_lambda_.1} parent=0
    #allocation4 [shape = 'u8[16384]{0}', space=vmem, size = 0x4000, scoped, tag = 'input window, operand 10, single buffered']
    #allocation5 [shape = 's32[1]{0}', space=sflag, size = 0x4, scoped, tag = 'scoped memory for _lambda_.1']
    #allocation6 [shape = 's32[1]{0}', space=sflag, size = 0x4, scoped, tag = 'scoped memory for _lambda_.1']
    #allocation7 [shape = 'u8[4096]{0}', space=vmem, size = 0x1000, scoped, tag = 'input window, operand 16, single buffered']
    #allocation8 [shape = 's32[1]{0}', space=sflag, size = 0x4, scoped, tag = 'scoped memory for _lambda_.1']
    #allocation9 [shape = 'u8[16384]{0}', space=vmem, size = 0x4000, scoped, tag = 'input window, operand 18, single buffered']
    #allocation10 [shape = 'u8[16384]{0}', space=vmem, size = 0x4000, scoped, tag = 'input window, operand 20, single buffered']
    #allocation11 [shape = 's32[1]{0}', space=sflag, size = 0x4, scoped, tag = 'scoped memory for _lambda_.1']
    #allocation12 [shape = 'u8[16384]{0}', space=vmem, size = 0x4000, scoped, tag = 'input window, operand 24, single buffered']
    #allocation13 [shape = 'u8[16384]{0}', space=vmem, size = 0x4000, scoped, tag = 'input window, operand 26, single buffered']
    #allocation14 [shape = 's32[1]{0}', space=sflag, size = 0x4, scoped, tag = 'scoped memory for _lambda_.1']
    #allocation15 [shape = 'u8[16384]{0}', space=vmem, size = 0x4000, scoped, tag = 'input window, operand 28, single buffered']
    #allocation16 [shape = 'u8[16384]{0}', space=vmem, size = 0x4000, scoped, tag = 'input window, operand 32, single buffered']
    #allocation17 [shape = 's32[1]{0}', space=sflag, size = 0x4, scoped, tag = 'scoped memory for _lambda_.1']
    #allocation18 [shape = 'u8[16384]{0}', space=vmem, size = 0x4000, scoped, tag = 'input window, operand 38, single buffered']
    #allocation19 [shape = 'u8[4096]{0}', space=vmem, size = 0x1000, scoped, tag = 'input window, operand 44, single buffered']
    #allocation20 [shape = 's32[1]{0}', space=sflag, size = 0x4, scoped, tag = 'scoped memory for _lambda_.1']
    #allocation21 [shape = 'u8[4096]{0}', space=vmem, size = 0x1000, scoped, tag = 'output window, operand 0, single buffered']
    %102 = vsyncpa [#allocation5], 0
    %103 = vsyncpa [#allocation8], 0
    %104 = vsyncpa [#allocation11], 0
    %105 = vsyncpa [#allocation14], 0
    %106 = vsyncpa [#allocation17], 0
    %107 = vsyncpa [#allocation20], 0
    %108 = vsyncpa [#allocation6], 0
    // Predicated region
    $region2: #{_lambda_.1} parent=1 // pred_check
      _
    $region3: #{_lambda_.1} parent=1 // pred_check_branch
      %110 = sbr.rel (0) target = $region5
    $region4: #{_lambda_.1} parent=1 // pred_region
      _
    $region5: #{_lambda_.1} parent=1 // pred_fallthru
      _
    // Predicated region
    $region6: #{_lambda_.1} parent=1 // pred_check
      _
    $region7: #{_lambda_.1} parent=1 // pred_check_branch
      %112 = sbr.rel (0) target = $region9
    $region8: #{_lambda_.1} parent=1 // pred_region
      _
    $region9: #{_lambda_.1} parent=1 // pred_fallthru
      _
    // Predicated region
    $region10: #{_lambda_.1} parent=1 // pred_check
      _
    $region11: #{_lambda_.1} parent=1 // pred_check_branch
      %114 = sbr.rel (0) target = $region13
    $region12: #{_lambda_.1} parent=1 // pred_region
      _
    $region13: #{_lambda_.1} parent=1 // pred_fallthru
      _
    // Predicated region
    $region14: #{_lambda_.1} parent=1 // pred_check
      _
    $region15: #{_lambda_.1} parent=1 // pred_check_branch
      %116 = sbr.rel (0) target = $region17
    $region16: #{_lambda_.1} parent=1 // pred_region
      _
    $region17: #{_lambda_.1} parent=1 // pred_fallthru
      _
    // Predicated region
    $region18: #{_lambda_.1} parent=1 // pred_check
      _
    $region19: #{_lambda_.1} parent=1 // pred_check_branch
      %118 = sbr.rel (0) target = $region21
    $region20: #{_lambda_.1} parent=1 // pred_region
      _
    $region21: #{_lambda_.1} parent=1 // pred_fallthru
      _
    // Predicated region
    $region22: #{_lambda_.1} parent=1 // pred_check
      _
    $region23: #{_lambda_.1} parent=1 // pred_check_branch
      %120 = sbr.rel (0) target = $region25
    $region24: #{_lambda_.1} parent=1 // pred_region
      _
    $region25: #{_lambda_.1} parent=1 // pred_fallthru
      _
    // Predicated region
    $region26: #{_lambda_.1} parent=1 // pred_check
      _
    $region27: #{_lambda_.1} parent=1 // pred_check_branch
      %122 = sbr.rel (0) target = $region29
    $region28: #{_lambda_.1} parent=1 // pred_region
      _
    $region29: #{_lambda_.1} parent=1 // pred_fallthru
      _
    // Predicated region
    $region30: #{_lambda_.1} parent=1 // pred_check
      _
    $region31: #{_lambda_.1} parent=1 // pred_check_branch
      %124 = sbr.rel (0) target = $region33
    $region32: #{_lambda_.1} parent=1 // pred_region
      _
    $region33: #{_lambda_.1} parent=1 // pred_fallthru
      _
    // Predicated region
    $region34: #{_lambda_.1} parent=1 // pred_check
      _
    $region35: #{_lambda_.1} parent=1 // pred_check_branch
      %126 = sbr.rel (0) target = $region37
    $region36: #{_lambda_.1} parent=1 // pred_region
      _
    $region37: #{_lambda_.1} parent=1 // pred_fallthru
      _
    // Predicated region
    $region38: #{_lambda_.1} parent=1 // pred_check
      _
    $region39: #{_lambda_.1} parent=1 // pred_check_branch
      %128 = sbr.rel (0) target = $region41
    $region40: #{_lambda_.1} parent=1 // pred_region
      _
    $region41: #{_lambda_.1} parent=1 // pred_fallthru
      _
    // Predicated region
    $region42: #{_lambda_.1} parent=1 // pred_check
      _
    $region43: #{_lambda_.1} parent=1 // pred_check_branch
      %130 = sbr.rel (0) target = $region45
    $region44: #{_lambda_.1} parent=1 // pred_region
      %s132 = ssub.s32 512, 512
      %133 = vsyncadd [#allocation5], %s132
      %s134 = sshll.u32 [#allocation4], 4
      %s135 = int_to_ptr.vmem [resolvable:$true] %s134
      %140 = dma.hbm_to_vmem [thread:$0]  %s21, 512, %s135, [#allocation5], 128, 128, 8
    $region45: #{_lambda_.1} parent=1 // pred_fallthru
      _
    // Predicated region
    $region46: #{_lambda_.1} parent=1 // pred_check
      _
    $region47: #{_lambda_.1} parent=1 // pred_check_branch
      %142 = sbr.rel (0) target = $region49
    $region48: #{_lambda_.1} parent=1 // pred_region
      _
    $region49: #{_lambda_.1} parent=1 // pred_fallthru
      _
    // Predicated region
    $region50: #{_lambda_.1} parent=1 // pred_check
      _
    $region51: #{_lambda_.1} parent=1 // pred_check_branch
      %144 = sbr.rel (0) target = $region53
    $region52: #{_lambda_.1} parent=1 // pred_region
      _
    $region53: #{_lambda_.1} parent=1 // pred_fallthru
      _
    // Predicated region
    $region54: #{_lambda_.1} parent=1 // pred_check
      _
    $region55: #{_lambda_.1} parent=1 // pred_check_branch
      %146 = sbr.rel (0) target = $region57
    $region56: #{_lambda_.1} parent=1 // pred_region
      _
    $region57: #{_lambda_.1} parent=1 // pred_fallthru
      _
    // Predicated region
    $region58: #{_lambda_.1} parent=1 // pred_check
      _
    $region59: #{_lambda_.1} parent=1 // pred_check_branch
      %148 = sbr.rel (0) target = $region61
    $region60: #{_lambda_.1} parent=1 // pred_region
      _
    $region61: #{_lambda_.1} parent=1 // pred_fallthru
      _
    // Predicated region
    $region62: #{_lambda_.1} parent=1 // pred_check
      _
    $region63: #{_lambda_.1} parent=1 // pred_check_branch
      %150 = sbr.rel (0) target = $region65
    $region64: #{_lambda_.1} parent=1 // pred_region
      _
    $region65: #{_lambda_.1} parent=1 // pred_fallthru
      _
    // Predicated region
    $region66: #{_lambda_.1} parent=1 // pred_check
      _
    $region67: #{_lambda_.1} parent=1 // pred_check_branch
      %152 = sbr.rel (0) target = $region69
    $region68: #{_lambda_.1} parent=1 // pred_region
      %s154 = ssub.s32 128, 128
      %155 = vsyncadd [#allocation8], %s154
      %s157 = sshll.u32 [#allocation7], 4
      %s158 = int_to_ptr.vmem [resolvable:$true] %s157
      %160 = dma.hbm_to_vmem [thread:$0]  %s33, 128, %s158, [#allocation8]
    $region69: #{_lambda_.1} parent=1 // pred_fallthru
      _
    // Predicated region
    $region70: #{_lambda_.1} parent=1 // pred_check
      _
    $region71: #{_lambda_.1} parent=1 // pred_check_branch
      %162 = sbr.rel (0) target = $region73
    $region72: #{_lambda_.1} parent=1 // pred_region
      _
    $region73: #{_lambda_.1} parent=1 // pred_fallthru
      _
    // Predicated region
    $region74: #{_lambda_.1} parent=1 // pred_check
      _
    $region75: #{_lambda_.1} parent=1 // pred_check_branch
      %164 = sbr.rel (0) target = $region77
    $region76: #{_lambda_.1} parent=1 // pred_region
      %s166 = ssub.s32 512, 512
      %167 = vsyncadd [#allocation8], %s166
      %s168 = sshll.u32 [#allocation9], 4
      %s169 = int_to_ptr.vmem [resolvable:$true] %s168
      %174 = dma.hbm_to_vmem [thread:$0]  %s37, 512, %s169, [#allocation8], 128, 128, 8
    $region77: #{_lambda_.1} parent=1 // pred_fallthru
      _
    // Predicated region
    $region78: #{_lambda_.1} parent=1 // pred_check
      _
    $region79: #{_lambda_.1} parent=1 // pred_check_branch
      %176 = sbr.rel (0) target = $region81
    $region80: #{_lambda_.1} parent=1 // pred_region
      _
    $region81: #{_lambda_.1} parent=1 // pred_fallthru
      _
    // Predicated region
    $region82: #{_lambda_.1} parent=1 // pred_check
      _
    $region83: #{_lambda_.1} parent=1 // pred_check_branch
      %178 = sbr.rel (0) target = $region85
    $region84: #{_lambda_.1} parent=1 // pred_region
      %s180 = ssub.s32 512, 512
      %181 = vsyncadd [#allocation11], %s180
      %s182 = sshll.u32 [#allocation10], 4
      %s183 = int_to_ptr.vmem [resolvable:$true] %s182
      %188 = dma.hbm_to_vmem [thread:$0]  %s41, 512, %s183, [#allocation11], 128, 128, 8
    $region85: #{_lambda_.1} parent=1 // pred_fallthru
      _
    // Predicated region
    $region86: #{_lambda_.1} parent=1 // pred_check
      _
    $region87: #{_lambda_.1} parent=1 // pred_check_branch
      %190 = sbr.rel (0) target = $region89
    $region88: #{_lambda_.1} parent=1 // pred_region
      _
    $region89: #{_lambda_.1} parent=1 // pred_fallthru
      _
    // Predicated region
    $region90: #{_lambda_.1} parent=1 // pred_check
      _
    $region91: #{_lambda_.1} parent=1 // pred_check_branch
      %192 = sbr.rel (0) target = $region93
    $region92: #{_lambda_.1} parent=1 // pred_region
      _
    $region93: #{_lambda_.1} parent=1 // pred_fallthru
      _
    // Predicated region
    $region94: #{_lambda_.1} parent=1 // pred_check
      _
    $region95: #{_lambda_.1} parent=1 // pred_check_branch
      %194 = sbr.rel (0) target = $region97
    $region96: #{_lambda_.1} parent=1 // pred_region
      _
    $region97: #{_lambda_.1} parent=1 // pred_fallthru
      _
    // Predicated region
    $region98: #{_lambda_.1} parent=1 // pred_check
      _
    $region99: #{_lambda_.1} parent=1 // pred_check_branch
      %196 = sbr.rel (0) target = $region101
    $region100: #{_lambda_.1} parent=1 // pred_region
      %s198 = ssub.s32 512, 512
      %199 = vsyncadd [#allocation11], %s198
      %s200 = sshll.u32 [#allocation12], 4
      %s201 = int_to_ptr.vmem [resolvable:$true] %s200
      %206 = dma.hbm_to_vmem [thread:$0]  %s49, 512, %s201, [#allocation11], 128, 128, 8
    $region101: #{_lambda_.1} parent=1 // pred_fallthru
      _
    // Predicated region
    $region102: #{_lambda_.1} parent=1 // pred_check
      _
    $region103: #{_lambda_.1} parent=1 // pred_check_branch
      %208 = sbr.rel (0) target = $region105
    $region104: #{_lambda_.1} parent=1 // pred_region
      _
    $region105: #{_lambda_.1} parent=1 // pred_fallthru
      _
    // Predicated region
    $region106: #{_lambda_.1} parent=1 // pred_check
      _
    $region107: #{_lambda_.1} parent=1 // pred_check_branch
      %210 = sbr.rel (0) target = $region109
    $region108: #{_lambda_.1} parent=1 // pred_region
      %s212 = ssub.s32 512, 512
      %213 = vsyncadd [#allocation14], %s212
      %s214 = sshll.u32 [#allocation13], 4
      %s215 = int_to_ptr.vmem [resolvable:$true] %s214
      %220 = dma.hbm_to_vmem [thread:$0]  %s53, 512, %s215, [#allocation14], 128, 128, 8
    $region109: #{_lambda_.1} parent=1 // pred_fallthru
      _
    // Predicated region
    $region110: #{_lambda_.1} parent=1 // pred_check
      _
    $region111: #{_lambda_.1} parent=1 // pred_check_branch
      %222 = sbr.rel (0) target = $region113
    $region112: #{_lambda_.1} parent=1 // pred_region
      _
    $region113: #{_lambda_.1} parent=1 // pred_fallthru
      _
    // Predicated region
    $region114: #{_lambda_.1} parent=1 // pred_check
      _
    $region115: #{_lambda_.1} parent=1 // pred_check_branch
      %224 = sbr.rel (0) target = $region117
    $region116: #{_lambda_.1} parent=1 // pred_region
      %s226 = ssub.s32 512, 512
      %227 = vsyncadd [#allocation14], %s226
      %s228 = sshll.u32 [#allocation15], 4
      %s229 = int_to_ptr.vmem [resolvable:$true] %s228
      %234 = dma.hbm_to_vmem [thread:$0]  %s57, 512, %s229, [#allocation14], 128, 128, 8
    $region117: #{_lambda_.1} parent=1 // pred_fallthru
      _
    // Predicated region
    $region118: #{_lambda_.1} parent=1 // pred_check
      _
    $region119: #{_lambda_.1} parent=1 // pred_check_branch
      %236 = sbr.rel (0) target = $region121
    $region120: #{_lambda_.1} parent=1 // pred_region
      _
    $region121: #{_lambda_.1} parent=1 // pred_fallthru
      _
    // Predicated region
    $region122: #{_lambda_.1} parent=1 // pred_check
      _
    $region123: #{_lambda_.1} parent=1 // pred_check_branch
      %238 = sbr.rel (0) target = $region125
    $region124: #{_lambda_.1} parent=1 // pred_region
      _
    $region125: #{_lambda_.1} parent=1 // pred_fallthru
      _
    // Predicated region
    $region126: #{_lambda_.1} parent=1 // pred_check
      _
    $region127: #{_lambda_.1} parent=1 // pred_check_branch
      %240 = sbr.rel (0) target = $region129
    $region128: #{_lambda_.1} parent=1 // pred_region
      _
    $region129: #{_lambda_.1} parent=1 // pred_fallthru
      _
    // Predicated region
    $region130: #{_lambda_.1} parent=1 // pred_check
      _
    $region131: #{_lambda_.1} parent=1 // pred_check_branch
      %242 = sbr.rel (0) target = $region133
    $region132: #{_lambda_.1} parent=1 // pred_region
      %s244 = ssub.s32 512, 512
      %245 = vsyncadd [#allocation17], %s244
      %s246 = sshll.u32 [#allocation16], 4
      %s247 = int_to_ptr.vmem [resolvable:$true] %s246
      %252 = dma.hbm_to_vmem [thread:$0]  %s65, 512, %s247, [#allocation17], 128, 128, 8
    $region133: #{_lambda_.1} parent=1 // pred_fallthru
      _
    // Predicated region
    $region134: #{_lambda_.1} parent=1 // pred_check
      _
    $region135: #{_lambda_.1} parent=1 // pred_check_branch
      %254 = sbr.rel (0) target = $region137
    $region136: #{_lambda_.1} parent=1 // pred_region
      _
    $region137: #{_lambda_.1} parent=1 // pred_fallthru
      _
    // Predicated region
    $region138: #{_lambda_.1} parent=1 // pred_check
      _
    $region139: #{_lambda_.1} parent=1 // pred_check_branch
      %256 = sbr.rel (0) target = $region141
    $region140: #{_lambda_.1} parent=1 // pred_region
      _
    $region141: #{_lambda_.1} parent=1 // pred_fallthru
      _
    // Predicated region
    $region142: #{_lambda_.1} parent=1 // pred_check
      _
    $region143: #{_lambda_.1} parent=1 // pred_check_branch
      %258 = sbr.rel (0) target = $region145
    $region144: #{_lambda_.1} parent=1 // pred_region
      _
    $region145: #{_lambda_.1} parent=1 // pred_fallthru
      _
    // Predicated region
    $region146: #{_lambda_.1} parent=1 // pred_check
      _
    $region147: #{_lambda_.1} parent=1 // pred_check_branch
      %260 = sbr.rel (0) target = $region149
    $region148: #{_lambda_.1} parent=1 // pred_region
      _
    $region149: #{_lambda_.1} parent=1 // pred_fallthru
      _
    // Predicated region
    $region150: #{_lambda_.1} parent=1 // pred_check
      _
    $region151: #{_lambda_.1} parent=1 // pred_check_branch
      %262 = sbr.rel (0) target = $region153
    $region152: #{_lambda_.1} parent=1 // pred_region
      _
    $region153: #{_lambda_.1} parent=1 // pred_fallthru
      _
    // Predicated region
    $region154: #{_lambda_.1} parent=1 // pred_check
      _
    $region155: #{_lambda_.1} parent=1 // pred_check_branch
      %264 = sbr.rel (0) target = $region157
    $region156: #{_lambda_.1} parent=1 // pred_region
      %s266 = ssub.s32 512, 512
      %267 = vsyncadd [#allocation17], %s266
      %s268 = sshll.u32 [#allocation18], 4
      %s269 = int_to_ptr.vmem [resolvable:$true] %s268
      %274 = dma.hbm_to_vmem [thread:$0]  %s77, 512, %s269, [#allocation17], 128, 128, 8
    $region157: #{_lambda_.1} parent=1 // pred_fallthru
      _
    // Predicated region
    $region158: #{_lambda_.1} parent=1 // pred_check
      _
    $region159: #{_lambda_.1} parent=1 // pred_check_branch
      %276 = sbr.rel (0) target = $region161
    $region160: #{_lambda_.1} parent=1 // pred_region
      _
    $region161: #{_lambda_.1} parent=1 // pred_fallthru
      _
    // Predicated region
    $region162: #{_lambda_.1} parent=1 // pred_check
      _
    $region163: #{_lambda_.1} parent=1 // pred_check_branch
      %278 = sbr.rel (0) target = $region165
    $region164: #{_lambda_.1} parent=1 // pred_region
      _
    $region165: #{_lambda_.1} parent=1 // pred_fallthru
      _
    // Predicated region
    $region166: #{_lambda_.1} parent=1 // pred_check
      _
    $region167: #{_lambda_.1} parent=1 // pred_check_branch
      %280 = sbr.rel (0) target = $region169
    $region168: #{_lambda_.1} parent=1 // pred_region
      _
    $region169: #{_lambda_.1} parent=1 // pred_fallthru
      _
    // Predicated region
    $region170: #{_lambda_.1} parent=1 // pred_check
      _
    $region171: #{_lambda_.1} parent=1 // pred_check_branch
      %282 = sbr.rel (0) target = $region173
    $region172: #{_lambda_.1} parent=1 // pred_region
      _
    $region173: #{_lambda_.1} parent=1 // pred_fallthru
      _
    // Predicated region
    $region174: #{_lambda_.1} parent=1 // pred_check
      _
    $region175: #{_lambda_.1} parent=1 // pred_check_branch
      %284 = sbr.rel (0) target = $region177
    $region176: #{_lambda_.1} parent=1 // pred_region
      _
    $region177: #{_lambda_.1} parent=1 // pred_fallthru
      _
    // Predicated region
    $region178: #{_lambda_.1} parent=1 // pred_check
      _
    $region179: #{_lambda_.1} parent=1 // pred_check_branch
      %286 = sbr.rel (0) target = $region181
    $region180: #{_lambda_.1} parent=1 // pred_region
      %s288 = ssub.s32 128, 128
      %289 = vsyncadd [#allocation20], %s288
      %s291 = sshll.u32 [#allocation19], 4
      %s292 = int_to_ptr.vmem [resolvable:$true] %s291
      %294 = dma.hbm_to_vmem [thread:$0]  %s89, 128, %s292, [#allocation20]
    $region181: #{_lambda_.1} parent=1 // pred_fallthru
      _
    // Predicated region
    $region182: #{_lambda_.1} parent=1 // pred_check
      _
    $region183: #{_lambda_.1} parent=1 // pred_check_branch
      %296 = sbr.rel (0) target = $region185
    $region184: #{_lambda_.1} parent=1 // pred_region
      _
    $region185: #{_lambda_.1} parent=1 // pred_fallthru
      _
    // Predicated region
    $region186: #{_lambda_.1} parent=1 // pred_check
      _
    $region187: #{_lambda_.1} parent=1 // pred_check_branch
      %298 = sbr.rel (0) target = $region189
    $region188: #{_lambda_.1} parent=1 // pred_region
      _
    $region189: #{_lambda_.1} parent=1 // pred_fallthru
      _
    // Predicated region
    $region190: #{_lambda_.1} parent=1 // pred_check
      _
    $region191: #{_lambda_.1} parent=1 // pred_check_branch
      %300 = sbr.rel (0) target = $region193
    $region192: #{_lambda_.1} parent=1 // pred_region
      _
    $region193: #{_lambda_.1} parent=1 // pred_fallthru
      _
    // Predicated region
    $region194: #{_lambda_.1} parent=1 // pred_check
      _
    $region195: #{_lambda_.1} parent=1 // pred_check_branch
      %302 = sbr.rel (0) target = $region197
    $region196: #{_lambda_.1} parent=1 // pred_region
      %303 = dma.done [#allocation5], 512
    $region197: #{_lambda_.1} parent=1 // pred_fallthru
      _
    // Predicated region
    $region198: #{_lambda_.1} parent=1 // pred_check
      _
    $region199: #{_lambda_.1} parent=1 // pred_check_branch
      %305 = sbr.rel (0) target = $region201
    $region200: #{_lambda_.1} parent=1 // pred_region
      %306 = dma.done [#allocation8], 128
    $region201: #{_lambda_.1} parent=1 // pred_fallthru
      _
    // Predicated region
    $region202: #{_lambda_.1} parent=1 // pred_check
      _
    $region203: #{_lambda_.1} parent=1 // pred_check_branch
      %308 = sbr.rel (0) target = $region205
    $region204: #{_lambda_.1} parent=1 // pred_region
      %309 = dma.done [#allocation8], 512
    $region205: #{_lambda_.1} parent=1 // pred_fallthru
      _
    // Predicated region
    $region206: #{_lambda_.1} parent=1 // pred_check
      _
    $region207: #{_lambda_.1} parent=1 // pred_check_branch
      %311 = sbr.rel (0) target = $region209
    $region208: #{_lambda_.1} parent=1 // pred_region
      %312 = dma.done [#allocation11], 512
    $region209: #{_lambda_.1} parent=1 // pred_fallthru
      _
    // Predicated region
    $region210: #{_lambda_.1} parent=1 // pred_check
      _
    $region211: #{_lambda_.1} parent=1 // pred_check_branch
      %314 = sbr.rel (0) target = $region213
    $region212: #{_lambda_.1} parent=1 // pred_region
      %315 = dma.done [#allocation11], 512
    $region213: #{_lambda_.1} parent=1 // pred_fallthru
      _
    // Predicated region
    $region214: #{_lambda_.1} parent=1 // pred_check
      _
    $region215: #{_lambda_.1} parent=1 // pred_check_branch
      %317 = sbr.rel (0) target = $region217
    $region216: #{_lambda_.1} parent=1 // pred_region
      %318 = dma.done [#allocation14], 512
    $region217: #{_lambda_.1} parent=1 // pred_fallthru
      _
    // Predicated region
    $region218: #{_lambda_.1} parent=1 // pred_check
      _
    $region219: #{_lambda_.1} parent=1 // pred_check_branch
      %320 = sbr.rel (0) target = $region221
    $region220: #{_lambda_.1} parent=1 // pred_region
      %321 = dma.done [#allocation14], 512
    $region221: #{_lambda_.1} parent=1 // pred_fallthru
      _
    // Predicated region
    $region222: #{_lambda_.1} parent=1 // pred_check
      _
    $region223: #{_lambda_.1} parent=1 // pred_check_branch
      %323 = sbr.rel (0) target = $region225
    $region224: #{_lambda_.1} parent=1 // pred_region
      %324 = dma.done [#allocation17], 512
    $region225: #{_lambda_.1} parent=1 // pred_fallthru
      _
    // Predicated region
    $region226: #{_lambda_.1} parent=1 // pred_check
      _
    $region227: #{_lambda_.1} parent=1 // pred_check_branch
      %326 = sbr.rel (0) target = $region229
    $region228: #{_lambda_.1} parent=1 // pred_region
      %327 = dma.done [#allocation17], 512
    $region229: #{_lambda_.1} parent=1 // pred_fallthru
      _
    // Predicated region
    $region230: #{_lambda_.1} parent=1 // pred_check
      _
    $region231: #{_lambda_.1} parent=1 // pred_check_branch
      %329 = sbr.rel (0) target = $region233
    $region232: #{_lambda_.1} parent=1 // pred_region
      %330 = dma.done [#allocation20], 128
    $region233: #{_lambda_.1} parent=1 // pred_fallthru
      _
    %v332 = vld [vmem:[%s1] sm:$0xff]
    %v333 = vld [vmem:[%s7] sm:$0xff]
    %v334 = vld [vmem:[%s7 + $0x8] sm:$0xff]
    %v335 = vpack.c.bf16 %v332, %v332
    %v336 = vpack.c.bf16 %v334, %v333
    %vm337 = vcmask 130048
    %v339 = vsel %vm337, %v335, 0
    %341 = vmatprep.subr.bf16.mxu0 0
    %342 = vmatpush1.bf16.msra.mxu0 %v336
    %343 = vmatprep.subr.bf16.mxu0 0
    %344 = vmatpush1.bf16.msra.mxu0 0
    %345 = vmatprep.subr.bf16.mxu0 0
    %346 = vmatpush1.bf16.msra.mxu0 0
    %347 = vmatprep.subr.bf16.mxu0 0
    %348 = vmatpush1.bf16.msra.mxu0 0
    %349 = vmatprep.subr.bf16.mxu0 0
    %350 = vmatpush1.bf16.msra.mxu0 0
    %351 = vmatprep.subr.bf16.mxu0 0
    %352 = vmatpush1.bf16.msra.mxu0 0
    %353 = vmatprep.subr.bf16.mxu0 0
    %354 = vmatpush1.bf16.msra.mxu0 0
    %355 = vmatprep.subr.bf16.mxu0 0
    %356 = vmatpush1.bf16.msra.mxu0 0
    %357 = vmatprep.subr.bf16.mxu0 0
    %358 = vmatpush1.bf16.msra.mxu0 0
    %359 = vmatprep.subr.bf16.mxu0 0
    %360 = vmatpush1.bf16.msra.mxu0 0
    %361 = vmatprep.subr.bf16.mxu0 0
    %362 = vmatpush1.bf16.msra.mxu0 0
    %363 = vmatprep.subr.bf16.mxu0 0
    %364 = vmatpush1.bf16.msra.mxu0 0
    %365 = vmatprep.subr.bf16.mxu0 0
    %366 = vmatpush1.bf16.msra.mxu0 0
    %367 = vmatprep.subr.bf16.mxu0 0
    %368 = vmatpush1.bf16.msra.mxu0 0
    %369 = vmatprep.subr.bf16.mxu0 0
    %370 = vmatpush1.bf16.msra.mxu0 0
    %371 = vmatprep.subr.bf16.mxu0 0
    %372 = vmatpush1.bf16.msra.mxu0 0
    %373 = vmatprep.mubr.bf16.mxu0 0
    %374 = vmatmul.mubr.bf16.gmra.mrb[0].mxu0 %v339
    %v375 = vpop.f32.mrb[0].mxu0
    %v376 = vadd.f32 0.0, %v375
    %v377 = vpop.f32.mrb[0].mxu0
    %v378 = vpop.f32.mrb[0].mxu0
    %v379 = vpop.f32.mrb[0].mxu0
    %380 = vdwg.mxu0
    %v381 = vmul.f32 %v376, 5.656854
    %v382 = vld [vmem:[%s3] sm:$0xff]
    %v383 = vadd.f32 %v381, %v382
    %v384 = vld [vmem:[%s9] sm:$0xff]
    %v385 = vld [vmem:[%s9 + $0x8] sm:$0xff]
    %v386 = vld [vmem:[%s9 + $0x10] sm:$0xff]
    %v387 = vld [vmem:[%s9 + $0x18] sm:$0xff]
    %v388 = vpack.c.bf16 %v383, %v383
    %v389 = vpack.c.bf16 %v385, %v384
    %v390 = vpack.c.bf16 %v387, %v386
    %v391 = vld [vmem:[%s11] sm:$0x1]
    %v393 = vlaneseq
    %v394 = vshrl.u32 %v393, 7
    %v395 = vsub.s32 0, %v394
    %v396 = vrot.slane %v391, %v395
    %vm398 = vcmask 261120
    %v400 = vsel %vm398, %v388, 0
    %402 = vmatprep.subr.bf16.mxu0 0
    %403 = vmatpush1.bf16.msra.mxu0 %v389
    %404 = vmatprep.subr.bf16.mxu0 0
    %405 = vmatpush1.bf16.msra.mxu0 %v390
    %406 = vmatprep.subr.bf16.mxu0 0
    %407 = vmatpush1.bf16.msra.mxu0 0
    %408 = vmatprep.subr.bf16.mxu0 0
    %409 = vmatpush1.bf16.msra.mxu0 0
    %410 = vmatprep.subr.bf16.mxu0 0
    %411 = vmatpush1.bf16.msra.mxu0 0
    %412 = vmatprep.subr.bf16.mxu0 0
    %413 = vmatpush1.bf16.msra.mxu0 0
    %414 = vmatprep.subr.bf16.mxu0 0
    %415 = vmatpush1.bf16.msra.mxu0 0
    %416 = vmatprep.subr.bf16.mxu0 0
    %417 = vmatpush1.bf16.msra.mxu0 0
    %418 = vmatprep.subr.bf16.mxu0 0
    %419 = vmatpush1.bf16.msra.mxu0 0
    %420 = vmatprep.subr.bf16.mxu0 0
    %421 = vmatpush1.bf16.msra.mxu0 0
    %422 = vmatprep.subr.bf16.mxu0 0
    %423 = vmatpush1.bf16.msra.mxu0 0
    %424 = vmatprep.subr.bf16.mxu0 0
    %425 = vmatpush1.bf16.msra.mxu0 0
    %426 = vmatprep.subr.bf16.mxu0 0
    %427 = vmatpush1.bf16.msra.mxu0 0
    %428 = vmatprep.subr.bf16.mxu0 0
    %429 = vmatpush1.bf16.msra.mxu0 0
    %430 = vmatprep.subr.bf16.mxu0 0
    %431 = vmatpush1.bf16.msra.mxu0 0
    %432 = vmatprep.subr.bf16.mxu0 0
    %433 = vmatpush1.bf16.msra.mxu0 0
    %434 = vmatprep.mubr.bf16.mxu0 0
    %435 = vmatmul.mubr.bf16.gmra.mrb[0].mxu0 %v400
    %v436 = vpop.f32.mrb[0].mxu0
    %v437 = vadd.f32 %v396, %v436
    %v438 = vpop.f32.mrb[0].mxu0
    %v439 = vpop.f32.mrb[0].mxu0
    %v440 = vpop.f32.mrb[0].mxu0
    %441 = vdwg.mxu0
    %v442 = vld [vmem:[%s13] sm:$0xff]
    %v443 = vld [vmem:[%s13 + $0x8] sm:$0xff]
    %v444 = vld [vmem:[%s13 + $0x10] sm:$0xff]
    %v445 = vld [vmem:[%s13 + $0x18] sm:$0xff]
    %v446 = vld [vmem:[%s15] sm:$0x1]
    %v447 = vpack.c.bf16 %v437, %v437
    %449 = vrot.lane.b32.xlu0 %v447, 96
    %v450 = vpop.permute.xlu0 %449
    %v452 = vsel %vm337, %v447, 0
    %v455 = vsel %vm337, %v450, 0
    %457 = vmatprep.subr.bf16.mxu0 0
    %458 = vmatpush1.bf16.xpose.msra.mxu0 %v455
    %459 = vmatprep.subr.bf16.mxu0 0
    %460 = vmatpush1.bf16.xpose.msra.mxu0 0
    %461 = vmatprep.subr.bf16.mxu0 0
    %462 = vmatpush1.bf16.xpose.msra.mxu0 0
    %463 = vmatprep.subr.bf16.mxu0 0
    %464 = vmatpush1.bf16.xpose.msra.mxu0 0
    %465 = vmatprep.subr.bf16.mxu0 0
    %466 = vmatpush1.bf16.xpose.msra.mxu0 0
    %467 = vmatprep.subr.bf16.mxu0 0
    %468 = vmatpush1.bf16.xpose.msra.mxu0 0
    %469 = vmatprep.subr.bf16.mxu0 0
    %470 = vmatpush1.bf16.xpose.msra.mxu0 0
    %471 = vmatprep.subr.bf16.mxu0 0
    %472 = vmatpush1.bf16.xpose.msra.mxu0 0
    %473 = vmatprep.subr.bf16.mxu0 0
    %474 = vmatpush1.bf16.xpose.msra.mxu0 0
    %475 = vmatprep.subr.bf16.mxu0 0
    %476 = vmatpush1.bf16.xpose.msra.mxu0 0
    %477 = vmatprep.subr.bf16.mxu0 0
    %478 = vmatpush1.bf16.xpose.msra.mxu0 0
    %479 = vmatprep.subr.bf16.mxu0 0
    %480 = vmatpush1.bf16.xpose.msra.mxu0 0
    %481 = vmatprep.subr.bf16.mxu0 0
    %482 = vmatpush1.bf16.xpose.msra.mxu0 0
    %483 = vmatprep.subr.bf16.mxu0 0
    %484 = vmatpush1.bf16.xpose.msra.mxu0 0
    %485 = vmatprep.subr.bf16.mxu0 0
    %486 = vmatpush1.bf16.xpose.msra.mxu0 0
    %487 = vmatprep.subr.bf16.mxu0 0
    %488 = vmatpush1.bf16.xpose.msra.mxu0 0
    %489 = vmatprep.mubr.bf16.mxu0 0
    %490 = vmatmul.mubr.bf16.gmra.mrb[0].mxu0 %v452
    %v491 = vpop.f32.mrb[0].mxu0
    %v492 = vadd.f32 0.0, %v491
    %v493 = vpop.f32.mrb[0].mxu0
    %v494 = vpop.f32.mrb[0].mxu0
    %v495 = vpop.f32.mrb[0].mxu0
    %496 = vdwg.mxu0
    %v497 = vmul.f32 %v492, 0.25
    %vm498 = vcmask 64512
    %v499 = vsel %vm498, %v497, -inf
    %500 = vmax.xlane.f32.xlu0 %v499
    %v501 = vpop.xlane.xlu0 %500
    %v502 = vsub.f32 %v497, %v501
    %v503 = vmul.f32 %v502, 1.442695
    %v504 = vpow.pop %v503
    %v505 = vsel %vm498, %v504, 0.0
    %506 = vadd.xlane.f32.xlu0 %v505
    %v507 = vpop.xlane.xlu0 %506
    %v508 = vrcp.pop %v507
    %v509 = vmul.f32 %v504, %v508
    %v510 = vpack.c.bf16 %v509, %v509
    %511 = vrot.lane.b32.xlu0 %v447, 64
    %v512 = vpop.permute.xlu0 %511
    %v514 = vsel %vm498, %v510, 0
    %vm516 = vcmask 1043456
    %v518 = vsel %vm516, %v512, 0
    %520 = vmatprep.subr.bf16.mxu0 0
    %521 = vmatpush1.bf16.msra.mxu0 %v518
    %522 = vmatprep.subr.bf16.mxu0 0
    %523 = vmatpush1.bf16.msra.mxu0 0
    %524 = vmatprep.subr.bf16.mxu0 0
    %525 = vmatpush1.bf16.msra.mxu0 0
    %526 = vmatprep.subr.bf16.mxu0 0
    %527 = vmatpush1.bf16.msra.mxu0 0
    %528 = vmatprep.subr.bf16.mxu0 0
    %529 = vmatpush1.bf16.msra.mxu0 0
    %530 = vmatprep.subr.bf16.mxu0 0
    %531 = vmatpush1.bf16.msra.mxu0 0
    %532 = vmatprep.subr.bf16.mxu0 0
    %533 = vmatpush1.bf16.msra.mxu0 0
    %534 = vmatprep.subr.bf16.mxu0 0
    %535 = vmatpush1.bf16.msra.mxu0 0
    %536 = vmatprep.subr.bf16.mxu0 0
    %537 = vmatpush1.bf16.msra.mxu0 0
    %538 = vmatprep.subr.bf16.mxu0 0
    %539 = vmatpush1.bf16.msra.mxu0 0
    %540 = vmatprep.subr.bf16.mxu0 0
    %541 = vmatpush1.bf16.msra.mxu0 0
    %542 = vmatprep.subr.bf16.mxu0 0
    %543 = vmatpush1.bf16.msra.mxu0 0
    %544 = vmatprep.subr.bf16.mxu0 0
    %545 = vmatpush1.bf16.msra.mxu0 0
    %546 = vmatprep.subr.bf16.mxu0 0
    %547 = vmatpush1.bf16.msra.mxu0 0
    %548 = vmatprep.subr.bf16.mxu0 0
    %549 = vmatpush1.bf16.msra.mxu0 0
    %550 = vmatprep.subr.bf16.mxu0 0
    %551 = vmatpush1.bf16.msra.mxu0 0
    %552 = vmatprep.mubr.bf16.mxu0 0
    %553 = vmatmul.mubr.bf16.gmra.mrb[0].mxu0 %v514
    %v554 = vpop.f32.mrb[0].mxu0
    %v555 = vadd.f32 0.0, %v554
    %v556 = vpop.f32.mrb[0].mxu0
    %v557 = vpop.f32.mrb[0].mxu0
    %v558 = vpop.f32.mrb[0].mxu0
    %559 = vdwg.mxu0
    %v560 = vpack.c.bf16 %v555, %v555
    %v561 = vpack.c.bf16 %v443, %v442
    %562 = vrot.lane.b32.xlu0 %v447, 112
    %v563 = vpop.permute.xlu0 %562
    %564 = vrot.lane.b32.xlu0 %v447, 80
    %v565 = vpop.permute.xlu0 %564
    %v567 = vsel %vm337, %v563, 0
    %v570 = vsel %vm337, %v565, 0
    %572 = vmatprep.subr.bf16.mxu0 0
    %573 = vmatpush1.bf16.xpose.msra.mxu0 %v570
    %574 = vmatprep.subr.bf16.mxu0 0
    %575 = vmatpush1.bf16.xpose.msra.mxu0 0
    %576 = vmatprep.subr.bf16.mxu0 0
    %577 = vmatpush1.bf16.xpose.msra.mxu0 0
    %578 = vmatprep.subr.bf16.mxu0 0
    %579 = vmatpush1.bf16.xpose.msra.mxu0 0
    %580 = vmatprep.subr.bf16.mxu0 0
    %581 = vmatpush1.bf16.xpose.msra.mxu0 0
    %582 = vmatprep.subr.bf16.mxu0 0
    %583 = vmatpush1.bf16.xpose.msra.mxu0 0
    %584 = vmatprep.subr.bf16.mxu0 0
    %585 = vmatpush1.bf16.xpose.msra.mxu0 0
    %586 = vmatprep.subr.bf16.mxu0 0
    %587 = vmatpush1.bf16.xpose.msra.mxu0 0
    %588 = vmatprep.subr.bf16.mxu0 0
    %589 = vmatpush1.bf16.xpose.msra.mxu0 0
    %590 = vmatprep.subr.bf16.mxu0 0
    %591 = vmatpush1.bf16.xpose.msra.mxu0 0
    %592 = vmatprep.subr.bf16.mxu0 0
    %593 = vmatpush1.bf16.xpose.msra.mxu0 0
    %594 = vmatprep.subr.bf16.mxu0 0
    %595 = vmatpush1.bf16.xpose.msra.mxu0 0
    %596 = vmatprep.subr.bf16.mxu0 0
    %597 = vmatpush1.bf16.xpose.msra.mxu0 0
    %598 = vmatprep.subr.bf16.mxu0 0
    %599 = vmatpush1.bf16.xpose.msra.mxu0 0
    %600 = vmatprep.subr.bf16.mxu0 0
    %601 = vmatpush1.bf16.xpose.msra.mxu0 0
    %602 = vmatprep.subr.bf16.mxu0 0
    %603 = vmatpush1.bf16.xpose.msra.mxu0 0
    %604 = vmatprep.mubr.bf16.mxu0 0
    %605 = vmatmul.mubr.bf16.gmra.mrb[0].mxu0 %v567
    %v606 = vpop.f32.mrb[0].mxu0
    %v607 = vadd.f32 0.0, %v606
    %v608 = vpop.f32.mrb[0].mxu0
    %v609 = vpop.f32.mrb[0].mxu0
    %v610 = vpop.f32.mrb[0].mxu0
    %611 = vdwg.mxu0
    %v612 = vmul.f32 %v607, 0.25
    %v613 = vsel %vm498, %v612, -inf
    %614 = vmax.xlane.f32.xlu0 %v613
    %v615 = vpop.xlane.xlu0 %614
    %v616 = vsub.f32 %v612, %v615
    %v617 = vmul.f32 %v616, 1.442695
    %v618 = vpow.pop %v617
    %v619 = vsel %vm498, %v618, 0.0
    %620 = vadd.xlane.f32.xlu0 %v619
    %v621 = vpop.xlane.xlu0 %620
    %v622 = vrcp.pop %v621
    %v623 = vmul.f32 %v618, %v622
    %v624 = vpack.c.bf16 %v623, %v623
    %625 = vrot.lane.b32.xlu0 %v447, 48
    %v626 = vpop.permute.xlu0 %625
    %v628 = vsel %vm498, %v624, 0
    %v631 = vsel %vm516, %v626, 0
    %633 = vmatprep.subr.bf16.mxu0 0
    %634 = vmatpush1.bf16.msra.mxu0 %v631
    %635 = vmatprep.subr.bf16.mxu0 0
    %636 = vmatpush1.bf16.msra.mxu0 0
    %637 = vmatprep.subr.bf16.mxu0 0
    %638 = vmatpush1.bf16.msra.mxu0 0
    %639 = vmatprep.subr.bf16.mxu0 0
    %640 = vmatpush1.bf16.msra.mxu0 0
    %641 = vmatprep.subr.bf16.mxu0 0
    %642 = vmatpush1.bf16.msra.mxu0 0
    %643 = vmatprep.subr.bf16.mxu0 0
    %644 = vmatpush1.bf16.msra.mxu0 0
    %645 = vmatprep.subr.bf16.mxu0 0
    %646 = vmatpush1.bf16.msra.mxu0 0
    %647 = vmatprep.subr.bf16.mxu0 0
    %648 = vmatpush1.bf16.msra.mxu0 0
    %649 = vmatprep.subr.bf16.mxu0 0
    %650 = vmatpush1.bf16.msra.mxu0 0
    %651 = vmatprep.subr.bf16.mxu0 0
    %652 = vmatpush1.bf16.msra.mxu0 0
    %653 = vmatprep.subr.bf16.mxu0 0
    %654 = vmatpush1.bf16.msra.mxu0 0
    %655 = vmatprep.subr.bf16.mxu0 0
    %656 = vmatpush1.bf16.msra.mxu0 0
    %657 = vmatprep.subr.bf16.mxu0 0
    %658 = vmatpush1.bf16.msra.mxu0 0
    %659 = vmatprep.subr.bf16.mxu0 0
    %660 = vmatpush1.bf16.msra.mxu0 0
    %661 = vmatprep.subr.bf16.mxu0 0
    %662 = vmatpush1.bf16.msra.mxu0 0
    %663 = vmatprep.subr.bf16.mxu0 0
    %664 = vmatpush1.bf16.msra.mxu0 0
    %665 = vmatprep.mubr.bf16.mxu0 0
    %666 = vmatmul.mubr.bf16.gmra.mrb[0].mxu0 %v628
    %v667 = vpop.f32.mrb[0].mxu0
    %v668 = vadd.f32 0.0, %v667
    %v669 = vpop.f32.mrb[0].mxu0
    %v670 = vpop.f32.mrb[0].mxu0
    %v671 = vpop.f32.mrb[0].mxu0
    %672 = vdwg.mxu0
    %v673 = vpack.c.bf16 %v668, %v668
    %v674 = vpack.c.bf16 %v445, %v444
    %v676 = vsel %vm337, %v673, 0
    %678 = vmatprep.subr.bf16.mxu0 0
    %679 = vmatpush1.bf16.msra.mxu0 %v674
    %680 = vmatprep.subr.bf16.mxu0 0
    %681 = vmatpush1.bf16.msra.mxu0 0
    %682 = vmatprep.subr.bf16.mxu0 0
    %683 = vmatpush1.bf16.msra.mxu0 0
    %684 = vmatprep.subr.bf16.mxu0 0
    %685 = vmatpush1.bf16.msra.mxu0 0
    %686 = vmatprep.subr.bf16.mxu0 0
    %687 = vmatpush1.bf16.msra.mxu0 0
    %688 = vmatprep.subr.bf16.mxu0 0
    %689 = vmatpush1.bf16.msra.mxu0 0
    %690 = vmatprep.subr.bf16.mxu0 0
    %691 = vmatpush1.bf16.msra.mxu0 0
    %692 = vmatprep.subr.bf16.mxu0 0
    %693 = vmatpush1.bf16.msra.mxu0 0
    %694 = vmatprep.subr.bf16.mxu0 0
    %695 = vmatpush1.bf16.msra.mxu0 0
    %696 = vmatprep.subr.bf16.mxu0 0
    %697 = vmatpush1.bf16.msra.mxu0 0
    %698 = vmatprep.subr.bf16.mxu0 0
    %699 = vmatpush1.bf16.msra.mxu0 0
    %700 = vmatprep.subr.bf16.mxu0 0
    %701 = vmatpush1.bf16.msra.mxu0 0
    %702 = vmatprep.subr.bf16.mxu0 0
    %703 = vmatpush1.bf16.msra.mxu0 0
    %704 = vmatprep.subr.bf16.mxu0 0
    %705 = vmatpush1.bf16.msra.mxu0 0
    %706 = vmatprep.subr.bf16.mxu0 0
    %707 = vmatpush1.bf16.msra.mxu0 0
    %708 = vmatprep.subr.bf16.mxu0 0
    %709 = vmatpush1.bf16.msra.mxu0 0
    %710 = vmatprep.mubr.bf16.mxu0 0
    %711 = vmatmul.mubr.bf16.gmra.mrb[0].mxu0 %v676
    %v712 = vpop.f32.mrb[0].mxu0
    %v713 = vadd.f32 0.0, %v712
    %v714 = vpop.f32.mrb[0].mxu0
    %v715 = vpop.f32.mrb[0].mxu0
    %v716 = vpop.f32.mrb[0].mxu0
    %717 = vdwg.mxu0
    %v719 = vsel %vm337, %v560, 0
    %721 = vmatprep.subr.bf16.mxu0 0
    %722 = vmatpush1.bf16.msra.mxu0 %v561
    %723 = vmatprep.subr.bf16.mxu0 0
    %724 = vmatpush1.bf16.msra.mxu0 0
    %725 = vmatprep.subr.bf16.mxu0 0
    %726 = vmatpush1.bf16.msra.mxu0 0
    %727 = vmatprep.subr.bf16.mxu0 0
    %728 = vmatpush1.bf16.msra.mxu0 0
    %729 = vmatprep.subr.bf16.mxu0 0
    %730 = vmatpush1.bf16.msra.mxu0 0
    %731 = vmatprep.subr.bf16.mxu0 0
    %732 = vmatpush1.bf16.msra.mxu0 0
    %733 = vmatprep.subr.bf16.mxu0 0
    %734 = vmatpush1.bf16.msra.mxu0 0
    %735 = vmatprep.subr.bf16.mxu0 0
    %736 = vmatpush1.bf16.msra.mxu0 0
    %737 = vmatprep.subr.bf16.mxu0 0
    %738 = vmatpush1.bf16.msra.mxu0 0
    %739 = vmatprep.subr.bf16.mxu0 0
    %740 = vmatpush1.bf16.msra.mxu0 0
    %741 = vmatprep.subr.bf16.mxu0 0
    %742 = vmatpush1.bf16.msra.mxu0 0
    %743 = vmatprep.subr.bf16.mxu0 0
    %744 = vmatpush1.bf16.msra.mxu0 0
    %745 = vmatprep.subr.bf16.mxu0 0
    %746 = vmatpush1.bf16.msra.mxu0 0
    %747 = vmatprep.subr.bf16.mxu0 0
    %748 = vmatpush1.bf16.msra.mxu0 0
    %749 = vmatprep.subr.bf16.mxu0 0
    %750 = vmatpush1.bf16.msra.mxu0 0
    %751 = vmatprep.subr.bf16.mxu0 0
    %752 = vmatpush1.bf16.msra.mxu0 0
    %753 = vmatprep.mubr.bf16.mxu0 0
    %754 = vmatmul.mubr.bf16.gmra.mrb[0].mxu0 %v719
    %v755 = vpop.f32.mrb[0].mxu0
    %v756 = vadd.f32 %v713, %v755
    %v757 = vpop.f32.mrb[0].mxu0
    %v758 = vpop.f32.mrb[0].mxu0
    %v759 = vpop.f32.mrb[0].mxu0
    %760 = vdwg.mxu0
    %v762 = vlaneseq
    %v763 = vshrl.u32 %v762, 7
    %v764 = vsub.s32 0, %v763
    %v765 = vrot.slane %v446, %v764
    %v767 = vadd.f32 %v756, %v765
    %v768 = vadd.f32 %v383, %v767
    %v769 = vld [vmem:[%s17] sm:$0x1]
    %v770 = vld [vmem:[%s19] sm:$0x1]
    %v771 = vsel %vm398, %v768, 0.0
    %772 = vadd.xlane.f32.xlu0 %v771
    %v773 = vpop.xlane.xlu0 %772
    %v774 = vrcp.pop 32.0
    %v775 = vmul.f32 %v773, %v774
    %v776 = vsub.f32 %v768, %v775
    %v777 = vmul.f32 %v776, %v776
    %v778 = vsel %vm398, %v777, 0.0
    %779 = vadd.xlane.f32.xlu0 %v778
    %v780 = vpop.xlane.xlu0 %779
    %v781 = vmul.f32 %v780, %v774
    %v782 = vadd.f32 %v781, 1e-05
    %v783 = vrsqrt.pop %v782
    %v784 = vmul.f32 %v776, %v783
    %v786 = vlaneseq
    %v787 = vshrl.u32 %v786, 7
    %v788 = vsub.s32 0, %v787
    %v789 = vrot.slane %v769, %v788
    %v791 = vmul.f32 %v784, %v789
    %v793 = vlaneseq
    %v794 = vshrl.u32 %v793, 7
    %v795 = vsub.s32 0, %v794
    %v796 = vrot.slane %v770, %v795
    %v798 = vadd.f32 %v791, %v796
    %v799 = vld [vmem:[#allocation4] sm:$0xff]
    %v800 = vld [vmem:[#allocation4 + $0x8] sm:$0xff]
    %v801 = vld [vmem:[#allocation4 + $0x10] sm:$0xff]
    %v802 = vld [vmem:[#allocation4 + $0x18] sm:$0xff]
    %v803 = vpack.c.bf16 %v798, %v798
    %v804 = vpack.c.bf16 %v800, %v799
    %v805 = vpack.c.bf16 %v802, %v801
    %v806 = vld [vmem:[%s23] sm:$0x1]
    %v808 = vlaneseq
    %v809 = vshrl.u32 %v808, 7
    %v810 = vsub.s32 0, %v809
    %v811 = vrot.slane %v806, %v810
    %v814 = vsel %vm398, %v803, 0
    %816 = vmatprep.subr.bf16.mxu0 0
    %817 = vmatpush1.bf16.msra.mxu0 %v804
    %818 = vmatprep.subr.bf16.mxu0 0
    %819 = vmatpush1.bf16.msra.mxu0 %v805
    %820 = vmatprep.subr.bf16.mxu0 0
    %821 = vmatpush1.bf16.msra.mxu0 0
    %822 = vmatprep.subr.bf16.mxu0 0
    %823 = vmatpush1.bf16.msra.mxu0 0
    %824 = vmatprep.subr.bf16.mxu0 0
    %825 = vmatpush1.bf16.msra.mxu0 0
    %826 = vmatprep.subr.bf16.mxu0 0
    %827 = vmatpush1.bf16.msra.mxu0 0
    %828 = vmatprep.subr.bf16.mxu0 0
    %829 = vmatpush1.bf16.msra.mxu0 0
    %830 = vmatprep.subr.bf16.mxu0 0
    %831 = vmatpush1.bf16.msra.mxu0 0
    %832 = vmatprep.subr.bf16.mxu0 0
    %833 = vmatpush1.bf16.msra.mxu0 0
    %834 = vmatprep.subr.bf16.mxu0 0
    %835 = vmatpush1.bf16.msra.mxu0 0
    %836 = vmatprep.subr.bf16.mxu0 0
    %837 = vmatpush1.bf16.msra.mxu0 0
    %838 = vmatprep.subr.bf16.mxu0 0
    %839 = vmatpush1.bf16.msra.mxu0 0
    %840 = vmatprep.subr.bf16.mxu0 0
    %841 = vmatpush1.bf16.msra.mxu0 0
    %842 = vmatprep.subr.bf16.mxu0 0
    %843 = vmatpush1.bf16.msra.mxu0 0
    %844 = vmatprep.subr.bf16.mxu0 0
    %845 = vmatpush1.bf16.msra.mxu0 0
    %846 = vmatprep.subr.bf16.mxu0 0
    %847 = vmatpush1.bf16.msra.mxu0 0
    %848 = vmatprep.mubr.bf16.mxu0 0
    %849 = vmatmul.mubr.bf16.gmra.mrb[0].mxu0 %v814
    %v850 = vpop.f32.mrb[0].mxu0
    %v851 = vadd.f32 %v811, %v850
    %v852 = vpop.f32.mrb[0].mxu0
    %v853 = vpop.f32.mrb[0].mxu0
    %v854 = vpop.f32.mrb[0].mxu0
    %855 = vdwg.mxu0
    %v856 = vmax.f32 %v851, 0.0
    %v857 = vld [vmem:[%s25] sm:$0xff]
    %v858 = vld [vmem:[%s25 + $0x8] sm:$0xff]
    %v859 = vld [vmem:[%s25 + $0x10] sm:$0xff]
    %v860 = vld [vmem:[%s25 + $0x18] sm:$0xff]
    %v861 = vld [vmem:[%s25 + $0x20] sm:$0xff]
    %v862 = vld [vmem:[%s25 + $0x28] sm:$0xff]
    %v863 = vld [vmem:[%s25 + $0x30] sm:$0xff]
    %v864 = vld [vmem:[%s25 + $0x38] sm:$0xff]
    %v865 = vpack.c.bf16 %v856, %v856
    %v866 = vpack.c.bf16 %v858, %v857
    %v867 = vpack.c.bf16 %v860, %v859
    %v868 = vpack.c.bf16 %v862, %v861
    %v869 = vpack.c.bf16 %v864, %v863
    %v870 = vld [vmem:[%s27] sm:$0x1]
    %v872 = vlaneseq
    %v873 = vshrl.u32 %v872, 7
    %v874 = vsub.s32 0, %v873
    %v875 = vrot.slane %v870, %v874
    %vm877 = vcmask 523264
    %v879 = vsel %vm877, %v865, 0
    %881 = vmatprep.subr.bf16.mxu0 0
    %882 = vmatpush1.bf16.msra.mxu0 %v866
    %883 = vmatprep.subr.bf16.mxu0 0
    %884 = vmatpush1.bf16.msra.mxu0 %v867
    %885 = vmatprep.subr.bf16.mxu0 0
    %886 = vmatpush1.bf16.msra.mxu0 %v868
    %887 = vmatprep.subr.bf16.mxu0 0
    %888 = vmatpush1.bf16.msra.mxu0 %v869
    %889 = vmatprep.subr.bf16.mxu0 0
    %890 = vmatpush1.bf16.msra.mxu0 0
    %891 = vmatprep.subr.bf16.mxu0 0
    %892 = vmatpush1.bf16.msra.mxu0 0
    %893 = vmatprep.subr.bf16.mxu0 0
    %894 = vmatpush1.bf16.msra.mxu0 0
    %895 = vmatprep.subr.bf16.mxu0 0
    %896 = vmatpush1.bf16.msra.mxu0 0
    %897 = vmatprep.subr.bf16.mxu0 0
    %898 = vmatpush1.bf16.msra.mxu0 0
    %899 = vmatprep.subr.bf16.mxu0 0
    %900 = vmatpush1.bf16.msra.mxu0 0
    %901 = vmatprep.subr.bf16.mxu0 0
    %902 = vmatpush1.bf16.msra.mxu0 0
    %903 = vmatprep.subr.bf16.mxu0 0
    %904 = vmatpush1.bf16.msra.mxu0 0
    %905 = vmatprep.subr.bf16.mxu0 0
    %906 = vmatpush1.bf16.msra.mxu0 0
    %907 = vmatprep.subr.bf16.mxu0 0
    %908 = vmatpush1.bf16.msra.mxu0 0
    %909 = vmatprep.subr.bf16.mxu0 0
    %910 = vmatpush1.bf16.msra.mxu0 0
    %911 = vmatprep.subr.bf16.mxu0 0
    %912 = vmatpush1.bf16.msra.mxu0 0
    %913 = vmatprep.mubr.bf16.mxu0 0
    %914 = vmatmul.mubr.bf16.gmra.mrb[0].mxu0 %v879
    %v915 = vpop.f32.mrb[0].mxu0
    %v916 = vadd.f32 %v875, %v915
    %v917 = vpop.f32.mrb[0].mxu0
    %v918 = vpop.f32.mrb[0].mxu0
    %v919 = vpop.f32.mrb[0].mxu0
    %920 = vdwg.mxu0
    %v921 = vadd.f32 %v798, %v916
    %v922 = vld [vmem:[%s29] sm:$0x1]
    %v923 = vld [vmem:[%s31] sm:$0x1]
    %v924 = vsel %vm398, %v921, 0.0
    %925 = vadd.xlane.f32.xlu0 %v924
    %v926 = vpop.xlane.xlu0 %925
    %v927 = vmul.f32 %v926, %v774
    %v928 = vsub.f32 %v921, %v927
    %v929 = vmul.f32 %v928, %v928
    %v930 = vsel %vm398, %v929, 0.0
    %931 = vadd.xlane.f32.xlu0 %v930
    %v932 = vpop.xlane.xlu0 %931
    %v933 = vmul.f32 %v932, %v774
    %v934 = vadd.f32 %v933, 1e-05
    %v935 = vrsqrt.pop %v934
    %v936 = vmul.f32 %v928, %v935
    %v938 = vlaneseq
    %v939 = vshrl.u32 %v938, 7
    %v940 = vsub.s32 0, %v939
    %v941 = vrot.slane %v922, %v940
    %v943 = vmul.f32 %v936, %v941
    %v945 = vlaneseq
    %v946 = vshrl.u32 %v945, 7
    %v947 = vsub.s32 0, %v946
    %v948 = vrot.slane %v923, %v947
    %v950 = vadd.f32 %v943, %v948
    %v951 = vld [vmem:[#allocation13] sm:$0xff]
    %v952 = vld [vmem:[#allocation13 + $0x8] sm:$0xff]
    %v953 = vld [vmem:[#allocation13 + $0x10] sm:$0xff]
    %v954 = vld [vmem:[#allocation13 + $0x18] sm:$0xff]
    %v955 = vpack.c.bf16 %v950, %v950
    %v956 = vpack.c.bf16 %v952, %v951
    %v957 = vpack.c.bf16 %v954, %v953
    %v958 = vld [vmem:[%s55] sm:$0x1]
    %v960 = vlaneseq
    %v961 = vshrl.u32 %v960, 7
    %v962 = vsub.s32 0, %v961
    %v963 = vrot.slane %v958, %v962
    %v966 = vsel %vm398, %v955, 0
    %968 = vmatprep.subr.bf16.mxu0 0
    %969 = vmatpush1.bf16.msra.mxu0 %v956
    %970 = vmatprep.subr.bf16.mxu0 0
    %971 = vmatpush1.bf16.msra.mxu0 %v957
    %972 = vmatprep.subr.bf16.mxu0 0
    %973 = vmatpush1.bf16.msra.mxu0 0
    %974 = vmatprep.subr.bf16.mxu0 0
    %975 = vmatpush1.bf16.msra.mxu0 0
    %976 = vmatprep.subr.bf16.mxu0 0
    %977 = vmatpush1.bf16.msra.mxu0 0
    %978 = vmatprep.subr.bf16.mxu0 0
    %979 = vmatpush1.bf16.msra.mxu0 0
    %980 = vmatprep.subr.bf16.mxu0 0
    %981 = vmatpush1.bf16.msra.mxu0 0
    %982 = vmatprep.subr.bf16.mxu0 0
    %983 = vmatpush1.bf16.msra.mxu0 0
    %984 = vmatprep.subr.bf16.mxu0 0
    %985 = vmatpush1.bf16.msra.mxu0 0
    %986 = vmatprep.subr.bf16.mxu0 0
    %987 = vmatpush1.bf16.msra.mxu0 0
    %988 = vmatprep.subr.bf16.mxu0 0
    %989 = vmatpush1.bf16.msra.mxu0 0
    %990 = vmatprep.subr.bf16.mxu0 0
    %991 = vmatpush1.bf16.msra.mxu0 0
    %992 = vmatprep.subr.bf16.mxu0 0
    %993 = vmatpush1.bf16.msra.mxu0 0
    %994 = vmatprep.subr.bf16.mxu0 0
    %995 = vmatpush1.bf16.msra.mxu0 0
    %996 = vmatprep.subr.bf16.mxu0 0
    %997 = vmatpush1.bf16.msra.mxu0 0
    %998 = vmatprep.subr.bf16.mxu0 0
    %999 = vmatpush1.bf16.msra.mxu0 0
    %1000 = vmatprep.mubr.bf16.mxu0 0
    %1001 = vmatmul.mubr.bf16.gmra.mrb[0].mxu0 %v966
    %v1002 = vpop.f32.mrb[0].mxu0
    %v1003 = vadd.f32 %v963, %v1002
    %v1004 = vpop.f32.mrb[0].mxu0
    %v1005 = vpop.f32.mrb[0].mxu0
    %v1006 = vpop.f32.mrb[0].mxu0
    %1007 = vdwg.mxu0
    %v1008 = vld [vmem:[%s5] sm:$0xff]
    %v1009 = vld [vmem:[%s5 + $0x8] sm:$0x1]
    %v1010 = vld [vmem:[#allocation7] sm:$0xff]
    %v1011 = vld [vmem:[%s35] sm:$0x1]
    %v1012 = vld [vmem:[#allocation9] sm:$0xff]
    %v1013 = vld [vmem:[#allocation9 + $0x8] sm:$0xff]
    %v1014 = vld [vmem:[#allocation9 + $0x10] sm:$0xff]
    %v1015 = vld [vmem:[#allocation9 + $0x18] sm:$0xff]
    %v1016 = vld [vmem:[%s39] sm:$0x1]
    %v1017 = vld [vmem:[#allocation10] sm:$0xff]
    %v1018 = vld [vmem:[#allocation10 + $0x8] sm:$0xff]
    %v1019 = vld [vmem:[#allocation10 + $0x10] sm:$0xff]
    %v1020 = vld [vmem:[#allocation10 + $0x18] sm:$0xff]
    %v1021 = vld [vmem:[%s43] sm:$0x1]
    %v1022 = vld [vmem:[%s45] sm:$0x1]
    %v1023 = vld [vmem:[%s47] sm:$0x1]
    %v1024 = vld [vmem:[#allocation12] sm:$0xff]
    %v1025 = vld [vmem:[#allocation12 + $0x8] sm:$0xff]
    %v1026 = vld [vmem:[#allocation12 + $0x10] sm:$0xff]
    %v1027 = vld [vmem:[#allocation12 + $0x18] sm:$0xff]
    %v1028 = vld [vmem:[%s51] sm:$0x1]
    %v1029 = vld [vmem:[#allocation15] sm:$0xff]
    %v1030 = vld [vmem:[#allocation15 + $0x8] sm:$0xff]
    %v1031 = vld [vmem:[#allocation15 + $0x10] sm:$0xff]
    %v1032 = vld [vmem:[#allocation15 + $0x18] sm:$0xff]
    %v1033 = vld [vmem:[%s59] sm:$0x1]
    %v1034 = vld [vmem:[%s61] sm:$0x1]
    %v1035 = vld [vmem:[%s63] sm:$0x1]
    %v1036 = vld [vmem:[#allocation16] sm:$0xff]
    %v1037 = vld [vmem:[#allocation16 + $0x8] sm:$0xff]
    %v1038 = vld [vmem:[#allocation16 + $0x10] sm:$0xff]
    %v1039 = vld [vmem:[#allocation16 + $0x18] sm:$0xff]
    %v1040 = vld [vmem:[%s67] sm:$0x1]
    %v1041 = vld [vmem:[%s69] sm:$0xff]
    %v1042 = vld [vmem:[%s69 + $0x8] sm:$0xff]
    %v1043 = vld [vmem:[%s69 + $0x10] sm:$0xff]
    %v1044 = vld [vmem:[%s69 + $0x18] sm:$0xff]
    %v1045 = vld [vmem:[%s69 + $0x20] sm:$0xff]
    %v1046 = vld [vmem:[%s69 + $0x28] sm:$0xff]
    %v1047 = vld [vmem:[%s69 + $0x30] sm:$0xff]
    %v1048 = vld [vmem:[%s69 + $0x38] sm:$0xff]
    %v1049 = vld [vmem:[%s71] sm:$0x1]
    %v1050 = vld [vmem:[%s73] sm:$0x1]
    %v1051 = vld [vmem:[%s75] sm:$0x1]
    %v1052 = vld [vmem:[#allocation18] sm:$0xff]
    %v1053 = vld [vmem:[#allocation18 + $0x8] sm:$0xff]
    %v1054 = vld [vmem:[#allocation18 + $0x10] sm:$0xff]
    %v1055 = vld [vmem:[#allocation18 + $0x18] sm:$0xff]
    %v1056 = vld [vmem:[%s79] sm:$0x1]
    %v1057 = vlaneseq
    %v1058 = vshrl.u32 %v1057, 7
    %v1059 = vadd.s32 %v1058, 8
    %v1060 = vlaneseq
    %v1061 = vand.u32 %v1060, 127
    %vm1062 = vcmp.le.s32.totalorder %v1061, %v1058
    %vm1063 = vcmp.le.s32.totalorder %v1061, %v1059
    %v1064 = vsel %vm1062, 0.0, -1e+09
    %v1065 = vsel %vm1063, 0.0, -1e+09
    loop: start=1, step=1, limit=9
    $region234: #{_lambda_.1} parent=1 // loop_pre_header
      _
    $region235: #{_lambda_.1} parent=1 // loop_header
      %s1067 = sphi 1, %s1071
      %p1068 = scmp.ge.s32.totalorder %s1067, 9
      %v1072 = vphi 0.0, %v2271
      %v1073 = vphi 0.0, %v2272
    $region236: #{_lambda_.1} parent=1 // loop_header_branch
      %1070 = sbr.rel (%p1068) target = $region240
    $region237: #{_lambda_.1} parent=1 // loop_body
      %v1074 = vpack.c.bf16 %v1073, %v1072
      %v1075 = vpack.c.bf16 %v1010, %v1010
      %v1077 = vlaneseq
      %v1078 = vshrl.u32 %v1077, 7
      %v1079 = vsub.s32 0, %v1078
      %v1080 = vrot.slane %v1011, %v1079
      %v1083 = vsel %vm498, %v1074, 0
      %v1086 = vsel %vm516, %v1075, 0
      %1088 = vmatprep.subr.bf16.mxu0 0
      %1089 = vmatpush1.bf16.msra.mxu0 %v1086
      %1090 = vmatprep.subr.bf16.mxu0 0
      %1091 = vmatpush1.bf16.msra.mxu0 0
      %1092 = vmatprep.subr.bf16.mxu0 0
      %1093 = vmatpush1.bf16.msra.mxu0 0
      %1094 = vmatprep.subr.bf16.mxu0 0
      %1095 = vmatpush1.bf16.msra.mxu0 0
      %1096 = vmatprep.subr.bf16.mxu0 0
      %1097 = vmatpush1.bf16.msra.mxu0 0
      %1098 = vmatprep.subr.bf16.mxu0 0
      %1099 = vmatpush1.bf16.msra.mxu0 0
      %1100 = vmatprep.subr.bf16.mxu0 0
      %1101 = vmatpush1.bf16.msra.mxu0 0
      %1102 = vmatprep.subr.bf16.mxu0 0
      %1103 = vmatpush1.bf16.msra.mxu0 0
      %1104 = vmatprep.subr.bf16.mxu0 0
      %1105 = vmatpush1.bf16.msra.mxu0 0
      %1106 = vmatprep.subr.bf16.mxu0 0
      %1107 = vmatpush1.bf16.msra.mxu0 0
      %1108 = vmatprep.subr.bf16.mxu0 0
      %1109 = vmatpush1.bf16.msra.mxu0 0
      %1110 = vmatprep.subr.bf16.mxu0 0
      %1111 = vmatpush1.bf16.msra.mxu0 0
      %1112 = vmatprep.subr.bf16.mxu0 0
      %1113 = vmatpush1.bf16.msra.mxu0 0
      %1114 = vmatprep.subr.bf16.mxu0 0
      %1115 = vmatpush1.bf16.msra.mxu0 0
      %1116 = vmatprep.subr.bf16.mxu0 0
      %1117 = vmatpush1.bf16.msra.mxu0 0
      %1118 = vmatprep.subr.bf16.mxu0 0
      %1119 = vmatpush1.bf16.msra.mxu0 0
      %1120 = vmatprep.mubr.bf16.mxu0 0
      %1121 = vmatmul.mubr.bf16.gmra.mrb[0].mxu0 %v1083
      %v1122 = vpop.f32.mrb[0].mxu0
      %v1123 = vadd.f32 %v1080, %v1122
      %v1124 = vpop.f32.mrb[0].mxu0
      %v1125 = vpop.f32.mrb[0].mxu0
      %v1126 = vadd.f32 %v1080, %v1125
      %v1127 = vpop.f32.mrb[0].mxu0
      %1128 = vdwg.mxu0
      %v1129 = vmul.f32 %v1123, 5.656854
      %v1130 = vmul.f32 %v1126, 5.656854
      %v1131 = vadd.f32 %v1129, %v1008
      %v1132 = vadd.f32 %v1130, %v1009
      %v1133 = vpack.c.bf16 %v1132, %v1131
      %v1134 = vpack.c.bf16 %v1013, %v1012
      %v1135 = vpack.c.bf16 %v1015, %v1014
      %v1137 = vlaneseq
      %v1138 = vshrl.u32 %v1137, 7
      %v1139 = vsub.s32 0, %v1138
      %v1140 = vrot.slane %v1016, %v1139
      %v1143 = vsel %vm398, %v1133, 0
      %1145 = vmatprep.subr.bf16.mxu0 0
      %1146 = vmatpush1.bf16.msra.mxu0 %v1134
      %1147 = vmatprep.subr.bf16.mxu0 0
      %1148 = vmatpush1.bf16.msra.mxu0 %v1135
      %1149 = vmatprep.subr.bf16.mxu0 0
      %1150 = vmatpush1.bf16.msra.mxu0 0
      %1151 = vmatprep.subr.bf16.mxu0 0
      %1152 = vmatpush1.bf16.msra.mxu0 0
      %1153 = vmatprep.subr.bf16.mxu0 0
      %1154 = vmatpush1.bf16.msra.mxu0 0
      %1155 = vmatprep.subr.bf16.mxu0 0
      %1156 = vmatpush1.bf16.msra.mxu0 0
      %1157 = vmatprep.subr.bf16.mxu0 0
      %1158 = vmatpush1.bf16.msra.mxu0 0
      %1159 = vmatprep.subr.bf16.mxu0 0
      %1160 = vmatpush1.bf16.msra.mxu0 0
      %1161 = vmatprep.subr.bf16.mxu0 0
      %1162 = vmatpush1.bf16.msra.mxu0 0
      %1163 = vmatprep.subr.bf16.mxu0 0
      %1164 = vmatpush1.bf16.msra.mxu0 0
      %1165 = vmatprep.subr.bf16.mxu0 0
      %1166 = vmatpush1.bf16.msra.mxu0 0
      %1167 = vmatprep.subr.bf16.mxu0 0
      %1168 = vmatpush1.bf16.msra.mxu0 0
      %1169 = vmatprep.subr.bf16.mxu0 0
      %1170 = vmatpush1.bf16.msra.mxu0 0
      %1171 = vmatprep.subr.bf16.mxu0 0
      %1172 = vmatpush1.bf16.msra.mxu0 0
      %1173 = vmatprep.subr.bf16.mxu0 0
      %1174 = vmatpush1.bf16.msra.mxu0 0
      %1175 = vmatprep.subr.bf16.mxu0 0
      %1176 = vmatpush1.bf16.msra.mxu0 0
      %1177 = vmatprep.mubr.bf16.mxu0 0
      %1178 = vmatmul.mubr.bf16.gmra.mrb[0].mxu0 %v1143
      %v1179 = vpop.f32.mrb[0].mxu0
      %v1180 = vadd.f32 %v1140, %v1179
      %v1181 = vpop.f32.mrb[0].mxu0
      %v1182 = vpop.f32.mrb[0].mxu0
      %v1183 = vadd.f32 %v1140, %v1182
      %v1184 = vpop.f32.mrb[0].mxu0
      %1185 = vdwg.mxu0
      %v1186 = vpack.c.bf16 %v1183, %v1180
      %1188 = vrot.lane.b32.xlu0 %v1186, 96
      %v1189 = vpop.permute.xlu0 %1188
      %v1191 = vsel %vm337, %v1186, 0
      %v1194 = vsel %vm337, %v1189, 0
      %1196 = vmatprep.subr.bf16.mxu0 0
      %1197 = vmatpush1.bf16.xpose.msra.mxu0 %v1194
      %1198 = vmatprep.subr.bf16.mxu0 0
      %1199 = vmatpush1.bf16.xpose.msra.mxu0 0
      %1200 = vmatprep.subr.bf16.mxu0 0
      %1201 = vmatpush1.bf16.xpose.msra.mxu0 0
      %1202 = vmatprep.subr.bf16.mxu0 0
      %1203 = vmatpush1.bf16.xpose.msra.mxu0 0
      %1204 = vmatprep.subr.bf16.mxu0 0
      %1205 = vmatpush1.bf16.xpose.msra.mxu0 0
      %1206 = vmatprep.subr.bf16.mxu0 0
      %1207 = vmatpush1.bf16.xpose.msra.mxu0 0
      %1208 = vmatprep.subr.bf16.mxu0 0
      %1209 = vmatpush1.bf16.xpose.msra.mxu0 0
      %1210 = vmatprep.subr.bf16.mxu0 0
      %1211 = vmatpush1.bf16.xpose.msra.mxu0 0
      %1212 = vmatprep.subr.bf16.mxu0 0
      %1213 = vmatpush1.bf16.xpose.msra.mxu0 0
      %1214 = vmatprep.subr.bf16.mxu0 0
      %1215 = vmatpush1.bf16.xpose.msra.mxu0 0
      %1216 = vmatprep.subr.bf16.mxu0 0
      %1217 = vmatpush1.bf16.xpose.msra.mxu0 0
      %1218 = vmatprep.subr.bf16.mxu0 0
      %1219 = vmatpush1.bf16.xpose.msra.mxu0 0
      %1220 = vmatprep.subr.bf16.mxu0 0
      %1221 = vmatpush1.bf16.xpose.msra.mxu0 0
      %1222 = vmatprep.subr.bf16.mxu0 0
      %1223 = vmatpush1.bf16.xpose.msra.mxu0 0
      %1224 = vmatprep.subr.bf16.mxu0 0
      %1225 = vmatpush1.bf16.xpose.msra.mxu0 0
      %1226 = vmatprep.subr.bf16.mxu0 0
      %1227 = vmatpush1.bf16.xpose.msra.mxu0 0
      %1228 = vmatprep.mubr.bf16.mxu0 0
      %1229 = vmatmul.mubr.bf16.gmra.mrb[0].mxu0 %v1191
      %v1230 = vpop.f32.mrb[0].mxu0
      %v1231 = vadd.f32 0.0, %v1230
      %v1232 = vpop.f32.mrb[0].mxu0
      %v1233 = vpop.f32.mrb[0].mxu0
      %v1234 = vadd.f32 0.0, %v1233
      %v1235 = vpop.f32.mrb[0].mxu0
      %1236 = vdwg.mxu0
      %v1237 = vmul.f32 %v1231, 0.25
      %v1238 = vmul.f32 %v1234, 0.25
      %v1239 = vadd.f32 %v1237, %v1064
      %v1240 = vadd.f32 %v1238, %v1065
      %vm1241 = vcmask 72704
      %v1242 = vsel %vm1241, %v1239, -inf
      %1243 = vmax.xlane.f32.xlu0 %v1242
      %v1244 = vpop.xlane.xlu0 %1243
      %vm1245 = vcmask 65536
      %v1246 = vsel %vm1245, %v1240, -inf
      %1247 = vmax.xlane.f32.xlu0 %v1246
      %v1248 = vpop.xlane.xlu0 %1247
      %v1249 = vsub.f32 %v1239, %v1244
      %v1250 = vsub.f32 %v1240, %v1248
      %v1251 = vmul.f32 %v1249, 1.442695
      %v1252 = vpow.pop %v1251
      %v1253 = vmul.f32 %v1250, 1.442695
      %v1254 = vpow.pop %v1253
      %v1255 = vsel %vm1241, %v1252, 0.0
      %1256 = vadd.xlane.f32.xlu0 %v1255
      %v1257 = vpop.xlane.xlu0 %1256
      %v1258 = vsel %vm1245, %v1254, 0.0
      %1259 = vadd.xlane.f32.xlu0 %v1258
      %v1260 = vpop.xlane.xlu0 %1259
      %v1261 = vrcp.pop %v1257
      %v1262 = vrcp.pop %v1260
      %v1263 = vmul.f32 %v1252, %v1261
      %v1264 = vmul.f32 %v1254, %v1262
      %v1265 = vpack.c.bf16 %v1264, %v1263
      %1266 = vrot.lane.b32.xlu0 %v1186, 64
      %v1267 = vpop.permute.xlu0 %1266
      %v1269 = vsel %vm1241, %v1265, 0
      %vm1271 = vcmask 1044480
      %v1272 = vsel %vm516, 4294967295, 65535
      %v1273 = vsel %vm1271, %v1272, 0
      %v1275 = vand.u32 %v1267, %v1273
      %1277 = vmatprep.subr.bf16.mxu0 0
      %1278 = vmatpush1.bf16.msra.mxu0 %v1275
      %1279 = vmatprep.subr.bf16.mxu0 0
      %1280 = vmatpush1.bf16.msra.mxu0 0
      %1281 = vmatprep.subr.bf16.mxu0 0
      %1282 = vmatpush1.bf16.msra.mxu0 0
      %1283 = vmatprep.subr.bf16.mxu0 0
      %1284 = vmatpush1.bf16.msra.mxu0 0
      %1285 = vmatprep.subr.bf16.mxu0 0
      %1286 = vmatpush1.bf16.msra.mxu0 0
      %1287 = vmatprep.subr.bf16.mxu0 0
      %1288 = vmatpush1.bf16.msra.mxu0 0
      %1289 = vmatprep.subr.bf16.mxu0 0
      %1290 = vmatpush1.bf16.msra.mxu0 0
      %1291 = vmatprep.subr.bf16.mxu0 0
      %1292 = vmatpush1.bf16.msra.mxu0 0
      %1293 = vmatprep.subr.bf16.mxu0 0
      %1294 = vmatpush1.bf16.msra.mxu0 0
      %1295 = vmatprep.subr.bf16.mxu0 0
      %1296 = vmatpush1.bf16.msra.mxu0 0
      %1297 = vmatprep.subr.bf16.mxu0 0
      %1298 = vmatpush1.bf16.msra.mxu0 0
      %1299 = vmatprep.subr.bf16.mxu0 0
      %1300 = vmatpush1.bf16.msra.mxu0 0
      %1301 = vmatprep.subr.bf16.mxu0 0
      %1302 = vmatpush1.bf16.msra.mxu0 0
      %1303 = vmatprep.subr.bf16.mxu0 0
      %1304 = vmatpush1.bf16.msra.mxu0 0
      %1305 = vmatprep.subr.bf16.mxu0 0
      %1306 = vmatpush1.bf16.msra.mxu0 0
      %1307 = vmatprep.subr.bf16.mxu0 0
      %1308 = vmatpush1.bf16.msra.mxu0 0
      %1309 = vmatprep.mubr.bf16.mxu0 0
      %1310 = vmatmul.mubr.bf16.gmra.mrb[0].mxu0 %v1269
      %v1311 = vpop.f32.mrb[0].mxu0
      %v1312 = vadd.f32 0.0, %v1311
      %v1313 = vpop.f32.mrb[0].mxu0
      %v1314 = vpop.f32.mrb[0].mxu0
      %v1315 = vadd.f32 0.0, %v1314
      %v1316 = vpop.f32.mrb[0].mxu0
      %1317 = vdwg.mxu0
      %v1318 = vpack.c.bf16 %v1315, %v1312
      %v1319 = vpack.c.bf16 %v1018, %v1017
      %1320 = vrot.lane.b32.xlu0 %v1186, 112
      %v1321 = vpop.permute.xlu0 %1320
      %1322 = vrot.lane.b32.xlu0 %v1186, 80
      %v1323 = vpop.permute.xlu0 %1322
      %v1325 = vsel %vm337, %v1321, 0
      %v1328 = vsel %vm337, %v1323, 0
      %1330 = vmatprep.subr.bf16.mxu0 0
      %1331 = vmatpush1.bf16.xpose.msra.mxu0 %v1328
      %1332 = vmatprep.subr.bf16.mxu0 0
      %1333 = vmatpush1.bf16.xpose.msra.mxu0 0
      %1334 = vmatprep.subr.bf16.mxu0 0
      %1335 = vmatpush1.bf16.xpose.msra.mxu0 0
      %1336 = vmatprep.subr.bf16.mxu0 0
      %1337 = vmatpush1.bf16.xpose.msra.mxu0 0
      %1338 = vmatprep.subr.bf16.mxu0 0
      %1339 = vmatpush1.bf16.xpose.msra.mxu0 0
      %1340 = vmatprep.subr.bf16.mxu0 0
      %1341 = vmatpush1.bf16.xpose.msra.mxu0 0
      %1342 = vmatprep.subr.bf16.mxu0 0
      %1343 = vmatpush1.bf16.xpose.msra.mxu0 0
      %1344 = vmatprep.subr.bf16.mxu0 0
      %1345 = vmatpush1.bf16.xpose.msra.mxu0 0
      %1346 = vmatprep.subr.bf16.mxu0 0
      %1347 = vmatpush1.bf16.xpose.msra.mxu0 0
      %1348 = vmatprep.subr.bf16.mxu0 0
      %1349 = vmatpush1.bf16.xpose.msra.mxu0 0
      %1350 = vmatprep.subr.bf16.mxu0 0
      %1351 = vmatpush1.bf16.xpose.msra.mxu0 0
      %1352 = vmatprep.subr.bf16.mxu0 0
      %1353 = vmatpush1.bf16.xpose.msra.mxu0 0
      %1354 = vmatprep.subr.bf16.mxu0 0
      %1355 = vmatpush1.bf16.xpose.msra.mxu0 0
      %1356 = vmatprep.subr.bf16.mxu0 0
      %1357 = vmatpush1.bf16.xpose.msra.mxu0 0
      %1358 = vmatprep.subr.bf16.mxu0 0
      %1359 = vmatpush1.bf16.xpose.msra.mxu0 0
      %1360 = vmatprep.subr.bf16.mxu0 0
      %1361 = vmatpush1.bf16.xpose.msra.mxu0 0
      %1362 = vmatprep.mubr.bf16.mxu0 0
      %1363 = vmatmul.mubr.bf16.gmra.mrb[0].mxu0 %v1325
      %v1364 = vpop.f32.mrb[0].mxu0
      %v1365 = vadd.f32 0.0, %v1364
      %v1366 = vpop.f32.mrb[0].mxu0
      %v1367 = vpop.f32.mrb[0].mxu0
      %v1368 = vadd.f32 0.0, %v1367
      %v1369 = vpop.f32.mrb[0].mxu0
      %1370 = vdwg.mxu0
      %v1371 = vmul.f32 %v1365, 0.25
      %v1372 = vmul.f32 %v1368, 0.25
      %v1373 = vadd.f32 %v1371, %v1064
      %v1374 = vadd.f32 %v1372, %v1065
      %v1375 = vsel %vm1241, %v1373, -inf
      %1376 = vmax.xlane.f32.xlu0 %v1375
      %v1377 = vpop.xlane.xlu0 %1376
      %v1378 = vsel %vm1245, %v1374, -inf
      %1379 = vmax.xlane.f32.xlu0 %v1378
      %v1380 = vpop.xlane.xlu0 %1379
      %v1381 = vsub.f32 %v1373, %v1377
      %v1382 = vsub.f32 %v1374, %v1380
      %v1383 = vmul.f32 %v1381, 1.442695
      %v1384 = vpow.pop %v1383
      %v1385 = vmul.f32 %v1382, 1.442695
      %v1386 = vpow.pop %v1385
      %v1387 = vsel %vm1241, %v1384, 0.0
      %1388 = vadd.xlane.f32.xlu0 %v1387
      %v1389 = vpop.xlane.xlu0 %1388
      %v1390 = vsel %vm1245, %v1386, 0.0
      %1391 = vadd.xlane.f32.xlu0 %v1390
      %v1392 = vpop.xlane.xlu0 %1391
      %v1393 = vrcp.pop %v1389
      %v1394 = vrcp.pop %v1392
      %v1395 = vmul.f32 %v1384, %v1393
      %v1396 = vmul.f32 %v1386, %v1394
      %v1397 = vpack.c.bf16 %v1396, %v1395
      %1398 = vrot.lane.b32.xlu0 %v1186, 48
      %v1399 = vpop.permute.xlu0 %1398
      %v1401 = vsel %vm1241, %v1397, 0
      %v1404 = vand.u32 %v1399, %v1273
      %1406 = vmatprep.subr.bf16.mxu0 0
      %1407 = vmatpush1.bf16.msra.mxu0 %v1404
      %1408 = vmatprep.subr.bf16.mxu0 0
      %1409 = vmatpush1.bf16.msra.mxu0 0
      %1410 = vmatprep.subr.bf16.mxu0 0
      %1411 = vmatpush1.bf16.msra.mxu0 0
      %1412 = vmatprep.subr.bf16.mxu0 0
      %1413 = vmatpush1.bf16.msra.mxu0 0
      %1414 = vmatprep.subr.bf16.mxu0 0
      %1415 = vmatpush1.bf16.msra.mxu0 0
      %1416 = vmatprep.subr.bf16.mxu0 0
      %1417 = vmatpush1.bf16.msra.mxu0 0
      %1418 = vmatprep.subr.bf16.mxu0 0
      %1419 = vmatpush1.bf16.msra.mxu0 0
      %1420 = vmatprep.subr.bf16.mxu0 0
      %1421 = vmatpush1.bf16.msra.mxu0 0
      %1422 = vmatprep.subr.bf16.mxu0 0
      %1423 = vmatpush1.bf16.msra.mxu0 0
      %1424 = vmatprep.subr.bf16.mxu0 0
      %1425 = vmatpush1.bf16.msra.mxu0 0
      %1426 = vmatprep.subr.bf16.mxu0 0
      %1427 = vmatpush1.bf16.msra.mxu0 0
      %1428 = vmatprep.subr.bf16.mxu0 0
      %1429 = vmatpush1.bf16.msra.mxu0 0
      %1430 = vmatprep.subr.bf16.mxu0 0
      %1431 = vmatpush1.bf16.msra.mxu0 0
      %1432 = vmatprep.subr.bf16.mxu0 0
      %1433 = vmatpush1.bf16.msra.mxu0 0
      %1434 = vmatprep.subr.bf16.mxu0 0
      %1435 = vmatpush1.bf16.msra.mxu0 0
      %1436 = vmatprep.subr.bf16.mxu0 0
      %1437 = vmatpush1.bf16.msra.mxu0 0
      %1438 = vmatprep.mubr.bf16.mxu0 0
      %1439 = vmatmul.mubr.bf16.gmra.mrb[0].mxu0 %v1401
      %v1440 = vpop.f32.mrb[0].mxu0
      %v1441 = vadd.f32 0.0, %v1440
      %v1442 = vpop.f32.mrb[0].mxu0
      %v1443 = vpop.f32.mrb[0].mxu0
      %v1444 = vadd.f32 0.0, %v1443
      %v1445 = vpop.f32.mrb[0].mxu0
      %1446 = vdwg.mxu0
      %v1447 = vpack.c.bf16 %v1444, %v1441
      %v1448 = vpack.c.bf16 %v1020, %v1019
      %v1450 = vsel %vm337, %v1447, 0
      %1452 = vmatprep.subr.bf16.mxu0 0
      %1453 = vmatpush1.bf16.msra.mxu0 %v1448
      %1454 = vmatprep.subr.bf16.mxu0 0
      %1455 = vmatpush1.bf16.msra.mxu0 0
      %1456 = vmatprep.subr.bf16.mxu0 0
      %1457 = vmatpush1.bf16.msra.mxu0 0
      %1458 = vmatprep.subr.bf16.mxu0 0
      %1459 = vmatpush1.bf16.msra.mxu0 0
      %1460 = vmatprep.subr.bf16.mxu0 0
      %1461 = vmatpush1.bf16.msra.mxu0 0
      %1462 = vmatprep.subr.bf16.mxu0 0
      %1463 = vmatpush1.bf16.msra.mxu0 0
      %1464 = vmatprep.subr.bf16.mxu0 0
      %1465 = vmatpush1.bf16.msra.mxu0 0
      %1466 = vmatprep.subr.bf16.mxu0 0
      %1467 = vmatpush1.bf16.msra.mxu0 0
      %1468 = vmatprep.subr.bf16.mxu0 0
      %1469 = vmatpush1.bf16.msra.mxu0 0
      %1470 = vmatprep.subr.bf16.mxu0 0
      %1471 = vmatpush1.bf16.msra.mxu0 0
      %1472 = vmatprep.subr.bf16.mxu0 0
      %1473 = vmatpush1.bf16.msra.mxu0 0
      %1474 = vmatprep.subr.bf16.mxu0 0
      %1475 = vmatpush1.bf16.msra.mxu0 0
      %1476 = vmatprep.subr.bf16.mxu0 0
      %1477 = vmatpush1.bf16.msra.mxu0 0
      %1478 = vmatprep.subr.bf16.mxu0 0
      %1479 = vmatpush1.bf16.msra.mxu0 0
      %1480 = vmatprep.subr.bf16.mxu0 0
      %1481 = vmatpush1.bf16.msra.mxu0 0
      %1482 = vmatprep.subr.bf16.mxu0 0
      %1483 = vmatpush1.bf16.msra.mxu0 0
      %1484 = vmatprep.mubr.bf16.mxu0 0
      %1485 = vmatmul.mubr.bf16.gmra.mrb[0].mxu0 %v1450
      %v1486 = vpop.f32.mrb[0].mxu0
      %v1487 = vadd.f32 0.0, %v1486
      %v1488 = vpop.f32.mrb[0].mxu0
      %v1489 = vpop.f32.mrb[0].mxu0
      %v1490 = vadd.f32 0.0, %v1489
      %v1491 = vpop.f32.mrb[0].mxu0
      %1492 = vdwg.mxu0
      %v1494 = vsel %vm337, %v1318, 0
      %1496 = vmatprep.subr.bf16.mxu0 0
      %1497 = vmatpush1.bf16.msra.mxu0 %v1319
      %1498 = vmatprep.subr.bf16.mxu0 0
      %1499 = vmatpush1.bf16.msra.mxu0 0
      %1500 = vmatprep.subr.bf16.mxu0 0
      %1501 = vmatpush1.bf16.msra.mxu0 0
      %1502 = vmatprep.subr.bf16.mxu0 0
      %1503 = vmatpush1.bf16.msra.mxu0 0
      %1504 = vmatprep.subr.bf16.mxu0 0
      %1505 = vmatpush1.bf16.msra.mxu0 0
      %1506 = vmatprep.subr.bf16.mxu0 0
      %1507 = vmatpush1.bf16.msra.mxu0 0
      %1508 = vmatprep.subr.bf16.mxu0 0
      %1509 = vmatpush1.bf16.msra.mxu0 0
      %1510 = vmatprep.subr.bf16.mxu0 0
      %1511 = vmatpush1.bf16.msra.mxu0 0
      %1512 = vmatprep.subr.bf16.mxu0 0
      %1513 = vmatpush1.bf16.msra.mxu0 0
      %1514 = vmatprep.subr.bf16.mxu0 0
      %1515 = vmatpush1.bf16.msra.mxu0 0
      %1516 = vmatprep.subr.bf16.mxu0 0
      %1517 = vmatpush1.bf16.msra.mxu0 0
      %1518 = vmatprep.subr.bf16.mxu0 0
      %1519 = vmatpush1.bf16.msra.mxu0 0
      %1520 = vmatprep.subr.bf16.mxu0 0
      %1521 = vmatpush1.bf16.msra.mxu0 0
      %1522 = vmatprep.subr.bf16.mxu0 0
      %1523 = vmatpush1.bf16.msra.mxu0 0
      %1524 = vmatprep.subr.bf16.mxu0 0
      %1525 = vmatpush1.bf16.msra.mxu0 0
      %1526 = vmatprep.subr.bf16.mxu0 0
      %1527 = vmatpush1.bf16.msra.mxu0 0
      %1528 = vmatprep.mubr.bf16.mxu0 0
      %1529 = vmatmul.mubr.bf16.gmra.mrb[0].mxu0 %v1494
      %v1530 = vpop.f32.mrb[0].mxu0
      %v1531 = vadd.f32 %v1487, %v1530
      %v1532 = vpop.f32.mrb[0].mxu0
      %v1533 = vpop.f32.mrb[0].mxu0
      %v1534 = vadd.f32 %v1490, %v1533
      %v1535 = vpop.f32.mrb[0].mxu0
      %1536 = vdwg.mxu0
      %v1538 = vlaneseq
      %v1539 = vshrl.u32 %v1538, 7
      %v1540 = vsub.s32 0, %v1539
      %v1541 = vrot.slane %v1021, %v1540
      %v1543 = vadd.f32 %v1531, %v1541
      %v1544 = vadd.f32 %v1534, %v1541
      %v1545 = vadd.f32 %v1131, %v1543
      %v1546 = vadd.f32 %v1132, %v1544
      %v1547 = vsel %vm398, %v1545, 0.0
      %1548 = vadd.xlane.f32.xlu0 %v1547
      %v1549 = vpop.xlane.xlu0 %1548
      %vm1550 = vcmask 253952
      %v1551 = vsel %vm1550, %v1546, 0.0
      %1552 = vadd.xlane.f32.xlu0 %v1551
      %v1553 = vpop.xlane.xlu0 %1552
      %v1554 = vmul.f32 %v1549, %v774
      %v1555 = vmul.f32 %v1553, %v774
      %v1556 = vsub.f32 %v1545, %v1554
      %v1557 = vsub.f32 %v1546, %v1555
      %v1558 = vmul.f32 %v1556, %v1556
      %v1559 = vmul.f32 %v1557, %v1557
      %v1560 = vsel %vm398, %v1558, 0.0
      %1561 = vadd.xlane.f32.xlu0 %v1560
      %v1562 = vpop.xlane.xlu0 %1561
      %v1563 = vsel %vm1550, %v1559, 0.0
      %1564 = vadd.xlane.f32.xlu0 %v1563
      %v1565 = vpop.xlane.xlu0 %1564
      %v1566 = vmul.f32 %v1562, %v774
      %v1567 = vmul.f32 %v1565, %v774
      %v1568 = vadd.f32 %v1566, 1e-05
      %v1569 = vadd.f32 %v1567, 1e-05
      %v1570 = vrsqrt.pop %v1568
      %v1571 = vrsqrt.pop %v1569
      %v1572 = vmul.f32 %v1556, %v1570
      %v1573 = vmul.f32 %v1557, %v1571
      %v1575 = vlaneseq
      %v1576 = vshrl.u32 %v1575, 7
      %v1577 = vsub.s32 0, %v1576
      %v1578 = vrot.slane %v1022, %v1577
      %v1580 = vmul.f32 %v1572, %v1578
      %v1581 = vmul.f32 %v1573, %v1578
      %v1583 = vlaneseq
      %v1584 = vshrl.u32 %v1583, 7
      %v1585 = vsub.s32 0, %v1584
      %v1586 = vrot.slane %v1023, %v1585
      %v1588 = vadd.f32 %v1580, %v1586
      %v1589 = vadd.f32 %v1581, %v1586
      %v1590 = vpack.c.bf16 %v1589, %v1588
      %v1591 = vpack.c.bf16 %v1025, %v1024
      %v1592 = vpack.c.bf16 %v1027, %v1026
      %v1594 = vlaneseq
      %v1595 = vshrl.u32 %v1594, 7
      %v1596 = vsub.s32 0, %v1595
      %v1597 = vrot.slane %v1028, %v1596
      %v1600 = vsel %vm398, %v1590, 0
      %1602 = vmatprep.subr.bf16.mxu0 0
      %1603 = vmatpush1.bf16.msra.mxu0 %v1591
      %1604 = vmatprep.subr.bf16.mxu0 0
      %1605 = vmatpush1.bf16.msra.mxu0 %v1592
      %1606 = vmatprep.subr.bf16.mxu0 0
      %1607 = vmatpush1.bf16.msra.mxu0 0
      %1608 = vmatprep.subr.bf16.mxu0 0
      %1609 = vmatpush1.bf16.msra.mxu0 0
      %1610 = vmatprep.subr.bf16.mxu0 0
      %1611 = vmatpush1.bf16.msra.mxu0 0
      %1612 = vmatprep.subr.bf16.mxu0 0
      %1613 = vmatpush1.bf16.msra.mxu0 0
      %1614 = vmatprep.subr.bf16.mxu0 0
      %1615 = vmatpush1.bf16.msra.mxu0 0
      %1616 = vmatprep.subr.bf16.mxu0 0
      %1617 = vmatpush1.bf16.msra.mxu0 0
      %1618 = vmatprep.subr.bf16.mxu0 0
      %1619 = vmatpush1.bf16.msra.mxu0 0
      %1620 = vmatprep.subr.bf16.mxu0 0
      %1621 = vmatpush1.bf16.msra.mxu0 0
      %1622 = vmatprep.subr.bf16.mxu0 0
      %1623 = vmatpush1.bf16.msra.mxu0 0
      %1624 = vmatprep.subr.bf16.mxu0 0
      %1625 = vmatpush1.bf16.msra.mxu0 0
      %1626 = vmatprep.subr.bf16.mxu0 0
      %1627 = vmatpush1.bf16.msra.mxu0 0
      %1628 = vmatprep.subr.bf16.mxu0 0
      %1629 = vmatpush1.bf16.msra.mxu0 0
      %1630 = vmatprep.subr.bf16.mxu0 0
      %1631 = vmatpush1.bf16.msra.mxu0 0
      %1632 = vmatprep.subr.bf16.mxu0 0
      %1633 = vmatpush1.bf16.msra.mxu0 0
      %1634 = vmatprep.mubr.bf16.mxu0 0
      %1635 = vmatmul.mubr.bf16.gmra.mrb[0].mxu0 %v1600
      %v1636 = vpop.f32.mrb[0].mxu0
      %v1637 = vadd.f32 %v1597, %v1636
      %v1638 = vpop.f32.mrb[0].mxu0
      %v1639 = vpop.f32.mrb[0].mxu0
      %v1640 = vadd.f32 %v1597, %v1639
      %v1641 = vpop.f32.mrb[0].mxu0
      %1642 = vdwg.mxu0
      %v1643 = vpack.c.bf16 %v1640, %v1637
      %v1644 = vpack.c.bf16 %v1003, %v1003
      %v1646 = vsel %vm337, %v1643, 0
      %v1649 = vsel %vm337, %v1644, 0
      %1651 = vmatprep.subr.bf16.mxu0 0
      %1652 = vmatpush1.bf16.xpose.msra.mxu0 %v1649
      %1653 = vmatprep.subr.bf16.mxu0 0
      %1654 = vmatpush1.bf16.xpose.msra.mxu0 0
      %1655 = vmatprep.subr.bf16.mxu0 0
      %1656 = vmatpush1.bf16.xpose.msra.mxu0 0
      %1657 = vmatprep.subr.bf16.mxu0 0
      %1658 = vmatpush1.bf16.xpose.msra.mxu0 0
      %1659 = vmatprep.subr.bf16.mxu0 0
      %1660 = vmatpush1.bf16.xpose.msra.mxu0 0
      %1661 = vmatprep.subr.bf16.mxu0 0
      %1662 = vmatpush1.bf16.xpose.msra.mxu0 0
      %1663 = vmatprep.subr.bf16.mxu0 0
      %1664 = vmatpush1.bf16.xpose.msra.mxu0 0
      %1665 = vmatprep.subr.bf16.mxu0 0
      %1666 = vmatpush1.bf16.xpose.msra.mxu0 0
      %1667 = vmatprep.subr.bf16.mxu0 0
      %1668 = vmatpush1.bf16.xpose.msra.mxu0 0
      %1669 = vmatprep.subr.bf16.mxu0 0
      %1670 = vmatpush1.bf16.xpose.msra.mxu0 0
      %1671 = vmatprep.subr.bf16.mxu0 0
      %1672 = vmatpush1.bf16.xpose.msra.mxu0 0
      %1673 = vmatprep.subr.bf16.mxu0 0
      %1674 = vmatpush1.bf16.xpose.msra.mxu0 0
      %1675 = vmatprep.subr.bf16.mxu0 0
      %1676 = vmatpush1.bf16.xpose.msra.mxu0 0
      %1677 = vmatprep.subr.bf16.mxu0 0
      %1678 = vmatpush1.bf16.xpose.msra.mxu0 0
      %1679 = vmatprep.subr.bf16.mxu0 0
      %1680 = vmatpush1.bf16.xpose.msra.mxu0 0
      %1681 = vmatprep.subr.bf16.mxu0 0
      %1682 = vmatpush1.bf16.xpose.msra.mxu0 0
      %1683 = vmatprep.mubr.bf16.mxu0 0
      %1684 = vmatmul.mubr.bf16.gmra.mrb[0].mxu0 %v1646
      %v1685 = vpop.f32.mrb[0].mxu0
      %v1686 = vadd.f32 0.0, %v1685
      %v1687 = vpop.f32.mrb[0].mxu0
      %v1688 = vpop.f32.mrb[0].mxu0
      %v1689 = vadd.f32 0.0, %v1688
      %v1690 = vpop.f32.mrb[0].mxu0
      %1691 = vdwg.mxu0
      %v1692 = vmul.f32 %v1686, 0.25
      %v1693 = vmul.f32 %v1689, 0.25
      %v1694 = vsel %vm498, %v1692, -inf
      %1695 = vmax.xlane.f32.xlu0 %v1694
      %v1696 = vpop.xlane.xlu0 %1695
      %vm1697 = vcmask 57344
      %v1698 = vsel %vm1697, %v1693, -inf
      %1699 = vmax.xlane.f32.xlu0 %v1698
      %v1700 = vpop.xlane.xlu0 %1699
      %v1701 = vsub.f32 %v1692, %v1696
      %v1702 = vsub.f32 %v1693, %v1700
      %v1703 = vmul.f32 %v1701, 1.442695
      %v1704 = vpow.pop %v1703
      %v1705 = vmul.f32 %v1702, 1.442695
      %v1706 = vpow.pop %v1705
      %v1707 = vsel %vm498, %v1704, 0.0
      %1708 = vadd.xlane.f32.xlu0 %v1707
      %v1709 = vpop.xlane.xlu0 %1708
      %v1710 = vsel %vm1697, %v1706, 0.0
      %1711 = vadd.xlane.f32.xlu0 %v1710
      %v1712 = vpop.xlane.xlu0 %1711
      %v1713 = vrcp.pop %v1709
      %v1714 = vrcp.pop %v1712
      %v1715 = vmul.f32 %v1704, %v1713
      %v1716 = vmul.f32 %v1706, %v1714
      %v1717 = vpack.c.bf16 %v1716, %v1715
      %1719 = vrot.lane.b32.xlu0 %v1644, 96
      %v1720 = vpop.permute.xlu0 %1719
      %v1722 = vsel %vm498, %v1717, 0
      %v1725 = vsel %vm516, %v1720, 0
      %1727 = vmatprep.subr.bf16.mxu0 0
      %1728 = vmatpush1.bf16.msra.mxu0 %v1725
      %1729 = vmatprep.subr.bf16.mxu0 0
      %1730 = vmatpush1.bf16.msra.mxu0 0
      %1731 = vmatprep.subr.bf16.mxu0 0
      %1732 = vmatpush1.bf16.msra.mxu0 0
      %1733 = vmatprep.subr.bf16.mxu0 0
      %1734 = vmatpush1.bf16.msra.mxu0 0
      %1735 = vmatprep.subr.bf16.mxu0 0
      %1736 = vmatpush1.bf16.msra.mxu0 0
      %1737 = vmatprep.subr.bf16.mxu0 0
      %1738 = vmatpush1.bf16.msra.mxu0 0
      %1739 = vmatprep.subr.bf16.mxu0 0
      %1740 = vmatpush1.bf16.msra.mxu0 0
      %1741 = vmatprep.subr.bf16.mxu0 0
      %1742 = vmatpush1.bf16.msra.mxu0 0
      %1743 = vmatprep.subr.bf16.mxu0 0
      %1744 = vmatpush1.bf16.msra.mxu0 0
      %1745 = vmatprep.subr.bf16.mxu0 0
      %1746 = vmatpush1.bf16.msra.mxu0 0
      %1747 = vmatprep.subr.bf16.mxu0 0
      %1748 = vmatpush1.bf16.msra.mxu0 0
      %1749 = vmatprep.subr.bf16.mxu0 0
      %1750 = vmatpush1.bf16.msra.mxu0 0
      %1751 = vmatprep.subr.bf16.mxu0 0
      %1752 = vmatpush1.bf16.msra.mxu0 0
      %1753 = vmatprep.subr.bf16.mxu0 0
      %1754 = vmatpush1.bf16.msra.mxu0 0
      %1755 = vmatprep.subr.bf16.mxu0 0
      %1756 = vmatpush1.bf16.msra.mxu0 0
      %1757 = vmatprep.subr.bf16.mxu0 0
      %1758 = vmatpush1.bf16.msra.mxu0 0
      %1759 = vmatprep.mubr.bf16.mxu0 0
      %1760 = vmatmul.mubr.bf16.gmra.mrb[0].mxu0 %v1722
      %v1761 = vpop.f32.mrb[0].mxu0
      %v1762 = vadd.f32 0.0, %v1761
      %v1763 = vpop.f32.mrb[0].mxu0
      %v1764 = vpop.f32.mrb[0].mxu0
      %v1765 = vadd.f32 0.0, %v1764
      %v1766 = vpop.f32.mrb[0].mxu0
      %1767 = vdwg.mxu0
      %v1768 = vpack.c.bf16 %v1765, %v1762
      %v1769 = vpack.c.bf16 %v1030, %v1029
      %1771 = vrot.lane.b32.xlu0 %v1643, 112
      %v1772 = vpop.permute.xlu0 %1771
      %1773 = vrot.lane.b32.xlu0 %v1644, 112
      %v1774 = vpop.permute.xlu0 %1773
      %v1776 = vsel %vm337, %v1772, 0
      %v1779 = vsel %vm337, %v1774, 0
      %1781 = vmatprep.subr.bf16.mxu0 0
      %1782 = vmatpush1.bf16.xpose.msra.mxu0 %v1779
      %1783 = vmatprep.subr.bf16.mxu0 0
      %1784 = vmatpush1.bf16.xpose.msra.mxu0 0
      %1785 = vmatprep.subr.bf16.mxu0 0
      %1786 = vmatpush1.bf16.xpose.msra.mxu0 0
      %1787 = vmatprep.subr.bf16.mxu0 0
      %1788 = vmatpush1.bf16.xpose.msra.mxu0 0
      %1789 = vmatprep.subr.bf16.mxu0 0
      %1790 = vmatpush1.bf16.xpose.msra.mxu0 0
      %1791 = vmatprep.subr.bf16.mxu0 0
      %1792 = vmatpush1.bf16.xpose.msra.mxu0 0
      %1793 = vmatprep.subr.bf16.mxu0 0
      %1794 = vmatpush1.bf16.xpose.msra.mxu0 0
      %1795 = vmatprep.subr.bf16.mxu0 0
      %1796 = vmatpush1.bf16.xpose.msra.mxu0 0
      %1797 = vmatprep.subr.bf16.mxu0 0
      %1798 = vmatpush1.bf16.xpose.msra.mxu0 0
      %1799 = vmatprep.subr.bf16.mxu0 0
      %1800 = vmatpush1.bf16.xpose.msra.mxu0 0
      %1801 = vmatprep.subr.bf16.mxu0 0
      %1802 = vmatpush1.bf16.xpose.msra.mxu0 0
      %1803 = vmatprep.subr.bf16.mxu0 0
      %1804 = vmatpush1.bf16.xpose.msra.mxu0 0
      %1805 = vmatprep.subr.bf16.mxu0 0
      %1806 = vmatpush1.bf16.xpose.msra.mxu0 0
      %1807 = vmatprep.subr.bf16.mxu0 0
      %1808 = vmatpush1.bf16.xpose.msra.mxu0 0
      %1809 = vmatprep.subr.bf16.mxu0 0
      %1810 = vmatpush1.bf16.xpose.msra.mxu0 0
      %1811 = vmatprep.subr.bf16.mxu0 0
      %1812 = vmatpush1.bf16.xpose.msra.mxu0 0
      %1813 = vmatprep.mubr.bf16.mxu0 0
      %1814 = vmatmul.mubr.bf16.gmra.mrb[0].mxu0 %v1776
      %v1815 = vpop.f32.mrb[0].mxu0
      %v1816 = vadd.f32 0.0, %v1815
      %v1817 = vpop.f32.mrb[0].mxu0
      %v1818 = vpop.f32.mrb[0].mxu0
      %v1819 = vadd.f32 0.0, %v1818
      %v1820 = vpop.f32.mrb[0].mxu0
      %1821 = vdwg.mxu0
      %v1822 = vmul.f32 %v1816, 0.25
      %v1823 = vmul.f32 %v1819, 0.25
      %v1824 = vsel %vm498, %v1822, -inf
      %1825 = vmax.xlane.f32.xlu0 %v1824
      %v1826 = vpop.xlane.xlu0 %1825
      %v1827 = vsel %vm1697, %v1823, -inf
      %1828 = vmax.xlane.f32.xlu0 %v1827
      %v1829 = vpop.xlane.xlu0 %1828
      %v1830 = vsub.f32 %v1822, %v1826
      %v1831 = vsub.f32 %v1823, %v1829
      %v1832 = vmul.f32 %v1830, 1.442695
      %v1833 = vpow.pop %v1832
      %v1834 = vmul.f32 %v1831, 1.442695
      %v1835 = vpow.pop %v1834
      %v1836 = vsel %vm498, %v1833, 0.0
      %1837 = vadd.xlane.f32.xlu0 %v1836
      %v1838 = vpop.xlane.xlu0 %1837
      %v1839 = vsel %vm1697, %v1835, 0.0
      %1840 = vadd.xlane.f32.xlu0 %v1839
      %v1841 = vpop.xlane.xlu0 %1840
      %v1842 = vrcp.pop %v1838
      %v1843 = vrcp.pop %v1841
      %v1844 = vmul.f32 %v1833, %v1842
      %v1845 = vmul.f32 %v1835, %v1843
      %v1846 = vpack.c.bf16 %v1845, %v1844
      %1847 = vrot.lane.b32.xlu0 %v1644, 80
      %v1848 = vpop.permute.xlu0 %1847
      %v1850 = vsel %vm498, %v1846, 0
      %v1853 = vsel %vm516, %v1848, 0
      %1855 = vmatprep.subr.bf16.mxu0 0
      %1856 = vmatpush1.bf16.msra.mxu0 %v1853
      %1857 = vmatprep.subr.bf16.mxu0 0
      %1858 = vmatpush1.bf16.msra.mxu0 0
      %1859 = vmatprep.subr.bf16.mxu0 0
      %1860 = vmatpush1.bf16.msra.mxu0 0
      %1861 = vmatprep.subr.bf16.mxu0 0
      %1862 = vmatpush1.bf16.msra.mxu0 0
      %1863 = vmatprep.subr.bf16.mxu0 0
      %1864 = vmatpush1.bf16.msra.mxu0 0
      %1865 = vmatprep.subr.bf16.mxu0 0
      %1866 = vmatpush1.bf16.msra.mxu0 0
      %1867 = vmatprep.subr.bf16.mxu0 0
      %1868 = vmatpush1.bf16.msra.mxu0 0
      %1869 = vmatprep.subr.bf16.mxu0 0
      %1870 = vmatpush1.bf16.msra.mxu0 0
      %1871 = vmatprep.subr.bf16.mxu0 0
      %1872 = vmatpush1.bf16.msra.mxu0 0
      %1873 = vmatprep.subr.bf16.mxu0 0
      %1874 = vmatpush1.bf16.msra.mxu0 0
      %1875 = vmatprep.subr.bf16.mxu0 0
      %1876 = vmatpush1.bf16.msra.mxu0 0
      %1877 = vmatprep.subr.bf16.mxu0 0
      %1878 = vmatpush1.bf16.msra.mxu0 0
      %1879 = vmatprep.subr.bf16.mxu0 0
      %1880 = vmatpush1.bf16.msra.mxu0 0
      %1881 = vmatprep.subr.bf16.mxu0 0
      %1882 = vmatpush1.bf16.msra.mxu0 0
      %1883 = vmatprep.subr.bf16.mxu0 0
      %1884 = vmatpush1.bf16.msra.mxu0 0
      %1885 = vmatprep.subr.bf16.mxu0 0
      %1886 = vmatpush1.bf16.msra.mxu0 0
      %1887 = vmatprep.mubr.bf16.mxu0 0
      %1888 = vmatmul.mubr.bf16.gmra.mrb[0].mxu0 %v1850
      %v1889 = vpop.f32.mrb[0].mxu0
      %v1890 = vadd.f32 0.0, %v1889
      %v1891 = vpop.f32.mrb[0].mxu0
      %v1892 = vpop.f32.mrb[0].mxu0
      %v1893 = vadd.f32 0.0, %v1892
      %v1894 = vpop.f32.mrb[0].mxu0
      %1895 = vdwg.mxu0
      %v1896 = vpack.c.bf16 %v1893, %v1890
      %v1897 = vpack.c.bf16 %v1032, %v1031
      %v1899 = vsel %vm337, %v1896, 0
      %1901 = vmatprep.subr.bf16.mxu0 0
      %1902 = vmatpush1.bf16.msra.mxu0 %v1897
      %1903 = vmatprep.subr.bf16.mxu0 0
      %1904 = vmatpush1.bf16.msra.mxu0 0
      %1905 = vmatprep.subr.bf16.mxu0 0
      %1906 = vmatpush1.bf16.msra.mxu0 0
      %1907 = vmatprep.subr.bf16.mxu0 0
      %1908 = vmatpush1.bf16.msra.mxu0 0
      %1909 = vmatprep.subr.bf16.mxu0 0
      %1910 = vmatpush1.bf16.msra.mxu0 0
      %1911 = vmatprep.subr.bf16.mxu0 0
      %1912 = vmatpush1.bf16.msra.mxu0 0
      %1913 = vmatprep.subr.bf16.mxu0 0
      %1914 = vmatpush1.bf16.msra.mxu0 0
      %1915 = vmatprep.subr.bf16.mxu0 0
      %1916 = vmatpush1.bf16.msra.mxu0 0
      %1917 = vmatprep.subr.bf16.mxu0 0
      %1918 = vmatpush1.bf16.msra.mxu0 0
      %1919 = vmatprep.subr.bf16.mxu0 0
      %1920 = vmatpush1.bf16.msra.mxu0 0
      %1921 = vmatprep.subr.bf16.mxu0 0
      %1922 = vmatpush1.bf16.msra.mxu0 0
      %1923 = vmatprep.subr.bf16.mxu0 0
      %1924 = vmatpush1.bf16.msra.mxu0 0
      %1925 = vmatprep.subr.bf16.mxu0 0
      %1926 = vmatpush1.bf16.msra.mxu0 0
      %1927 = vmatprep.subr.bf16.mxu0 0
      %1928 = vmatpush1.bf16.msra.mxu0 0
      %1929 = vmatprep.subr.bf16.mxu0 0
      %1930 = vmatpush1.bf16.msra.mxu0 0
      %1931 = vmatprep.subr.bf16.mxu0 0
      %1932 = vmatpush1.bf16.msra.mxu0 0
      %1933 = vmatprep.mubr.bf16.mxu0 0
      %1934 = vmatmul.mubr.bf16.gmra.mrb[0].mxu0 %v1899
      %v1935 = vpop.f32.mrb[0].mxu0
      %v1936 = vadd.f32 0.0, %v1935
      %v1937 = vpop.f32.mrb[0].mxu0
      %v1938 = vpop.f32.mrb[0].mxu0
      %v1939 = vadd.f32 0.0, %v1938
      %v1940 = vpop.f32.mrb[0].mxu0
      %1941 = vdwg.mxu0
      %v1943 = vsel %vm337, %v1768, 0
      %1945 = vmatprep.subr.bf16.mxu0 0
      %1946 = vmatpush1.bf16.msra.mxu0 %v1769
      %1947 = vmatprep.subr.bf16.mxu0 0
      %1948 = vmatpush1.bf16.msra.mxu0 0
      %1949 = vmatprep.subr.bf16.mxu0 0
      %1950 = vmatpush1.bf16.msra.mxu0 0
      %1951 = vmatprep.subr.bf16.mxu0 0
      %1952 = vmatpush1.bf16.msra.mxu0 0
      %1953 = vmatprep.subr.bf16.mxu0 0
      %1954 = vmatpush1.bf16.msra.mxu0 0
      %1955 = vmatprep.subr.bf16.mxu0 0
      %1956 = vmatpush1.bf16.msra.mxu0 0
      %1957 = vmatprep.subr.bf16.mxu0 0
      %1958 = vmatpush1.bf16.msra.mxu0 0
      %1959 = vmatprep.subr.bf16.mxu0 0
      %1960 = vmatpush1.bf16.msra.mxu0 0
      %1961 = vmatprep.subr.bf16.mxu0 0
      %1962 = vmatpush1.bf16.msra.mxu0 0
      %1963 = vmatprep.subr.bf16.mxu0 0
      %1964 = vmatpush1.bf16.msra.mxu0 0
      %1965 = vmatprep.subr.bf16.mxu0 0
      %1966 = vmatpush1.bf16.msra.mxu0 0
      %1967 = vmatprep.subr.bf16.mxu0 0
      %1968 = vmatpush1.bf16.msra.mxu0 0
      %1969 = vmatprep.subr.bf16.mxu0 0
      %1970 = vmatpush1.bf16.msra.mxu0 0
      %1971 = vmatprep.subr.bf16.mxu0 0
      %1972 = vmatpush1.bf16.msra.mxu0 0
      %1973 = vmatprep.subr.bf16.mxu0 0
      %1974 = vmatpush1.bf16.msra.mxu0 0
      %1975 = vmatprep.subr.bf16.mxu0 0
      %1976 = vmatpush1.bf16.msra.mxu0 0
      %1977 = vmatprep.mubr.bf16.mxu0 0
      %1978 = vmatmul.mubr.bf16.gmra.mrb[0].mxu0 %v1943
      %v1979 = vpop.f32.mrb[0].mxu0
      %v1980 = vadd.f32 %v1936, %v1979
      %v1981 = vpop.f32.mrb[0].mxu0
      %v1982 = vpop.f32.mrb[0].mxu0
      %v1983 = vadd.f32 %v1939, %v1982
      %v1984 = vpop.f32.mrb[0].mxu0
      %1985 = vdwg.mxu0
      %v1987 = vlaneseq
      %v1988 = vshrl.u32 %v1987, 7
      %v1989 = vsub.s32 0, %v1988
      %v1990 = vrot.slane %v1033, %v1989
      %v1992 = vadd.f32 %v1980, %v1990
      %v1993 = vadd.f32 %v1983, %v1990
      %v1994 = vadd.f32 %v1588, %v1992
      %v1995 = vadd.f32 %v1589, %v1993
      %v1996 = vsel %vm398, %v1994, 0.0
      %1997 = vadd.xlane.f32.xlu0 %v1996
      %v1998 = vpop.xlane.xlu0 %1997
      %v1999 = vsel %vm1550, %v1995, 0.0
      %2000 = vadd.xlane.f32.xlu0 %v1999
      %v2001 = vpop.xlane.xlu0 %2000
      %v2002 = vmul.f32 %v1998, %v774
      %v2003 = vmul.f32 %v2001, %v774
      %v2004 = vsub.f32 %v1994, %v2002
      %v2005 = vsub.f32 %v1995, %v2003
      %v2006 = vmul.f32 %v2004, %v2004
      %v2007 = vmul.f32 %v2005, %v2005
      %v2008 = vsel %vm398, %v2006, 0.0
      %2009 = vadd.xlane.f32.xlu0 %v2008
      %v2010 = vpop.xlane.xlu0 %2009
      %v2011 = vsel %vm1550, %v2007, 0.0
      %2012 = vadd.xlane.f32.xlu0 %v2011
      %v2013 = vpop.xlane.xlu0 %2012
      %v2014 = vmul.f32 %v2010, %v774
      %v2015 = vmul.f32 %v2013, %v774
      %v2016 = vadd.f32 %v2014, 1e-05
      %v2017 = vadd.f32 %v2015, 1e-05
      %v2018 = vrsqrt.pop %v2016
      %v2019 = vrsqrt.pop %v2017
      %v2020 = vmul.f32 %v2004, %v2018
      %v2021 = vmul.f32 %v2005, %v2019
      %v2023 = vlaneseq
      %v2024 = vshrl.u32 %v2023, 7
      %v2025 = vsub.s32 0, %v2024
      %v2026 = vrot.slane %v1034, %v2025
      %v2028 = vmul.f32 %v2020, %v2026
      %v2029 = vmul.f32 %v2021, %v2026
      %v2031 = vlaneseq
      %v2032 = vshrl.u32 %v2031, 7
      %v2033 = vsub.s32 0, %v2032
      %v2034 = vrot.slane %v1035, %v2033
      %v2036 = vadd.f32 %v2028, %v2034
      %v2037 = vadd.f32 %v2029, %v2034
      %v2038 = vpack.c.bf16 %v2037, %v2036
      %v2039 = vpack.c.bf16 %v1037, %v1036
      %v2040 = vpack.c.bf16 %v1039, %v1038
      %v2042 = vlaneseq
      %v2043 = vshrl.u32 %v2042, 7
      %v2044 = vsub.s32 0, %v2043
      %v2045 = vrot.slane %v1040, %v2044
      %v2048 = vsel %vm398, %v2038, 0
      %2050 = vmatprep.subr.bf16.mxu0 0
      %2051 = vmatpush1.bf16.msra.mxu0 %v2039
      %2052 = vmatprep.subr.bf16.mxu0 0
      %2053 = vmatpush1.bf16.msra.mxu0 %v2040
      %2054 = vmatprep.subr.bf16.mxu0 0
      %2055 = vmatpush1.bf16.msra.mxu0 0
      %2056 = vmatprep.subr.bf16.mxu0 0
      %2057 = vmatpush1.bf16.msra.mxu0 0
      %2058 = vmatprep.subr.bf16.mxu0 0
      %2059 = vmatpush1.bf16.msra.mxu0 0
      %2060 = vmatprep.subr.bf16.mxu0 0
      %2061 = vmatpush1.bf16.msra.mxu0 0
      %2062 = vmatprep.subr.bf16.mxu0 0
      %2063 = vmatpush1.bf16.msra.mxu0 0
      %2064 = vmatprep.subr.bf16.mxu0 0
      %2065 = vmatpush1.bf16.msra.mxu0 0
      %2066 = vmatprep.subr.bf16.mxu0 0
      %2067 = vmatpush1.bf16.msra.mxu0 0
      %2068 = vmatprep.subr.bf16.mxu0 0
      %2069 = vmatpush1.bf16.msra.mxu0 0
      %2070 = vmatprep.subr.bf16.mxu0 0
      %2071 = vmatpush1.bf16.msra.mxu0 0
      %2072 = vmatprep.subr.bf16.mxu0 0
      %2073 = vmatpush1.bf16.msra.mxu0 0
      %2074 = vmatprep.subr.bf16.mxu0 0
      %2075 = vmatpush1.bf16.msra.mxu0 0
      %2076 = vmatprep.subr.bf16.mxu0 0
      %2077 = vmatpush1.bf16.msra.mxu0 0
      %2078 = vmatprep.subr.bf16.mxu0 0
      %2079 = vmatpush1.bf16.msra.mxu0 0
      %2080 = vmatprep.subr.bf16.mxu0 0
      %2081 = vmatpush1.bf16.msra.mxu0 0
      %2082 = vmatprep.mubr.bf16.mxu0 0
      %2083 = vmatmul.mubr.bf16.gmra.mrb[0].mxu0 %v2048
      %v2084 = vpop.f32.mrb[0].mxu0
      %v2085 = vadd.f32 %v2045, %v2084
      %v2086 = vpop.f32.mrb[0].mxu0
      %v2087 = vpop.f32.mrb[0].mxu0
      %v2088 = vadd.f32 %v2045, %v2087
      %v2089 = vpop.f32.mrb[0].mxu0
      %2090 = vdwg.mxu0
      %v2091 = vmax.f32 %v2085, 0.0
      %v2092 = vmax.f32 %v2088, 0.0
      %v2093 = vpack.c.bf16 %v2092, %v2091
      %v2094 = vpack.c.bf16 %v1042, %v1041
      %v2095 = vpack.c.bf16 %v1044, %v1043
      %v2096 = vpack.c.bf16 %v1046, %v1045
      %v2097 = vpack.c.bf16 %v1048, %v1047
      %v2099 = vlaneseq
      %v2100 = vshrl.u32 %v2099, 7
      %v2101 = vsub.s32 0, %v2100
      %v2102 = vrot.slane %v1049, %v2101
      %v2105 = vsel %vm877, %v2093, 0
      %2107 = vmatprep.subr.bf16.mxu0 0
      %2108 = vmatpush1.bf16.msra.mxu0 %v2094
      %2109 = vmatprep.subr.bf16.mxu0 0
      %2110 = vmatpush1.bf16.msra.mxu0 %v2095
      %2111 = vmatprep.subr.bf16.mxu0 0
      %2112 = vmatpush1.bf16.msra.mxu0 %v2096
      %2113 = vmatprep.subr.bf16.mxu0 0
      %2114 = vmatpush1.bf16.msra.mxu0 %v2097
      %2115 = vmatprep.subr.bf16.mxu0 0
      %2116 = vmatpush1.bf16.msra.mxu0 0
      %2117 = vmatprep.subr.bf16.mxu0 0
      %2118 = vmatpush1.bf16.msra.mxu0 0
      %2119 = vmatprep.subr.bf16.mxu0 0
      %2120 = vmatpush1.bf16.msra.mxu0 0
      %2121 = vmatprep.subr.bf16.mxu0 0
      %2122 = vmatpush1.bf16.msra.mxu0 0
      %2123 = vmatprep.subr.bf16.mxu0 0
      %2124 = vmatpush1.bf16.msra.mxu0 0
      %2125 = vmatprep.subr.bf16.mxu0 0
      %2126 = vmatpush1.bf16.msra.mxu0 0
      %2127 = vmatprep.subr.bf16.mxu0 0
      %2128 = vmatpush1.bf16.msra.mxu0 0
      %2129 = vmatprep.subr.bf16.mxu0 0
      %2130 = vmatpush1.bf16.msra.mxu0 0
      %2131 = vmatprep.subr.bf16.mxu0 0
      %2132 = vmatpush1.bf16.msra.mxu0 0
      %2133 = vmatprep.subr.bf16.mxu0 0
      %2134 = vmatpush1.bf16.msra.mxu0 0
      %2135 = vmatprep.subr.bf16.mxu0 0
      %2136 = vmatpush1.bf16.msra.mxu0 0
      %2137 = vmatprep.subr.bf16.mxu0 0
      %2138 = vmatpush1.bf16.msra.mxu0 0
      %2139 = vmatprep.mubr.bf16.mxu0 0
      %2140 = vmatmul.mubr.bf16.gmra.mrb[0].mxu0 %v2105
      %v2141 = vpop.f32.mrb[0].mxu0
      %v2142 = vadd.f32 %v2102, %v2141
      %v2143 = vpop.f32.mrb[0].mxu0
      %v2144 = vpop.f32.mrb[0].mxu0
      %v2145 = vadd.f32 %v2102, %v2144
      %v2146 = vpop.f32.mrb[0].mxu0
      %2147 = vdwg.mxu0
      %v2148 = vadd.f32 %v2036, %v2142
      %v2149 = vadd.f32 %v2037, %v2145
      %v2150 = vsel %vm398, %v2148, 0.0
      %2151 = vadd.xlane.f32.xlu0 %v2150
      %v2152 = vpop.xlane.xlu0 %2151
      %v2153 = vsel %vm1550, %v2149, 0.0
      %2154 = vadd.xlane.f32.xlu0 %v2153
      %v2155 = vpop.xlane.xlu0 %2154
      %v2156 = vmul.f32 %v2152, %v774
      %v2157 = vmul.f32 %v2155, %v774
      %v2158 = vsub.f32 %v2148, %v2156
      %v2159 = vsub.f32 %v2149, %v2157
      %v2160 = vmul.f32 %v2158, %v2158
      %v2161 = vmul.f32 %v2159, %v2159
      %v2162 = vsel %vm398, %v2160, 0.0
      %2163 = vadd.xlane.f32.xlu0 %v2162
      %v2164 = vpop.xlane.xlu0 %2163
      %v2165 = vsel %vm1550, %v2161, 0.0
      %2166 = vadd.xlane.f32.xlu0 %v2165
      %v2167 = vpop.xlane.xlu0 %2166
      %v2168 = vmul.f32 %v2164, %v774
      %v2169 = vmul.f32 %v2167, %v774
      %v2170 = vadd.f32 %v2168, 1e-05
      %v2171 = vadd.f32 %v2169, 1e-05
      %v2172 = vrsqrt.pop %v2170
      %v2173 = vrsqrt.pop %v2171
      %v2174 = vmul.f32 %v2158, %v2172
      %v2175 = vmul.f32 %v2159, %v2173
      %v2177 = vlaneseq
      %v2178 = vshrl.u32 %v2177, 7
      %v2179 = vsub.s32 0, %v2178
      %v2180 = vrot.slane %v1050, %v2179
      %v2182 = vmul.f32 %v2174, %v2180
      %v2183 = vmul.f32 %v2175, %v2180
      %v2185 = vlaneseq
      %v2186 = vshrl.u32 %v2185, 7
      %v2187 = vsub.s32 0, %v2186
      %v2188 = vrot.slane %v1051, %v2187
      %v2190 = vadd.f32 %v2182, %v2188
      %v2191 = vadd.f32 %v2183, %v2188
      %v2192 = vpack.c.bf16 %v2191, %v2190
      %v2193 = vpack.c.bf16 %v1053, %v1052
      %v2194 = vpack.c.bf16 %v1055, %v1054
      %v2196 = vlaneseq
      %v2197 = vshrl.u32 %v2196, 7
      %v2198 = vsub.s32 0, %v2197
      %v2199 = vrot.slane %v1056, %v2198
      %v2202 = vsel %vm398, %v2192, 0
      %2204 = vmatprep.subr.bf16.mxu0 0
      %2205 = vmatpush1.bf16.msra.mxu0 %v2193
      %2206 = vmatprep.subr.bf16.mxu0 0
      %2207 = vmatpush1.bf16.msra.mxu0 %v2194
      %2208 = vmatprep.subr.bf16.mxu0 0
      %2209 = vmatpush1.bf16.msra.mxu0 0
      %2210 = vmatprep.subr.bf16.mxu0 0
      %2211 = vmatpush1.bf16.msra.mxu0 0
      %2212 = vmatprep.subr.bf16.mxu0 0
      %2213 = vmatpush1.bf16.msra.mxu0 0
      %2214 = vmatprep.subr.bf16.mxu0 0
      %2215 = vmatpush1.bf16.msra.mxu0 0
      %2216 = vmatprep.subr.bf16.mxu0 0
      %2217 = vmatpush1.bf16.msra.mxu0 0
      %2218 = vmatprep.subr.bf16.mxu0 0
      %2219 = vmatpush1.bf16.msra.mxu0 0
      %2220 = vmatprep.subr.bf16.mxu0 0
      %2221 = vmatpush1.bf16.msra.mxu0 0
      %2222 = vmatprep.subr.bf16.mxu0 0
      %2223 = vmatpush1.bf16.msra.mxu0 0
      %2224 = vmatprep.subr.bf16.mxu0 0
      %2225 = vmatpush1.bf16.msra.mxu0 0
      %2226 = vmatprep.subr.bf16.mxu0 0
      %2227 = vmatpush1.bf16.msra.mxu0 0
      %2228 = vmatprep.subr.bf16.mxu0 0
      %2229 = vmatpush1.bf16.msra.mxu0 0
      %2230 = vmatprep.subr.bf16.mxu0 0
      %2231 = vmatpush1.bf16.msra.mxu0 0
      %2232 = vmatprep.subr.bf16.mxu0 0
      %2233 = vmatpush1.bf16.msra.mxu0 0
      %2234 = vmatprep.subr.bf16.mxu0 0
      %2235 = vmatpush1.bf16.msra.mxu0 0
      %2236 = vmatprep.mubr.bf16.mxu0 0
      %2237 = vmatmul.mubr.bf16.gmra.mrb[0].mxu0 %v2202
      %v2238 = vpop.f32.mrb[0].mxu0
      %v2239 = vadd.f32 %v2199, %v2238
      %v2240 = vpop.f32.mrb[0].mxu0
      %v2241 = vpop.f32.mrb[0].mxu0
      %v2242 = vadd.f32 %v2199, %v2241
      %v2243 = vpop.f32.mrb[0].mxu0
      %2244 = vdwg.mxu0
      %s2245 = ssub.s32 %s1067, 1
      %v2246 = vstv %s2245
      %vm2247 = vcmp.eq.s32.totalorder %v1058, %v2246
      %vm2248 = vcmp.eq.s32.totalorder %v1059, %v2246
      %v2249 = vsel %vm2247, 1, 0
      %v2250 = vsel %vm2248, 1, 0
      %vm2251 = vcmp.eq.s32.totalorder %v2249, 1
      %vm2252 = vcmp.eq.s32.totalorder %v2250, 1
      %v2253 = vsel %vm2251, %v2239, 0.0
      %v2254 = vsel %vm2252, %v2242, 0.0
      %v2255 = vsel %vm498, %v2253, 0.0
      %v2256 = vsel %vm1697, %v2254, 0.0
      %v2257 = vadd.f32 %v2255, %v2256
      %v2258 = vrot.slane %v2257, 4
      %v2259 = vadd.f32 %v2257, %v2258
      %v2260 = vrot.slane %v2259, 2
      %v2261 = vadd.f32 %v2259, %v2260
      %v2262 = vrot.slane %v2261, 1
      %v2263 = vadd.f32 %v2261, %v2262
      %v2264 = vstv %s1067
      %vm2265 = vcmp.eq.s32.totalorder %v1058, %v2264
      %vm2266 = vcmp.eq.s32.totalorder %v1059, %v2264
      %v2267 = vsel %vm2265, 1, 0
      %v2268 = vsel %vm2266, 1, 0
      %vm2269 = vcmp.eq.s32.totalorder %v2267, 1
      %vm2270 = vcmp.eq.s32.totalorder %v2268, 1
      %v2271 = vsel %vm2269, %v2263, %v1072
      %v2272 = vsel %vm2270, %v2263, %v1073
    $region238: #{_lambda_.1} parent=1 // loop_footer
      %s1071 = sadd.s32 1, %s1067
    $region239: #{_lambda_.1} parent=1 // loop_footer_branch
      %1066 = sbr.rel target = $region235
    $region240: #{_lambda_.1} parent=1 // loop_exit
      _
    %2273 = vst.msk [vmem:[#allocation2] sm:$0xff] %vm498, 0.0
    %vm2274 = vcmask 60416
    %2275 = vst.msk [vmem:[#allocation2 + $0x8] sm:$0xf] %vm2274, 0.0
    %2276 = vst.msk [vmem:[#allocation2 + $0x1] sm:$0xff] %vm498, %v1072
    %vm2277 = vcmask 57344
    %2278 = vst.msk [vmem:[#allocation2 + $0x9] sm:$0x1] %vm2277, %v1073
    %v2279 = vld [vmem:[#allocation2] sm:$0xff]
    %v2280 = vld [vmem:[%s81] sm:$0xff]
    %v2281 = vpack.c.bf16 %v2279, %v2279
    %v2282 = vpack.c.bf16 %v2280, %v2280
    %v2283 = vld [vmem:[#allocation2 + $0x1] sm:$0xff]
    %s2284 = scalar_lea.vmem %s81, 8
    %v2285 = vld [vmem:[%s2284] sm:$0xff]
    %v2286 = vpack.c.bf16 %v2283, %v2283
    %v2287 = vpack.c.bf16 %v2285, %v2285
    %v2289 = vsel %vm498, %v2286, 0
    %v2292 = vsel %vm516, %v2287, 0
    %2294 = vmatprep.subr.bf16.mxu0 0
    %2295 = vmatpush1.bf16.msra.mxu0 %v2292
    %2296 = vmatprep.subr.bf16.mxu0 0
    %2297 = vmatpush1.bf16.msra.mxu0 0
    %2298 = vmatprep.subr.bf16.mxu0 0
    %2299 = vmatpush1.bf16.msra.mxu0 0
    %2300 = vmatprep.subr.bf16.mxu0 0
    %2301 = vmatpush1.bf16.msra.mxu0 0
    %2302 = vmatprep.subr.bf16.mxu0 0
    %2303 = vmatpush1.bf16.msra.mxu0 0
    %2304 = vmatprep.subr.bf16.mxu0 0
    %2305 = vmatpush1.bf16.msra.mxu0 0
    %2306 = vmatprep.subr.bf16.mxu0 0
    %2307 = vmatpush1.bf16.msra.mxu0 0
    %2308 = vmatprep.subr.bf16.mxu0 0
    %2309 = vmatpush1.bf16.msra.mxu0 0
    %2310 = vmatprep.subr.bf16.mxu0 0
    %2311 = vmatpush1.bf16.msra.mxu0 0
    %2312 = vmatprep.subr.bf16.mxu0 0
    %2313 = vmatpush1.bf16.msra.mxu0 0
    %2314 = vmatprep.subr.bf16.mxu0 0
    %2315 = vmatpush1.bf16.msra.mxu0 0
    %2316 = vmatprep.subr.bf16.mxu0 0
    %2317 = vmatpush1.bf16.msra.mxu0 0
    %2318 = vmatprep.subr.bf16.mxu0 0
    %2319 = vmatpush1.bf16.msra.mxu0 0
    %2320 = vmatprep.subr.bf16.mxu0 0
    %2321 = vmatpush1.bf16.msra.mxu0 0
    %2322 = vmatprep.subr.bf16.mxu0 0
    %2323 = vmatpush1.bf16.msra.mxu0 0
    %2324 = vmatprep.subr.bf16.mxu0 0
    %2325 = vmatpush1.bf16.msra.mxu0 0
    %2326 = vmatprep.mubr.bf16.mxu0 0
    %2327 = vmatmul.mubr.bf16.gmra.mrb[0].mxu0 %v2289
    %v2328 = vpop.f32.mrb[0].mxu0
    %v2329 = vadd.f32 0.0, %v2328
    %v2330 = vpop.f32.mrb[0].mxu0
    %v2331 = vpop.f32.mrb[0].mxu0
    %v2332 = vpop.f32.mrb[0].mxu0
    %2333 = vdwg.mxu0
    %v2335 = vsel %vm498, %v2281, 0
    %v2338 = vsel %vm516, %v2282, 0
    %2340 = vmatprep.subr.bf16.mxu0 0
    %2341 = vmatpush1.bf16.msra.mxu0 %v2338
    %2342 = vmatprep.subr.bf16.mxu0 0
    %2343 = vmatpush1.bf16.msra.mxu0 0
    %2344 = vmatprep.subr.bf16.mxu0 0
    %2345 = vmatpush1.bf16.msra.mxu0 0
    %2346 = vmatprep.subr.bf16.mxu0 0
    %2347 = vmatpush1.bf16.msra.mxu0 0
    %2348 = vmatprep.subr.bf16.mxu0 0
    %2349 = vmatpush1.bf16.msra.mxu0 0
    %2350 = vmatprep.subr.bf16.mxu0 0
    %2351 = vmatpush1.bf16.msra.mxu0 0
    %2352 = vmatprep.subr.bf16.mxu0 0
    %2353 = vmatpush1.bf16.msra.mxu0 0
    %2354 = vmatprep.subr.bf16.mxu0 0
    %2355 = vmatpush1.bf16.msra.mxu0 0
    %2356 = vmatprep.subr.bf16.mxu0 0
    %2357 = vmatpush1.bf16.msra.mxu0 0
    %2358 = vmatprep.subr.bf16.mxu0 0
    %2359 = vmatpush1.bf16.msra.mxu0 0
    %2360 = vmatprep.subr.bf16.mxu0 0
    %2361 = vmatpush1.bf16.msra.mxu0 0
    %2362 = vmatprep.subr.bf16.mxu0 0
    %2363 = vmatpush1.bf16.msra.mxu0 0
    %2364 = vmatprep.subr.bf16.mxu0 0
    %2365 = vmatpush1.bf16.msra.mxu0 0
    %2366 = vmatprep.subr.bf16.mxu0 0
    %2367 = vmatpush1.bf16.msra.mxu0 0
    %2368 = vmatprep.subr.bf16.mxu0 0
    %2369 = vmatpush1.bf16.msra.mxu0 0
    %2370 = vmatprep.subr.bf16.mxu0 0
    %2371 = vmatpush1.bf16.msra.mxu0 0
    %2372 = vmatprep.mubr.bf16.mxu0 0
    %2373 = vmatmul.mubr.bf16.gmra.mrb[0].mxu0 %v2335
    %v2374 = vpop.f32.mrb[0].mxu0
    %v2375 = vadd.f32 %v2329, %v2374
    %v2376 = vpop.f32.mrb[0].mxu0
    %v2377 = vpop.f32.mrb[0].mxu0
    %v2378 = vpop.f32.mrb[0].mxu0
    %2379 = vdwg.mxu0
    %v2380 = vld [vmem:[#allocation2 + $0x2] sm:$0xff]
    %s2381 = scalar_lea.vmem %s81, 16
    %v2382 = vld [vmem:[%s2381] sm:$0xff]
    %v2383 = vpack.c.bf16 %v2380, %v2380
    %v2384 = vpack.c.bf16 %v2382, %v2382
    %v2386 = vsel %vm498, %v2383, 0
    %v2389 = vsel %vm516, %v2384, 0
    %2391 = vmatprep.subr.bf16.mxu0 0
    %2392 = vmatpush1.bf16.msra.mxu0 %v2389
    %2393 = vmatprep.subr.bf16.mxu0 0
    %2394 = vmatpush1.bf16.msra.mxu0 0
    %2395 = vmatprep.subr.bf16.mxu0 0
    %2396 = vmatpush1.bf16.msra.mxu0 0
    %2397 = vmatprep.subr.bf16.mxu0 0
    %2398 = vmatpush1.bf16.msra.mxu0 0
    %2399 = vmatprep.subr.bf16.mxu0 0
    %2400 = vmatpush1.bf16.msra.mxu0 0
    %2401 = vmatprep.subr.bf16.mxu0 0
    %2402 = vmatpush1.bf16.msra.mxu0 0
    %2403 = vmatprep.subr.bf16.mxu0 0
    %2404 = vmatpush1.bf16.msra.mxu0 0
    %2405 = vmatprep.subr.bf16.mxu0 0
    %2406 = vmatpush1.bf16.msra.mxu0 0
    %2407 = vmatprep.subr.bf16.mxu0 0
    %2408 = vmatpush1.bf16.msra.mxu0 0
    %2409 = vmatprep.subr.bf16.mxu0 0
    %2410 = vmatpush1.bf16.msra.mxu0 0
    %2411 = vmatprep.subr.bf16.mxu0 0
    %2412 = vmatpush1.bf16.msra.mxu0 0
    %2413 = vmatprep.subr.bf16.mxu0 0
    %2414 = vmatpush1.bf16.msra.mxu0 0
    %2415 = vmatprep.subr.bf16.mxu0 0
    %2416 = vmatpush1.bf16.msra.mxu0 0
    %2417 = vmatprep.subr.bf16.mxu0 0
    %2418 = vmatpush1.bf16.msra.mxu0 0
    %2419 = vmatprep.subr.bf16.mxu0 0
    %2420 = vmatpush1.bf16.msra.mxu0 0
    %2421 = vmatprep.subr.bf16.mxu0 0
    %2422 = vmatpush1.bf16.msra.mxu0 0
    %2423 = vmatprep.mubr.bf16.mxu0 0
    %2424 = vmatmul.mubr.bf16.gmra.mrb[0].mxu0 %v2386
    %v2425 = vpop.f32.mrb[0].mxu0
    %v2426 = vadd.f32 0.0, %v2425
    %v2427 = vpop.f32.mrb[0].mxu0
    %v2428 = vpop.f32.mrb[0].mxu0
    %v2429 = vpop.f32.mrb[0].mxu0
    %2430 = vdwg.mxu0
    %v2431 = vadd.f32 %v2375, %v2426
    %v2432 = vld [vmem:[#allocation2 + $0x3] sm:$0xff]
    %s2433 = scalar_lea.vmem %s81, 24
    %v2434 = vld [vmem:[%s2433] sm:$0xff]
    %v2435 = vpack.c.bf16 %v2432, %v2432
    %v2436 = vpack.c.bf16 %v2434, %v2434
    %v2438 = vsel %vm498, %v2435, 0
    %v2441 = vsel %vm516, %v2436, 0
    %2443 = vmatprep.subr.bf16.mxu0 0
    %2444 = vmatpush1.bf16.msra.mxu0 %v2441
    %2445 = vmatprep.subr.bf16.mxu0 0
    %2446 = vmatpush1.bf16.msra.mxu0 0
    %2447 = vmatprep.subr.bf16.mxu0 0
    %2448 = vmatpush1.bf16.msra.mxu0 0
    %2449 = vmatprep.subr.bf16.mxu0 0
    %2450 = vmatpush1.bf16.msra.mxu0 0
    %2451 = vmatprep.subr.bf16.mxu0 0
    %2452 = vmatpush1.bf16.msra.mxu0 0
    %2453 = vmatprep.subr.bf16.mxu0 0
    %2454 = vmatpush1.bf16.msra.mxu0 0
    %2455 = vmatprep.subr.bf16.mxu0 0
    %2456 = vmatpush1.bf16.msra.mxu0 0
    %2457 = vmatprep.subr.bf16.mxu0 0
    %2458 = vmatpush1.bf16.msra.mxu0 0
    %2459 = vmatprep.subr.bf16.mxu0 0
    %2460 = vmatpush1.bf16.msra.mxu0 0
    %2461 = vmatprep.subr.bf16.mxu0 0
    %2462 = vmatpush1.bf16.msra.mxu0 0
    %2463 = vmatprep.subr.bf16.mxu0 0
    %2464 = vmatpush1.bf16.msra.mxu0 0
    %2465 = vmatprep.subr.bf16.mxu0 0
    %2466 = vmatpush1.bf16.msra.mxu0 0
    %2467 = vmatprep.subr.bf16.mxu0 0
    %2468 = vmatpush1.bf16.msra.mxu0 0
    %2469 = vmatprep.subr.bf16.mxu0 0
    %2470 = vmatpush1.bf16.msra.mxu0 0
    %2471 = vmatprep.subr.bf16.mxu0 0
    %2472 = vmatpush1.bf16.msra.mxu0 0
    %2473 = vmatprep.subr.bf16.mxu0 0
    %2474 = vmatpush1.bf16.msra.mxu0 0
    %2475 = vmatprep.mubr.bf16.mxu0 0
    %2476 = vmatmul.mubr.bf16.gmra.mrb[0].mxu0 %v2438
    %v2477 = vpop.f32.mrb[0].mxu0
    %v2478 = vadd.f32 0.0, %v2477
    %v2479 = vpop.f32.mrb[0].mxu0
    %v2480 = vpop.f32.mrb[0].mxu0
    %v2481 = vpop.f32.mrb[0].mxu0
    %2482 = vdwg.mxu0
    %v2483 = vadd.f32 %v2431, %v2478
    %v2484 = vld [vmem:[#allocation2 + $0x4] sm:$0xff]
    %s2485 = scalar_lea.vmem %s81, 32
    %v2486 = vld [vmem:[%s2485] sm:$0xff]
    %v2487 = vpack.c.bf16 %v2484, %v2484
    %v2488 = vpack.c.bf16 %v2486, %v2486
    %v2490 = vsel %vm498, %v2487, 0
    %v2493 = vsel %vm516, %v2488, 0
    %2495 = vmatprep.subr.bf16.mxu0 0
    %2496 = vmatpush1.bf16.msra.mxu0 %v2493
    %2497 = vmatprep.subr.bf16.mxu0 0
    %2498 = vmatpush1.bf16.msra.mxu0 0
    %2499 = vmatprep.subr.bf16.mxu0 0
    %2500 = vmatpush1.bf16.msra.mxu0 0
    %2501 = vmatprep.subr.bf16.mxu0 0
    %2502 = vmatpush1.bf16.msra.mxu0 0
    %2503 = vmatprep.subr.bf16.mxu0 0
    %2504 = vmatpush1.bf16.msra.mxu0 0
    %2505 = vmatprep.subr.bf16.mxu0 0
    %2506 = vmatpush1.bf16.msra.mxu0 0
    %2507 = vmatprep.subr.bf16.mxu0 0
    %2508 = vmatpush1.bf16.msra.mxu0 0
    %2509 = vmatprep.subr.bf16.mxu0 0
    %2510 = vmatpush1.bf16.msra.mxu0 0
    %2511 = vmatprep.subr.bf16.mxu0 0
    %2512 = vmatpush1.bf16.msra.mxu0 0
    %2513 = vmatprep.subr.bf16.mxu0 0
    %2514 = vmatpush1.bf16.msra.mxu0 0
    %2515 = vmatprep.subr.bf16.mxu0 0
    %2516 = vmatpush1.bf16.msra.mxu0 0
    %2517 = vmatprep.subr.bf16.mxu0 0
    %2518 = vmatpush1.bf16.msra.mxu0 0
    %2519 = vmatprep.subr.bf16.mxu0 0
    %2520 = vmatpush1.bf16.msra.mxu0 0
    %2521 = vmatprep.subr.bf16.mxu0 0
    %2522 = vmatpush1.bf16.msra.mxu0 0
    %2523 = vmatprep.subr.bf16.mxu0 0
    %2524 = vmatpush1.bf16.msra.mxu0 0
    %2525 = vmatprep.subr.bf16.mxu0 0
    %2526 = vmatpush1.bf16.msra.mxu0 0
    %2527 = vmatprep.mubr.bf16.mxu0 0
    %2528 = vmatmul.mubr.bf16.gmra.mrb[0].mxu0 %v2490
    %v2529 = vpop.f32.mrb[0].mxu0
    %v2530 = vadd.f32 0.0, %v2529
    %v2531 = vpop.f32.mrb[0].mxu0
    %v2532 = vpop.f32.mrb[0].mxu0
    %v2533 = vpop.f32.mrb[0].mxu0
    %2534 = vdwg.mxu0
    %v2535 = vadd.f32 %v2483, %v2530
    %v2536 = vld [vmem:[%s83] sm:$0x1]
    %v2538 = vlaneseq
    %v2539 = vshrl.u32 %v2538, 7
    %v2540 = vsub.s32 0, %v2539
    %v2541 = vrot.slane %v2536, %v2540
    %v2543 = vadd.f32 %v2535, %v2541
    %v2544 = vtanh.pop %v2543
    %2545 = vst.msk [vmem:[#allocation3] sm:$0xff] %vm337, 0.0
    %vm2546 = vcmask 125952
    %2547 = vst.msk [vmem:[#allocation3 + $0x8] sm:$0xf] %vm2546, 0.0
    %2548 = vst.msk [vmem:[#allocation3 + $0x2] sm:$0xff] %vm337, %v2544
    %v2549 = vld [vmem:[#allocation3] sm:$0xff]
    %v2550 = vld [vmem:[%s85] sm:$0xff]
    %v2551 = vld [vmem:[%s85 + $0x8] sm:$0xff]
    %v2552 = vpack.c.bf16 %v2549, %v2549
    %v2553 = vpack.c.bf16 %v2551, %v2550
    %v2554 = vld [vmem:[#allocation3 + $0x1] sm:$0xff]
    %s2555 = scalar_lea.vmem %s85, 16
    %v2556 = vld [vmem:[%s2555] sm:$0xff]
    %v2557 = vld [vmem:[%s2555 + $0x8] sm:$0xff]
    %v2558 = vpack.c.bf16 %v2554, %v2554
    %v2559 = vpack.c.bf16 %v2557, %v2556
    %v2561 = vsel %vm337, %v2558, 0
    %2563 = vmatprep.subr.bf16.mxu0 0
    %2564 = vmatpush1.bf16.msra.mxu0 %v2559
    %2565 = vmatprep.subr.bf16.mxu0 0
    %2566 = vmatpush1.bf16.msra.mxu0 0
    %2567 = vmatprep.subr.bf16.mxu0 0
    %2568 = vmatpush1.bf16.msra.mxu0 0
    %2569 = vmatprep.subr.bf16.mxu0 0
    %2570 = vmatpush1.bf16.msra.mxu0 0
    %2571 = vmatprep.subr.bf16.mxu0 0
    %2572 = vmatpush1.bf16.msra.mxu0 0
    %2573 = vmatprep.subr.bf16.mxu0 0
    %2574 = vmatpush1.bf16.msra.mxu0 0
    %2575 = vmatprep.subr.bf16.mxu0 0
    %2576 = vmatpush1.bf16.msra.mxu0 0
    %2577 = vmatprep.subr.bf16.mxu0 0
    %2578 = vmatpush1.bf16.msra.mxu0 0
    %2579 = vmatprep.subr.bf16.mxu0 0
    %2580 = vmatpush1.bf16.msra.mxu0 0
    %2581 = vmatprep.subr.bf16.mxu0 0
    %2582 = vmatpush1.bf16.msra.mxu0 0
    %2583 = vmatprep.subr.bf16.mxu0 0
    %2584 = vmatpush1.bf16.msra.mxu0 0
    %2585 = vmatprep.subr.bf16.mxu0 0
    %2586 = vmatpush1.bf16.msra.mxu0 0
    %2587 = vmatprep.subr.bf16.mxu0 0
    %2588 = vmatpush1.bf16.msra.mxu0 0
    %2589 = vmatprep.subr.bf16.mxu0 0
    %2590 = vmatpush1.bf16.msra.mxu0 0
    %2591 = vmatprep.subr.bf16.mxu0 0
    %2592 = vmatpush1.bf16.msra.mxu0 0
    %2593 = vmatprep.subr.bf16.mxu0 0
    %2594 = vmatpush1.bf16.msra.mxu0 0
    %2595 = vmatprep.mubr.bf16.mxu0 0
    %2596 = vmatmul.mubr.bf16.gmra.mrb[0].mxu0 %v2561
    %v2597 = vpop.f32.mrb[0].mxu0
    %v2598 = vadd.f32 0.0, %v2597
    %v2599 = vpop.f32.mrb[0].mxu0
    %v2600 = vpop.f32.mrb[0].mxu0
    %v2601 = vpop.f32.mrb[0].mxu0
    %2602 = vdwg.mxu0
    %v2604 = vsel %vm337, %v2552, 0
    %2606 = vmatprep.subr.bf16.mxu0 0
    %2607 = vmatpush1.bf16.msra.mxu0 %v2553
    %2608 = vmatprep.subr.bf16.mxu0 0
    %2609 = vmatpush1.bf16.msra.mxu0 0
    %2610 = vmatprep.subr.bf16.mxu0 0
    %2611 = vmatpush1.bf16.msra.mxu0 0
    %2612 = vmatprep.subr.bf16.mxu0 0
    %2613 = vmatpush1.bf16.msra.mxu0 0
    %2614 = vmatprep.subr.bf16.mxu0 0
    %2615 = vmatpush1.bf16.msra.mxu0 0
    %2616 = vmatprep.subr.bf16.mxu0 0
    %2617 = vmatpush1.bf16.msra.mxu0 0
    %2618 = vmatprep.subr.bf16.mxu0 0
    %2619 = vmatpush1.bf16.msra.mxu0 0
    %2620 = vmatprep.subr.bf16.mxu0 0
    %2621 = vmatpush1.bf16.msra.mxu0 0
    %2622 = vmatprep.subr.bf16.mxu0 0
    %2623 = vmatpush1.bf16.msra.mxu0 0
    %2624 = vmatprep.subr.bf16.mxu0 0
    %2625 = vmatpush1.bf16.msra.mxu0 0
    %2626 = vmatprep.subr.bf16.mxu0 0
    %2627 = vmatpush1.bf16.msra.mxu0 0
    %2628 = vmatprep.subr.bf16.mxu0 0
    %2629 = vmatpush1.bf16.msra.mxu0 0
    %2630 = vmatprep.subr.bf16.mxu0 0
    %2631 = vmatpush1.bf16.msra.mxu0 0
    %2632 = vmatprep.subr.bf16.mxu0 0
    %2633 = vmatpush1.bf16.msra.mxu0 0
    %2634 = vmatprep.subr.bf16.mxu0 0
    %2635 = vmatpush1.bf16.msra.mxu0 0
    %2636 = vmatprep.subr.bf16.mxu0 0
    %2637 = vmatpush1.bf16.msra.mxu0 0
    %2638 = vmatprep.mubr.bf16.mxu0 0
    %2639 = vmatmul.mubr.bf16.gmra.mrb[0].mxu0 %v2604
    %v2640 = vpop.f32.mrb[0].mxu0
    %v2641 = vadd.f32 %v2598, %v2640
    %v2642 = vpop.f32.mrb[0].mxu0
    %v2643 = vpop.f32.mrb[0].mxu0
    %v2644 = vpop.f32.mrb[0].mxu0
    %2645 = vdwg.mxu0
    %v2646 = vld [vmem:[#allocation3 + $0x2] sm:$0xff]
    %s2647 = scalar_lea.vmem %s85, 32
    %v2648 = vld [vmem:[%s2647] sm:$0xff]
    %v2649 = vld [vmem:[%s2647 + $0x8] sm:$0xff]
    %v2650 = vpack.c.bf16 %v2646, %v2646
    %v2651 = vpack.c.bf16 %v2649, %v2648
    %v2653 = vsel %vm337, %v2650, 0
    %2655 = vmatprep.subr.bf16.mxu0 0
    %2656 = vmatpush1.bf16.msra.mxu0 %v2651
    %2657 = vmatprep.subr.bf16.mxu0 0
    %2658 = vmatpush1.bf16.msra.mxu0 0
    %2659 = vmatprep.subr.bf16.mxu0 0
    %2660 = vmatpush1.bf16.msra.mxu0 0
    %2661 = vmatprep.subr.bf16.mxu0 0
    %2662 = vmatpush1.bf16.msra.mxu0 0
    %2663 = vmatprep.subr.bf16.mxu0 0
    %2664 = vmatpush1.bf16.msra.mxu0 0
    %2665 = vmatprep.subr.bf16.mxu0 0
    %2666 = vmatpush1.bf16.msra.mxu0 0
    %2667 = vmatprep.subr.bf16.mxu0 0
    %2668 = vmatpush1.bf16.msra.mxu0 0
    %2669 = vmatprep.subr.bf16.mxu0 0
    %2670 = vmatpush1.bf16.msra.mxu0 0
    %2671 = vmatprep.subr.bf16.mxu0 0
    %2672 = vmatpush1.bf16.msra.mxu0 0
    %2673 = vmatprep.subr.bf16.mxu0 0
    %2674 = vmatpush1.bf16.msra.mxu0 0
    %2675 = vmatprep.subr.bf16.mxu0 0
    %2676 = vmatpush1.bf16.msra.mxu0 0
    %2677 = vmatprep.subr.bf16.mxu0 0
    %2678 = vmatpush1.bf16.msra.mxu0 0
    %2679 = vmatprep.subr.bf16.mxu0 0
    %2680 = vmatpush1.bf16.msra.mxu0 0
    %2681 = vmatprep.subr.bf16.mxu0 0
    %2682 = vmatpush1.bf16.msra.mxu0 0
    %2683 = vmatprep.subr.bf16.mxu0 0
    %2684 = vmatpush1.bf16.msra.mxu0 0
    %2685 = vmatprep.subr.bf16.mxu0 0
    %2686 = vmatpush1.bf16.msra.mxu0 0
    %2687 = vmatprep.mubr.bf16.mxu0 0
    %2688 = vmatmul.mubr.bf16.gmra.mrb[0].mxu0 %v2653
    %v2689 = vpop.f32.mrb[0].mxu0
    %v2690 = vadd.f32 0.0, %v2689
    %v2691 = vpop.f32.mrb[0].mxu0
    %v2692 = vpop.f32.mrb[0].mxu0
    %v2693 = vpop.f32.mrb[0].mxu0
    %2694 = vdwg.mxu0
    %v2695 = vadd.f32 %v2641, %v2690
    %v2696 = vld [vmem:[#allocation3 + $0x3] sm:$0xff]
    %s2697 = scalar_lea.vmem %s85, 48
    %v2698 = vld [vmem:[%s2697] sm:$0xff]
    %v2699 = vld [vmem:[%s2697 + $0x8] sm:$0xff]
    %v2700 = vpack.c.bf16 %v2696, %v2696
    %v2701 = vpack.c.bf16 %v2699, %v2698
    %v2703 = vsel %vm337, %v2700, 0
    %2705 = vmatprep.subr.bf16.mxu0 0
    %2706 = vmatpush1.bf16.msra.mxu0 %v2701
    %2707 = vmatprep.subr.bf16.mxu0 0
    %2708 = vmatpush1.bf16.msra.mxu0 0
    %2709 = vmatprep.subr.bf16.mxu0 0
    %2710 = vmatpush1.bf16.msra.mxu0 0
    %2711 = vmatprep.subr.bf16.mxu0 0
    %2712 = vmatpush1.bf16.msra.mxu0 0
    %2713 = vmatprep.subr.bf16.mxu0 0
    %2714 = vmatpush1.bf16.msra.mxu0 0
    %2715 = vmatprep.subr.bf16.mxu0 0
    %2716 = vmatpush1.bf16.msra.mxu0 0
    %2717 = vmatprep.subr.bf16.mxu0 0
    %2718 = vmatpush1.bf16.msra.mxu0 0
    %2719 = vmatprep.subr.bf16.mxu0 0
    %2720 = vmatpush1.bf16.msra.mxu0 0
    %2721 = vmatprep.subr.bf16.mxu0 0
    %2722 = vmatpush1.bf16.msra.mxu0 0
    %2723 = vmatprep.subr.bf16.mxu0 0
    %2724 = vmatpush1.bf16.msra.mxu0 0
    %2725 = vmatprep.subr.bf16.mxu0 0
    %2726 = vmatpush1.bf16.msra.mxu0 0
    %2727 = vmatprep.subr.bf16.mxu0 0
    %2728 = vmatpush1.bf16.msra.mxu0 0
    %2729 = vmatprep.subr.bf16.mxu0 0
    %2730 = vmatpush1.bf16.msra.mxu0 0
    %2731 = vmatprep.subr.bf16.mxu0 0
    %2732 = vmatpush1.bf16.msra.mxu0 0
    %2733 = vmatprep.subr.bf16.mxu0 0
    %2734 = vmatpush1.bf16.msra.mxu0 0
    %2735 = vmatprep.subr.bf16.mxu0 0
    %2736 = vmatpush1.bf16.msra.mxu0 0
    %2737 = vmatprep.mubr.bf16.mxu0 0
    %2738 = vmatmul.mubr.bf16.gmra.mrb[0].mxu0 %v2703
    %v2739 = vpop.f32.mrb[0].mxu0
    %v2740 = vadd.f32 0.0, %v2739
    %v2741 = vpop.f32.mrb[0].mxu0
    %v2742 = vpop.f32.mrb[0].mxu0
    %v2743 = vpop.f32.mrb[0].mxu0
    %2744 = vdwg.mxu0
    %v2745 = vadd.f32 %v2695, %v2740
    %v2746 = vld [vmem:[#allocation3 + $0x4] sm:$0xff]
    %s2747 = scalar_lea.vmem %s85, 64
    %v2748 = vld [vmem:[%s2747] sm:$0xff]
    %v2749 = vld [vmem:[%s2747 + $0x8] sm:$0xff]
    %v2750 = vpack.c.bf16 %v2746, %v2746
    %v2751 = vpack.c.bf16 %v2749, %v2748
    %v2753 = vsel %vm337, %v2750, 0
    %2755 = vmatprep.subr.bf16.mxu0 0
    %2756 = vmatpush1.bf16.msra.mxu0 %v2751
    %2757 = vmatprep.subr.bf16.mxu0 0
    %2758 = vmatpush1.bf16.msra.mxu0 0
    %2759 = vmatprep.subr.bf16.mxu0 0
    %2760 = vmatpush1.bf16.msra.mxu0 0
    %2761 = vmatprep.subr.bf16.mxu0 0
    %2762 = vmatpush1.bf16.msra.mxu0 0
    %2763 = vmatprep.subr.bf16.mxu0 0
    %2764 = vmatpush1.bf16.msra.mxu0 0
    %2765 = vmatprep.subr.bf16.mxu0 0
    %2766 = vmatpush1.bf16.msra.mxu0 0
    %2767 = vmatprep.subr.bf16.mxu0 0
    %2768 = vmatpush1.bf16.msra.mxu0 0
    %2769 = vmatprep.subr.bf16.mxu0 0
    %2770 = vmatpush1.bf16.msra.mxu0 0
    %2771 = vmatprep.subr.bf16.mxu0 0
    %2772 = vmatpush1.bf16.msra.mxu0 0
    %2773 = vmatprep.subr.bf16.mxu0 0
    %2774 = vmatpush1.bf16.msra.mxu0 0
    %2775 = vmatprep.subr.bf16.mxu0 0
    %2776 = vmatpush1.bf16.msra.mxu0 0
    %2777 = vmatprep.subr.bf16.mxu0 0
    %2778 = vmatpush1.bf16.msra.mxu0 0
    %2779 = vmatprep.subr.bf16.mxu0 0
    %2780 = vmatpush1.bf16.msra.mxu0 0
    %2781 = vmatprep.subr.bf16.mxu0 0
    %2782 = vmatpush1.bf16.msra.mxu0 0
    %2783 = vmatprep.subr.bf16.mxu0 0
    %2784 = vmatpush1.bf16.msra.mxu0 0
    %2785 = vmatprep.subr.bf16.mxu0 0
    %2786 = vmatpush1.bf16.msra.mxu0 0
    %2787 = vmatprep.mubr.bf16.mxu0 0
    %2788 = vmatmul.mubr.bf16.gmra.mrb[0].mxu0 %v2753
    %v2789 = vpop.f32.mrb[0].mxu0
    %v2790 = vadd.f32 0.0, %v2789
    %v2791 = vpop.f32.mrb[0].mxu0
    %v2792 = vpop.f32.mrb[0].mxu0
    %v2793 = vpop.f32.mrb[0].mxu0
    %2794 = vdwg.mxu0
    %v2795 = vadd.f32 %v2745, %v2790
    %v2796 = vld [vmem:[%s87] sm:$0x1]
    %v2798 = vlaneseq
    %v2799 = vshrl.u32 %v2798, 7
    %v2800 = vsub.s32 0, %v2799
    %v2801 = vrot.slane %v2796, %v2800
    %v2803 = vadd.f32 %v2795, %v2801
    %v2804 = vld [vmem:[#allocation2 + $0x2] sm:$0xff]
    %v2805 = vadd.f32 %v2804, %v2803
    %v2806 = vld [vmem:[#allocation19] sm:$0xff]
    %v2807 = vpack.c.bf16 %v2805, %v2805
    %v2808 = vpack.c.bf16 %v2806, %v2806
    %v2809 = vld [vmem:[%s91] sm:$0x1]
    %v2811 = vlaneseq
    %v2812 = vshrl.u32 %v2811, 7
    %v2813 = vsub.s32 0, %v2812
    %v2814 = vrot.slane %v2809, %v2813
    %v2817 = vsel %vm498, %v2807, 0
    %v2820 = vsel %vm516, %v2808, 0
    %2822 = vmatprep.subr.bf16.mxu0 0
    %2823 = vmatpush1.bf16.msra.mxu0 %v2820
    %2824 = vmatprep.subr.bf16.mxu0 0
    %2825 = vmatpush1.bf16.msra.mxu0 0
    %2826 = vmatprep.subr.bf16.mxu0 0
    %2827 = vmatpush1.bf16.msra.mxu0 0
    %2828 = vmatprep.subr.bf16.mxu0 0
    %2829 = vmatpush1.bf16.msra.mxu0 0
    %2830 = vmatprep.subr.bf16.mxu0 0
    %2831 = vmatpush1.bf16.msra.mxu0 0
    %2832 = vmatprep.subr.bf16.mxu0 0
    %2833 = vmatpush1.bf16.msra.mxu0 0
    %2834 = vmatprep.subr.bf16.mxu0 0
    %2835 = vmatpush1.bf16.msra.mxu0 0
    %2836 = vmatprep.subr.bf16.mxu0 0
    %2837 = vmatpush1.bf16.msra.mxu0 0
    %2838 = vmatprep.subr.bf16.mxu0 0
    %2839 = vmatpush1.bf16.msra.mxu0 0
    %2840 = vmatprep.subr.bf16.mxu0 0
    %2841 = vmatpush1.bf16.msra.mxu0 0
    %2842 = vmatprep.subr.bf16.mxu0 0
    %2843 = vmatpush1.bf16.msra.mxu0 0
    %2844 = vmatprep.subr.bf16.mxu0 0
    %2845 = vmatpush1.bf16.msra.mxu0 0
    %2846 = vmatprep.subr.bf16.mxu0 0
    %2847 = vmatpush1.bf16.msra.mxu0 0
    %2848 = vmatprep.subr.bf16.mxu0 0
    %2849 = vmatpush1.bf16.msra.mxu0 0
    %2850 = vmatprep.subr.bf16.mxu0 0
    %2851 = vmatpush1.bf16.msra.mxu0 0
    %2852 = vmatprep.subr.bf16.mxu0 0
    %2853 = vmatpush1.bf16.msra.mxu0 0
    %2854 = vmatprep.mubr.bf16.mxu0 0
    %2855 = vmatmul.mubr.bf16.gmra.mrb[0].mxu0 %v2817
    %v2856 = vpop.f32.mrb[0].mxu0
    %v2857 = vadd.f32 %v2814, %v2856
    %v2858 = vpop.f32.mrb[0].mxu0
    %v2859 = vpop.f32.mrb[0].mxu0
    %v2860 = vpop.f32.mrb[0].mxu0
    %2861 = vdwg.mxu0
    %v2862 = vld [vmem:[%s93] sm:$0x1]
    %v2864 = vlaneseq
    %v2865 = vshrl.u32 %v2864, 7
    %v2866 = vsub.s32 0, %v2865
    %v2867 = vrot.slane %v2862, %v2866
    %v2869 = vmul.f32 %v2857, %v2867
    %v2870 = vld [vmem:[%s95] sm:$0x1]
    %v2872 = vlaneseq
    %v2873 = vshrl.u32 %v2872, 7
    %v2874 = vsub.s32 0, %v2873
    %v2875 = vrot.slane %v2870, %v2874
    %v2877 = vadd.f32 %v2869, %v2875
    %v2878 = vmul.f32 %v2877, 2.3025851
    %v2879 = vmul.f32 %v2878, 1.442695
    %v2880 = vpow.pop %v2879
    %2881 = vst.msk [vmem:[#allocation21] sm:$0xff] %vm337, %v2880
    // Predicated region
    $region241: #{_lambda_.1} parent=1 // pred_check
      _
    $region242: #{_lambda_.1} parent=1 // pred_check_branch
      %2883 = sbr.rel (0) target = $region244
    $region243: #{_lambda_.1} parent=1 // pred_region
      %s2885 = ssub.s32 128, 128
      %2886 = vsyncadd [#allocation6], %s2885
      %s2888 = sshll.u32 [#allocation21], 4
      %s2889 = int_to_ptr.vmem [resolvable:$true] %s2888
      %2891 = dma.vmem_to_hbm [thread:$0]  %s2889, 128, %s97, [#allocation6]
    $region244: #{_lambda_.1} parent=1 // pred_fallthru
      _
    // Predicated region
    $region245: #{_lambda_.1} parent=1 // pred_check
      _
    $region246: #{_lambda_.1} parent=1 // pred_check_branch
      %2893 = sbr.rel (0) target = $region248
    $region247: #{_lambda_.1} parent=1 // pred_region
      %2894 = dma.done [#allocation6], 128
    $region248: #{_lambda_.1} parent=1 // pred_fallthru
      _
    %2895 = vsyncpa [#allocation5], 1
    %2896 = vsyncpa [#allocation8], 1
    %2897 = vsyncpa [#allocation11], 1
    %2898 = vsyncpa [#allocation14], 1
    %2899 = vsyncpa [#allocation17], 1
    %2900 = vsyncpa [#allocation20], 1
    %2901 = vsyncpa [#allocation6], 1

</llo_original>
